<compile_context>
chip_gen: v5e
topology: v5e:2x2
jax: 0.10.0
libtpu: 0.0.40
codegen_flags: <defaults>
</compile_context>

<pallas_src>
import jax
import jax.numpy as jnp
from jax import lax
from jax.experimental import pallas as pl
from jax.experimental.pallas import tpu as pltpu


COMPUTE_DTYPE = jnp.bfloat16


def _round_up(x, m):
    return (x + m - 1) // m * m


def _tile(n, unit, max_tile):
    """Pick a tile size (multiple of `unit`, capped at `max_tile`) and the
    padded extent it divides."""
    t = _round_up(n, unit)
    if t >= max_tile:
        t = max_tile
    return t, _round_up(n, t)


# ----------------------------- Pallas kernels ------------------------------ #

def _conv_relu_pool_kernel(p_ref, w_ref, b_ref, o_ref):
    """Fused 2x2 VALID conv (im2col matmul) + bias + ReLU + 2x2/2 max-pool.

    p_ref : (4, TM, 4*Cin)  stacked im2col patches, one slab per pool shift
            (a, b) in {(0,0),(0,1),(1,0),(1,1)}; feature order (dh, dw, cin).
    w_ref : (4*Cin, Cout)   conv weight flattened in (dh, dw, cin) order (bf16).
    b_ref : (1, Cout)       f32 bias.
    o_ref : (TM, Cout)      pooled activations (bf16).
    """
    w = w_ref[...]  # resident RHS shared by the 4 shift matmuls

    def tap(s):
        return jnp.dot(p_ref[s], w, preferred_element_type=jnp.float32)

    m = jnp.maximum(jnp.maximum(tap(0), tap(1)), jnp.maximum(tap(2), tap(3)))
    # bias hoisted out of the 4-way max; relu(max(.)) == max(relu(.)).
    o_ref[...] = jnp.maximum(m + b_ref[...], 0.0).astype(o_ref.dtype)


def _fc_fused_kernel(x_ref, w1_ref, b1_ref, w2_ref, b2_ref, w3_ref, b3_ref,
                     o_ref, acc_ref):
    """fc1 tiled over K (f32 accumulator) with fc2/fc3 + ReLUs fused into the
    finalize step of the K reduction."""
    k = pl.program_id(1)

    @pl.when(k == 0)
    def _():
        acc_ref[...] = jnp.zeros_like(acc_ref)

    acc_ref[...] += jnp.dot(x_ref[...], w1_ref[...],
                            preferred_element_type=jnp.float32)

    @pl.when(k == pl.num_programs(1) - 1)
    def _():
        h1 = jnp.maximum(acc_ref[...] + b1_ref[...], 0.0)
        # dropout(0.75) is identity in eval mode
        h2 = jnp.dot(h1.astype(w2_ref.dtype), w2_ref[...],
                     preferred_element_type=jnp.float32) + b2_ref[...]
        h2 = jnp.maximum(h2, 0.0)
        o_ref[...] = (jnp.dot(h2.astype(w3_ref.dtype), w3_ref[...],
                              preferred_element_type=jnp.float32)
                      + b3_ref[...]).astype(o_ref.dtype)


# ------------------------------- wrappers ----------------------------------- #

def _conv_relu_pool_call(patches, w_mat, b_row, tm):
    _, mp, kc = patches.shape
    cout = w_mat.shape[1]
    return pl.pallas_call(
        _conv_relu_pool_kernel,
        out_shape=jax.ShapeDtypeStruct((mp, cout), patches.dtype),
        grid_spec=pltpu.PrefetchScalarGridSpec(
            num_scalar_prefetch=0,
            grid=(mp // tm,),
            in_specs=[
                pl.BlockSpec((4, tm, kc), lambda i: (0, i, 0)),   # patches (tiled)
                pl.BlockSpec((kc, cout), lambda i: (0, 0)),       # weight (resident)
                pl.BlockSpec((1, cout), lambda i: (0, 0)),        # bias
            ],
            out_specs=pl.BlockSpec((tm, cout), lambda i: (i, 0)),
        ),
        compiler_params=pltpu.CompilerParams(
            dimension_semantics=("parallel",)),
    )(patches, w_mat, b_row)


def _fc_fused_call(x, w1, b1, w2, b2, w3, b3, tm, tk):
    mp, kpad = x.shape
    n1 = w1.shape[1]
    n2 = w2.shape[1]
    n_out = w3.shape[1]
    return pl.pallas_call(
        _fc_fused_kernel,
        out_shape=jax.ShapeDtypeStruct((mp, n_out), jnp.float32),
        grid_spec=pltpu.PrefetchScalarGridSpec(
            num_scalar_prefetch=0,
            grid=(mp // tm, kpad // tk),
            in_specs=[
                pl.BlockSpec((tm, tk), lambda m, k: (m, k)),        # activations
                pl.BlockSpec((tk, n1), lambda m, k: (k, 0)),        # fc1_w streamed over K
                pl.BlockSpec((1, n1), lambda m, k: (0, 0)),         # fc1_b
                pl.BlockSpec((n1, n2), lambda m, k: (0, 0)),        # fc2_w (resident)
                pl.BlockSpec((1, n2), lambda m, k: (0, 0)),         # fc2_b
                pl.BlockSpec((n2, n_out), lambda m, k: (0, 0)),     # fc3_w (resident)
                pl.BlockSpec((1, n_out), lambda m, k: (0, 0)),      # fc3_b
            ],
            out_specs=pl.BlockSpec((tm, n_out), lambda m, k: (m, 0)),
            scratch_shapes=[pltpu.VMEM((tm, n1), jnp.float32)],
        ),
        compiler_params=pltpu.CompilerParams(
            dimension_semantics=("parallel", "arbitrary")),
    )(x, w1, b1, w2, b2, w3, b3)


def _pool_shift_patches(x_nhwc, a, b, ph, pw):
    """im2col patches for conv-output positions (2i+a, 2j+b), i<ph, j<pw.
    Feature order is (dh, dw, cin) to match the flattened conv weight.
    Returns (N*ph*pw, 4*Cin)."""
    n, _, _, cin = x_nhwc.shape
    slabs = []
    for dh in range(2):
        for dw in range(2):
            h0, w0 = a + dh, b + dw
            s = lax.slice(
                x_nhwc,
                (0, h0, w0, 0),
                (n, h0 + 2 * (ph - 1) + 1, w0 + 2 * (pw - 1) + 1, cin),
                (1, 2, 2, 1))                       # (N, ph, pw, Cin)
            slabs.append(s)
    p = jnp.concatenate(slabs, axis=-1)             # (N, ph, pw, 4*Cin)
    return p.reshape(-1, 4 * cin)


def _conv_relu_pool_stage(x_nhwc, w_mat, b_row):
    n, h, w, _ = x_nhwc.shape
    ph, pw = (h - 1) // 2, (w - 1) // 2     # 2x2 VALID conv, then 2x2/2 pool (floor)
    m = n * ph * pw
    tm, mp = _tile(m, 128, 1024)
    patches = jnp.stack(
        [_pool_shift_patches(x_nhwc, a, b, ph, pw)
         for a in range(2) for b in range(2)], axis=0)        # (4, M, 4*Cin)
    patches = jnp.pad(patches, ((0, 0), (0, mp - m), (0, 0)))
    out = _conv_relu_pool_call(patches, w_mat, b_row, tm)     # (Mp, Cout) bf16
    return out[:m].reshape(n, ph, pw, -1)


@jax.jit
def rubber_toy_forward(x_nchw, kparams):
    cd = kparams["conv1_wm"].dtype
    x = jnp.transpose(x_nchw, (0, 2, 3, 1)).astype(cd)        # NCHW -> NHWC, bf16
    p1 = _conv_relu_pool_stage(x, kparams["conv1_wm"], kparams["conv1_b"])
    p2 = _conv_relu_pool_stage(p1, kparams["conv2_wm"], kparams["conv2_b"])
    n, ph, pw, c = p2.shape
    flat = p2.reshape(n, ph * pw * c)   # NHWC flatten; fc1_w rows pre-permuted
    k = flat.shape[1]
    tk, kpad = _tile(k, 128, 512)
    assert kpad == kparams["fc1_w"].shape[0]
    tm, mp = _tile(n, 16, 256)
    flat = jnp.pad(flat, ((0, mp - n), (0, kpad - k)))
    out = _fc_fused_call(flat,
                         kparams["fc1_w"], kparams["fc1_b"],
                         kparams["fc2_w"], kparams["fc2_b"],
                         kparams["fc3_w"], kparams["fc3_b"], tm, tk)
    return out[:n]


# --------------------------- params / reference ----------------------------- #

def init_params(key, spatial):
    # shape bookkeeping mirroring RubberToy.__init__ (with small `spatial`)
    ho1 = spatial - 1
    p1 = ho1 // 2
    ho2 = p1 - 1
    p2 = ho2 // 2
    to_linear = 64 * p2 * p2

    ks = jax.random.split(key, 10)

    def u(k, shape, fan_in):
        lim = 1.0 / jnp.sqrt(jnp.float32(fan_in))
        return jax.random.uniform(k, shape, jnp.float32, -lim, lim)

    params = dict(
        conv1_w=u(ks[0], (2, 2, 3, 32), 2 * 2 * 3),     # HWIO
        conv1_b=u(ks[1], (32,), 2 * 2 * 3),
        conv2_w=u(ks[2], (2, 2, 32, 64), 2 * 2 * 32),   # HWIO
        conv2_b=u(ks[3], (64,), 2 * 2 * 32),
        fc1_w=u(ks[4], (to_linear, 300), to_linear),    # rows in torch (C,H,W) order
        fc1_b=u(ks[5], (300,), to_linear),
        fc2_w=u(ks[6], (300, 100), 300),
        fc2_b=u(ks[7], (100,), 300),
        fc3_w=u(ks[8], (100, 2), 100),
        fc3_b=u(ks[9], (2,), 100),
    )
    return params, dict(to_linear=to_linear, pool2_hw=(p2, p2))


def prepare_params(params, pool2_hw, compute_dtype=COMPUTE_DTYPE):
    """One-time repack of PyTorch-layout params into kernel-friendly layout."""
    ph2, pw2 = pool2_hw
    c2 = params["conv2_w"].shape[-1]
    n1 = params["fc1_w"].shape[1]
    # permute fc1_w rows from torch's (C,H,W) flatten order to (H,W,C) so the
    # NHWC conv2 output flattens straight into fc1 (no activation transpose).
    fc1_w = params["fc1_w"].reshape(c2, ph2, pw2, n1)
    fc1_w = jnp.transpose(fc1_w, (1, 2, 0, 3)).reshape(-1, n1)
    k = fc1_w.shape[0]
    _, kpad = _tile(k, 128, 512)
    fc1_w = jnp.pad(fc1_w, ((0, kpad - k), (0, 0)))

    def row(b):
        return b.reshape(1, -1).astype(jnp.float32)

    return dict(
        conv1_wm=params["conv1_w"].reshape(-1, 32).astype(compute_dtype),
        conv1_b=row(params["conv1_b"]),
        conv2_wm=params["conv2_w"].reshape(-1, 64).astype(compute_dtype),
        conv2_b=row(params["conv2_b"]),
        fc1_w=fc1_w.astype(compute_dtype),
        fc1_b=row(params["fc1_b"]),
        fc2_w=params["fc2_w"].astype(compute_dtype),
        fc2_b=row(params["fc2_b"]),
        fc3_w=params["fc3_w"].astype(compute_dtype),
        fc3_b=row(params["fc3_b"]),
    )


def ref_forward(x_nchw, params, compute_dtype=jnp.float32):
    """Pure-JAX reference (torch semantics), quantizing at the same points as
    the kernel path so the comparison is tight."""
    cd = compute_dtype
    x = jnp.transpose(x_nchw, (0, 2, 3, 1)).astype(cd)

    def stage(t, w, b):
        y = lax.conv_general_dilated(
            t, w.astype(cd), (1, 1), "VALID",
            dimension_numbers=("NHWC", "HWIO", "NHWC"),
            preferred_element_type=jnp.float32) + b
        y = jnp.maximum(y, 0.0)
        y = lax.reduce_window(y, -jnp.inf, lax.max,
                              (1, 2, 2, 1), (1, 2, 2, 1), "VALID")
        return y.astype(cd)

    p2 = stage(stage(x, params["conv1_w"], params["conv1_b"]),
               params["conv2_w"], params["conv2_b"])
    n = p2.shape[0]
    # torch flatten order: (C, H, W) on the NCHW tensor, original fc1_w layout.
    flat = jnp.transpose(p2, (0, 3, 1, 2)).reshape(n, -1)

    def lin(h, w, b):
        return jnp.dot(h.astype(cd), w.astype(cd),
                       preferred_element_type=jnp.float32) + b

    h = jnp.maximum(lin(flat, params["fc1_w"], params["fc1_b"]), 0.0)
    h = jnp.maximum(lin(h, params["fc2_w"], params["fc2_b"]), 0.0)
    return lin(h, params["fc3_w"], params["fc3_b"])


if __name__ == "__main__":
    key = jax.random.PRNGKey(0)
    batch = 2
    spatial = 32  # small stand-in for the 224x224 used in RubberToy.__init__
    pkey, xkey = jax.random.split(key)
    params, shapes = init_params(pkey, spatial)
    kparams = prepare_params(params, shapes["pool2_hw"])

    x = jax.random.normal(xkey, (batch, 3, spatial, spatial), jnp.float32)  # NCHW

    out = jax.block_until_ready(rubber_toy_forward(x, kparams))
    ref = jax.block_until_ready(ref_forward(x, params, COMPUTE_DTYPE))

    assert out.shape == (batch, 2), out.shape
    assert jnp.allclose(out, ref, atol=2e-2, rtol=2e-2), (out, ref)
    print("KERNEL_OK")
</pallas_src>

<mosaic_0001>
module attributes {stable_mosaic.version = 11 : i64} {
  func.func @_conv_relu_pool_kernel(%arg0: i32, %arg1: memref<4x512x12xbf16, #tpu.memory_space<vmem>>, %arg2: memref<12x32xbf16, #tpu.memory_space<vmem>>, %arg3: memref<1x32xf32, #tpu.memory_space<vmem>>, %arg4: memref<512x32xbf16, #tpu.memory_space<vmem>>) attributes {dimension_semantics = [#tpu.dimension_semantics<parallel>], iteration_bounds = array<i64: 1>, scalar_prefetch = 0 : i64, scratch_operands = 0 : i64, tpu.core_type = #tpu.core_type<tc>, window_params = [{transform_indices = @transform_0, window_bounds = array<i64: 4, 512, 12>}, {pipeline_mode = #tpu.pipeline_mode<synchronous>, transform_indices = @transform_1, window_bounds = array<i64: 12, 32>}, {pipeline_mode = #tpu.pipeline_mode<synchronous>, transform_indices = @transform_2, window_bounds = array<i64: 1, 32>}, {transform_indices = @transform_3, window_bounds = array<i64: 512, 32>}]} {
    %c0 = arith.constant 0 : index
    %c0_0 = arith.constant 0 : index
    %0 = vector.load %arg2[%c0, %c0_0] : memref<12x32xbf16, #tpu.memory_space<vmem>>, vector<12x32xbf16>
    %c0_1 = arith.constant 0 : index
    %c0_2 = arith.constant 0 : index
    %c0_3 = arith.constant 0 : index
    %1 = vector.load %arg1[%c0_1, %c0_2, %c0_3] : memref<4x512x12xbf16, #tpu.memory_space<vmem>>, vector<1x512x12xbf16>
    %2 = vector.shape_cast %1 : vector<1x512x12xbf16> to vector<512x12xbf16>
    %cst = arith.constant dense<0.000000e+00> : vector<512x32xf32>
    %3 = tpu.matmul %2, %0, %cst {dimension_numbers = #tpu.dot_dimension_numbers<[1], [0], [0], [1], [0, 0, 1, 1], [], []>} : vector<512x12xbf16>, vector<12x32xbf16>, vector<512x32xf32> -> vector<512x32xf32>
    %c1 = arith.constant 1 : index
    %c0_4 = arith.constant 0 : index
    %c0_5 = arith.constant 0 : index
    %4 = vector.load %arg1[%c1, %c0_4, %c0_5] : memref<4x512x12xbf16, #tpu.memory_space<vmem>>, vector<1x512x12xbf16>
    %5 = vector.shape_cast %4 : vector<1x512x12xbf16> to vector<512x12xbf16>
    %cst_6 = arith.constant dense<0.000000e+00> : vector<512x32xf32>
    %6 = tpu.matmul %5, %0, %cst_6 {dimension_numbers = #tpu.dot_dimension_numbers<[1], [0], [0], [1], [0, 0, 1, 1], [], []>} : vector<512x12xbf16>, vector<12x32xbf16>, vector<512x32xf32> -> vector<512x32xf32>
    %7 = arith.maximumf %3, %6 : vector<512x32xf32>
    %c2 = arith.constant 2 : index
    %c0_7 = arith.constant 0 : index
    %c0_8 = arith.constant 0 : index
    %8 = vector.load %arg1[%c2, %c0_7, %c0_8] : memref<4x512x12xbf16, #tpu.memory_space<vmem>>, vector<1x512x12xbf16>
    %9 = vector.shape_cast %8 : vector<1x512x12xbf16> to vector<512x12xbf16>
    %cst_9 = arith.constant dense<0.000000e+00> : vector<512x32xf32>
    %10 = tpu.matmul %9, %0, %cst_9 {dimension_numbers = #tpu.dot_dimension_numbers<[1], [0], [0], [1], [0, 0, 1, 1], [], []>} : vector<512x12xbf16>, vector<12x32xbf16>, vector<512x32xf32> -> vector<512x32xf32>
    %c3 = arith.constant 3 : index
    %c0_10 = arith.constant 0 : index
    %c0_11 = arith.constant 0 : index
    %11 = vector.load %arg1[%c3, %c0_10, %c0_11] : memref<4x512x12xbf16, #tpu.memory_space<vmem>>, vector<1x512x12xbf16>
    %12 = vector.shape_cast %11 : vector<1x512x12xbf16> to vector<512x12xbf16>
    %cst_12 = arith.constant dense<0.000000e+00> : vector<512x32xf32>
    %13 = tpu.matmul %12, %0, %cst_12 {dimension_numbers = #tpu.dot_dimension_numbers<[1], [0], [0], [1], [0, 0, 1, 1], [], []>} : vector<512x12xbf16>, vector<12x32xbf16>, vector<512x32xf32> -> vector<512x32xf32>
    %14 = arith.maximumf %10, %13 : vector<512x32xf32>
    %15 = arith.maximumf %7, %14 : vector<512x32xf32>
    %c0_13 = arith.constant 0 : index
    %c0_14 = arith.constant 0 : index
    %16 = vector.load %arg3[%c0_13, %c0_14] : memref<1x32xf32, #tpu.memory_space<vmem>>, vector<1x32xf32>
    %17 = vector.broadcast %16 : vector<1x32xf32> to vector<512x32xf32>
    %18 = arith.addf %15, %17 : vector<512x32xf32>
    %cst_15 = arith.constant 0.000000e+00 : f32
    %19 = vector.broadcast %cst_15 : f32 to vector<512x32xf32>
    %20 = arith.maximumf %18, %19 : vector<512x32xf32>
    %21 = arith.truncf %20 : vector<512x32xf32> to vector<512x32xbf16>
    %c0_16 = arith.constant 0 : index
    %c0_17 = arith.constant 0 : index
    %22 = vector.load %arg4[%c0_16, %c0_17] : memref<512x32xbf16, #tpu.memory_space<vmem>>, vector<512x32xbf16>
    tpu.vector_store %arg4[%c0_16, %c0_17], %21 {strides = array<i32>} : memref<512x32xbf16, #tpu.memory_space<vmem>>, vector<512x32xbf16>,
    return
  }
  func.func @transform_0(%arg0: i32) -> (i32, i32, i32) {
    %c0_i32 = arith.constant 0 : i32
    %c0_i32_0 = arith.constant 0 : i32
    %c0_i32_1 = arith.constant 0 : i32
    return %c0_i32, %arg0, %c0_i32_0 : i32, i32, i32
  }
  func.func @transform_1(%arg0: i32) -> (i32, i32) {
    %c0_i32 = arith.constant 0 : i32
    %c0_i32_0 = arith.constant 0 : i32
    %c0_i32_1 = arith.constant 0 : i32
    return %c0_i32, %c0_i32_0 : i32, i32
  }
  func.func @transform_2(%arg0: i32) -> (i32, i32) {
    %c0_i32 = arith.constant 0 : i32
    %c0_i32_0 = arith.constant 0 : i32
    %c0_i32_1 = arith.constant 0 : i32
    return %c0_i32, %c0_i32_0 : i32, i32
  }
  func.func @transform_3(%arg0: i32) -> (i32, i32) {
    %c0_i32 = arith.constant 0 : i32
    %c0_i32_0 = arith.constant 0 : i32
    return %arg0, %c0_i32 : i32, i32
  }
}

module attributes {stable_mosaic.version = 11 : i64} {
  func.func @_conv_relu_pool_kernel(%arg0: i32, %arg1: memref<4x128x128xbf16, #tpu.memory_space<vmem>>, %arg2: memref<128x64xbf16, #tpu.memory_space<vmem>>, %arg3: memref<1x64xf32, #tpu.memory_space<vmem>>, %arg4: memref<128x64xbf16, #tpu.memory_space<vmem>>) attributes {dimension_semantics = [#tpu.dimension_semantics<parallel>], iteration_bounds = array<i64: 1>, scalar_prefetch = 0 : i64, scratch_operands = 0 : i64, tpu.core_type = #tpu.core_type<tc>, window_params = [{transform_indices = @transform_0, window_bounds = array<i64: 4, 128, 128>}, {pipeline_mode = #tpu.pipeline_mode<synchronous>, transform_indices = @transform_1, window_bounds = array<i64: 128, 64>}, {pipeline_mode = #tpu.pipeline_mode<synchronous>, transform_indices = @transform_2, window_bounds = array<i64: 1, 64>}, {transform_indices = @transform_3, window_bounds = array<i64: 128, 64>}]} {
    %c0 = arith.constant 0 : index
    %c0_0 = arith.constant 0 : index
    %0 = vector.load %arg2[%c0, %c0_0] : memref<128x64xbf16, #tpu.memory_space<vmem>>, vector<128x64xbf16>
    %c0_1 = arith.constant 0 : index
    %c0_2 = arith.constant 0 : index
    %c0_3 = arith.constant 0 : index
    %1 = vector.load %arg1[%c0_1, %c0_2, %c0_3] : memref<4x128x128xbf16, #tpu.memory_space<vmem>>, vector<1x128x128xbf16>
    %2 = vector.shape_cast %1 : vector<1x128x128xbf16> to vector<128x128xbf16>
    %cst = arith.constant dense<0.000000e+00> : vector<128x64xf32>
    %3 = tpu.matmul %2, %0, %cst {dimension_numbers = #tpu.dot_dimension_numbers<[1], [0], [0], [1], [0, 0, 1, 1], [], []>} : vector<128x128xbf16>, vector<128x64xbf16>, vector<128x64xf32> -> vector<128x64xf32>
    %c1 = arith.constant 1 : index
    %c0_4 = arith.constant 0 : index
    %c0_5 = arith.constant 0 : index
    %4 = vector.load %arg1[%c1, %c0_4, %c0_5] : memref<4x128x128xbf16, #tpu.memory_space<vmem>>, vector<1x128x128xbf16>
    %5 = vector.shape_cast %4 : vector<1x128x128xbf16> to vector<128x128xbf16>
    %cst_6 = arith.constant dense<0.000000e+00> : vector<128x64xf32>
    %6 = tpu.matmul %5, %0, %cst_6 {dimension_numbers = #tpu.dot_dimension_numbers<[1], [0], [0], [1], [0, 0, 1, 1], [], []>} : vector<128x128xbf16>, vector<128x64xbf16>, vector<128x64xf32> -> vector<128x64xf32>
    %7 = arith.maximumf %3, %6 : vector<128x64xf32>
    %c2 = arith.constant 2 : index
    %c0_7 = arith.constant 0 : index
    %c0_8 = arith.constant 0 : index
    %8 = vector.load %arg1[%c2, %c0_7, %c0_8] : memref<4x128x128xbf16, #tpu.memory_space<vmem>>, vector<1x128x128xbf16>
    %9 = vector.shape_cast %8 : vector<1x128x128xbf16> to vector<128x128xbf16>
    %cst_9 = arith.constant dense<0.000000e+00> : vector<128x64xf32>
    %10 = tpu.matmul %9, %0, %cst_9 {dimension_numbers = #tpu.dot_dimension_numbers<[1], [0], [0], [1], [0, 0, 1, 1], [], []>} : vector<128x128xbf16>, vector<128x64xbf16>, vector<128x64xf32> -> vector<128x64xf32>
    %c3 = arith.constant 3 : index
    %c0_10 = arith.constant 0 : index
    %c0_11 = arith.constant 0 : index
    %11 = vector.load %arg1[%c3, %c0_10, %c0_11] : memref<4x128x128xbf16, #tpu.memory_space<vmem>>, vector<1x128x128xbf16>
    %12 = vector.shape_cast %11 : vector<1x128x128xbf16> to vector<128x128xbf16>
    %cst_12 = arith.constant dense<0.000000e+00> : vector<128x64xf32>
    %13 = tpu.matmul %12, %0, %cst_12 {dimension_numbers = #tpu.dot_dimension_numbers<[1], [0], [0], [1], [0, 0, 1, 1], [], []>} : vector<128x128xbf16>, vector<128x64xbf16>, vector<128x64xf32> -> vector<128x64xf32>
    %14 = arith.maximumf %10, %13 : vector<128x64xf32>
    %15 = arith.maximumf %7, %14 : vector<128x64xf32>
    %c0_13 = arith.constant 0 : index
    %c0_14 = arith.constant 0 : index
    %16 = vector.load %arg3[%c0_13, %c0_14] : memref<1x64xf32, #tpu.memory_space<vmem>>, vector<1x64xf32>
    %17 = vector.broadcast %16 : vector<1x64xf32> to vector<128x64xf32>
    %18 = arith.addf %15, %17 : vector<128x64xf32>
    %cst_15 = arith.constant 0.000000e+00 : f32
    %19 = vector.broadcast %cst_15 : f32 to vector<128x64xf32>
    %20 = arith.maximumf %18, %19 : vector<128x64xf32>
    %21 = arith.truncf %20 : vector<128x64xf32> to vector<128x64xbf16>
    %c0_16 = arith.constant 0 : index
    %c0_17 = arith.constant 0 : index
    %22 = vector.load %arg4[%c0_16, %c0_17] : memref<128x64xbf16, #tpu.memory_space<vmem>>, vector<128x64xbf16>
    tpu.vector_store %arg4[%c0_16, %c0_17], %21 {strides = array<i32>} : memref<128x64xbf16, #tpu.memory_space<vmem>>, vector<128x64xbf16>,
    return
  }
  func.func @transform_0(%arg0: i32) -> (i32, i32, i32) {
    %c0_i32 = arith.constant 0 : i32
    %c0_i32_0 = arith.constant 0 : i32
    %c0_i32_1 = arith.constant 0 : i32
    return %c0_i32, %arg0, %c0_i32_0 : i32, i32, i32
  }
  func.func @transform_1(%arg0: i32) -> (i32, i32) {
    %c0_i32 = arith.constant 0 : i32
    %c0_i32_0 = arith.constant 0 : i32
    %c0_i32_1 = arith.constant 0 : i32
    return %c0_i32, %c0_i32_0 : i32, i32
  }
  func.func @transform_2(%arg0: i32) -> (i32, i32) {
    %c0_i32 = arith.constant 0 : i32
    %c0_i32_0 = arith.constant 0 : i32
    %c0_i32_1 = arith.constant 0 : i32
    return %c0_i32, %c0_i32_0 : i32, i32
  }
  func.func @transform_3(%arg0: i32) -> (i32, i32) {
    %c0_i32 = arith.constant 0 : i32
    %c0_i32_0 = arith.constant 0 : i32
    return %arg0, %c0_i32 : i32, i32
  }
}

module attributes {stable_mosaic.version = 11 : i64} {
  func.func @_fc_fused_kernel(%arg0: i32, %arg1: i32, %arg2: memref<16x512xbf16, #tpu.memory_space<vmem>>, %arg3: memref<512x300xbf16, #tpu.memory_space<vmem>>, %arg4: memref<1x300xf32, #tpu.memory_space<vmem>>, %arg5: memref<300x100xbf16, #tpu.memory_space<vmem>>, %arg6: memref<1x100xf32, #tpu.memory_space<vmem>>, %arg7: memref<100x2xbf16, #tpu.memory_space<vmem>>, %arg8: memref<1x2xf32, #tpu.memory_space<vmem>>, %arg9: memref<16x2xf32, #tpu.memory_space<vmem>>, %arg10: memref<16x300xf32, #tpu.memory_space<vmem>>) attributes {dimension_semantics = [#tpu.dimension_semantics<parallel>, #tpu.dimension_semantics<arbitrary>], iteration_bounds = array<i64: 1, 7>, scalar_prefetch = 0 : i64, scratch_operands = 1 : i64, tpu.core_type = #tpu.core_type<tc>, window_params = [{transform_indices = @transform_0, window_bounds = array<i64: 16, 512>}, {transform_indices = @transform_1, window_bounds = array<i64: 512, 300>}, {pipeline_mode = #tpu.pipeline_mode<synchronous>, transform_indices = @transform_2, window_bounds = array<i64: 1, 300>}, {pipeline_mode = #tpu.pipeline_mode<synchronous>, transform_indices = @transform_3, window_bounds = array<i64: 300, 100>}, {pipeline_mode = #tpu.pipeline_mode<synchronous>, transform_indices = @transform_4, window_bounds = array<i64: 1, 100>}, {pipeline_mode = #tpu.pipeline_mode<synchronous>, transform_indices = @transform_5, window_bounds = array<i64: 100, 2>}, {pipeline_mode = #tpu.pipeline_mode<synchronous>, transform_indices = @transform_6, window_bounds = array<i64: 1, 2>}, {transform_indices = @transform_7, window_bounds = array<i64: 16, 2>}]} {
    %c0_i32 = arith.constant 0 : i32
    %0 = arith.cmpi eq, %arg1, %c0_i32 : i32
    %1 = arith.extui %0 : i1 to i32
    %c0_i32_0 = arith.constant 0 : i32
    %2 = arith.cmpi ne, %1, %c0_i32_0 : i32
    scf.if %2 {
      %cst_9 = arith.constant 0.000000e+00 : f32
      %12 = vector.broadcast %cst_9 : f32 to vector<16x300xf32>
      %c0_10 = arith.constant 0 : index
      %c0_11 = arith.constant 0 : index
      %13 = vector.load %arg10[%c0_10, %c0_11] : memref<16x300xf32, #tpu.memory_space<vmem>>, vector<16x300xf32>
      tpu.vector_store %arg10[%c0_10, %c0_11], %12 {strides = array<i32>} : memref<16x300xf32, #tpu.memory_space<vmem>>, vector<16x300xf32>,
    } else {
    }
    %c0 = arith.constant 0 : index
    %c0_1 = arith.constant 0 : index
    %3 = vector.load %arg10[%c0, %c0_1] : memref<16x300xf32, #tpu.memory_space<vmem>>, vector<16x300xf32>
    %c0_2 = arith.constant 0 : index
    %c0_3 = arith.constant 0 : index
    %4 = vector.load %arg2[%c0_2, %c0_3] : memref<16x512xbf16, #tpu.memory_space<vmem>>, vector<16x512xbf16>
    %c0_4 = arith.constant 0 : index
    %c0_5 = arith.constant 0 : index
    %5 = vector.load %arg3[%c0_4, %c0_5] : memref<512x300xbf16, #tpu.memory_space<vmem>>, vector<512x300xbf16>
    %cst = arith.constant dense<0.000000e+00> : vector<16x300xf32>
    %6 = tpu.matmul %4, %5, %cst {dimension_numbers = #tpu.dot_dimension_numbers<[1], [0], [0], [1], [0, 0, 1, 1], [], []>} : vector<16x512xbf16>, vector<512x300xbf16>, vector<16x300xf32> -> vector<16x300xf32>
    %7 = arith.addf %3, %6 : vector<16x300xf32>
    %c0_6 = arith.constant 0 : index
    %c0_7 = arith.constant 0 : index
    %8 = vector.load %arg10[%c0_6, %c0_7] : memref<16x300xf32, #tpu.memory_space<vmem>>, vector<16x300xf32>
    tpu.vector_store %arg10[%c0_6, %c0_7], %7 {strides = array<i32>} : memref<16x300xf32, #tpu.memory_space<vmem>>, vector<16x300xf32>,
    %c6_i32 = arith.constant 6 : i32
    %9 = arith.cmpi eq, %arg1, %c6_i32 : i32
    %10 = arith.extui %9 : i1 to i32
    %c0_i32_8 = arith.constant 0 : i32
    %11 = arith.cmpi ne, %10, %c0_i32_8 : i32
    scf.if %11 {
      %c0_9 = arith.constant 0 : index
      %c0_10 = arith.constant 0 : index
      %12 = vector.load %arg10[%c0_9, %c0_10] : memref<16x300xf32, #tpu.memory_space<vmem>>, vector<16x300xf32>
      %c0_11 = arith.constant 0 : index
      %c0_12 = arith.constant 0 : index
      %13 = vector.load %arg4[%c0_11, %c0_12] : memref<1x300xf32, #tpu.memory_space<vmem>>, vector<1x300xf32>
      %14 = vector.broadcast %13 : vector<1x300xf32> to vector<16x300xf32>
      %15 = arith.addf %12, %14 : vector<16x300xf32>
      %cst_13 = arith.constant 0.000000e+00 : f32
      %16 = vector.broadcast %cst_13 : f32 to vector<16x300xf32>
      %17 = arith.maximumf %15, %16 : vector<16x300xf32>
      %18 = arith.truncf %17 : vector<16x300xf32> to vector<16x300xbf16>
      %c0_14 = arith.constant 0 : index
      %c0_15 = arith.constant 0 : index
      %19 = vector.load %arg5[%c0_14, %c0_15] : memref<300x100xbf16, #tpu.memory_space<vmem>>, vector<300x100xbf16>
      %cst_16 = arith.constant dense<0.000000e+00> : vector<16x100xf32>
      %20 = tpu.matmul %18, %19, %cst_16 {dimension_numbers = #tpu.dot_dimension_numbers<[1], [0], [0], [1], [0, 0, 1, 1], [], []>} : vector<16x300xbf16>, vector<300x100xbf16>, vector<16x100xf32> -> vector<16x100xf32>
      %c0_17 = arith.constant 0 : index
      %c0_18 = arith.constant 0 : index
      %21 = vector.load %arg6[%c0_17, %c0_18] : memref<1x100xf32, #tpu.memory_space<vmem>>, vector<1x100xf32>
      %22 = vector.broadcast %21 : vector<1x100xf32> to vector<16x100xf32>
      %23 = arith.addf %20, %22 : vector<16x100xf32>
      %cst_19 = arith.constant 0.000000e+00 : f32
      %24 = vector.broadcast %cst_19 : f32 to vector<16x100xf32>
      %25 = arith.maximumf %23, %24 : vector<16x100xf32>
      %26 = arith.truncf %25 : vector<16x100xf32> to vector<16x100xbf16>
      %c0_20 = arith.constant 0 : index
      %c0_21 = arith.constant 0 : index
      %27 = vector.load %arg7[%c0_20, %c0_21] : memref<100x2xbf16, #tpu.memory_space<vmem>>, vector<100x2xbf16>
      %cst_22 = arith.constant dense<0.000000e+00> : vector<16x2xf32>
      %28 = tpu.matmul %26, %27, %cst_22 {dimension_numbers = #tpu.dot_dimension_numbers<[1], [0], [0], [1], [0, 0, 1, 1], [], []>} : vector<16x100xbf16>, vector<100x2xbf16>, vector<16x2xf32> -> vector<16x2xf32>
      %c0_23 = arith.constant 0 : index
      %c0_24 = arith.constant 0 : index
      %29 = vector.load %arg8[%c0_23, %c0_24] : memref<1x2xf32, #tpu.memory_space<vmem>>, vector<1x2xf32>
      %30 = vector.broadcast %29 : vector<1x2xf32> to vector<16x2xf32>
      %31 = arith.addf %28, %30 : vector<16x2xf32>
      %c0_25 = arith.constant 0 : index
      %c0_26 = arith.constant 0 : index
      %32 = vector.load %arg9[%c0_25, %c0_26] : memref<16x2xf32, #tpu.memory_space<vmem>>, vector<16x2xf32>
      tpu.vector_store %arg9[%c0_25, %c0_26], %31 {strides = array<i32>} : memref<16x2xf32, #tpu.memory_space<vmem>>, vector<16x2xf32>,
    } else {
    }
    return
  }
  func.func @transform_0(%arg0: i32, %arg1: i32) -> (i32, i32) {
    %c0_i32 = arith.constant 0 : i32
    return %arg0, %arg1 : i32, i32
  }
  func.func @transform_1(%arg0: i32, %arg1: i32) -> (i32, i32) {
    %c0_i32 = arith.constant 0 : i32
    %c0_i32_0 = arith.constant 0 : i32
    return %arg1, %c0_i32 : i32, i32
  }
  func.func @transform_2(%arg0: i32, %arg1: i32) -> (i32, i32) {
    %c0_i32 = arith.constant 0 : i32
    %c0_i32_0 = arith.constant 0 : i32
    %c0_i32_1 = arith.constant 0 : i32
    return %c0_i32, %c0_i32_0 : i32, i32
  }
  func.func @transform_3(%arg0: i32, %arg1: i32) -> (i32, i32) {
    %c0_i32 = arith.constant 0 : i32
    %c0_i32_0 = arith.constant 0 : i32
    %c0_i32_1 = arith.constant 0 : i32
    return %c0_i32, %c0_i32_0 : i32, i32
  }
  func.func @transform_4(%arg0: i32, %arg1: i32) -> (i32, i32) {
    %c0_i32 = arith.constant 0 : i32
    %c0_i32_0 = arith.constant 0 : i32
    %c0_i32_1 = arith.constant 0 : i32
    return %c0_i32, %c0_i32_0 : i32, i32
  }
  func.func @transform_5(%arg0: i32, %arg1: i32) -> (i32, i32) {
    %c0_i32 = arith.constant 0 : i32
    %c0_i32_0 = arith.constant 0 : i32
    %c0_i32_1 = arith.constant 0 : i32
    return %c0_i32, %c0_i32_0 : i32, i32
  }
  func.func @transform_6(%arg0: i32, %arg1: i32) -> (i32, i32) {
    %c0_i32 = arith.constant 0 : i32
    %c0_i32_0 = arith.constant 0 : i32
    %c0_i32_1 = arith.constant 0 : i32
    return %c0_i32, %c0_i32_0 : i32, i32
  }
  func.func @transform_7(%arg0: i32, %arg1: i32) -> (i32, i32) {
    %c0_i32 = arith.constant 0 : i32
    %c0_i32_0 = arith.constant 0 : i32
    return %arg0, %c0_i32 : i32, i32
  }
}

</mosaic_0001>

<llo_original>
// kernel: rubber_toy_forward.3
$region0: #{rubber_toy_forward.3}
  #allocation0 [shape = 'u32[]', space=smem, size = 0x4, offset = 0x4, fixed_abs, tag = 'smem constant byte address 0x4 - core index']
  #allocation1 [shape = 'u32[72,128]{1,0:T(1,128)}', space=vmem, size = 0x9000, scoped, tag = 'internal scratch']
  %s0 = inlined_call_operand.vmem [shape: bf16[4,512,12], index: 0, kind: input, shape index: {}]
  %s1 = inlined_call_operand.vmem [shape: bf16[12,32], index: 1, kind: input, shape index: {}]
  %s2 = inlined_call_operand.vmem [shape: f32[1,32], index: 2, kind: input, shape index: {}]
  %s3 = inlined_call_operand.vmem [shape: bf16[512,32], index: 3, kind: output, shape index: {}]
  %s4 = sld [smem:[#allocation0]]
  $region22: #{rubber_toy_forward.3} parent=0
    _
  %s6 = ssub.s32 1, %s4
  %s7 = scalar_select 0, %s6, %s4
  // Predicated region
  $region2: #{rubber_toy_forward.3} parent=0 // pred_check
    _
  $region3: #{rubber_toy_forward.3} parent=0 // pred_check_branch
    %9 = sbr.rel (0) target = $region5
  $region4: #{rubber_toy_forward.3} parent=0 // pred_region
    _
  $region5: #{rubber_toy_forward.3} parent=0 // pred_fallthru
    _
  // Predicated region
  $region6: #{rubber_toy_forward.3} parent=0 // pred_check
    _
  $region7: #{rubber_toy_forward.3} parent=0 // pred_check_branch
    %11 = sbr.rel (0) target = $region9
  $region8: #{rubber_toy_forward.3} parent=0 // pred_region
    _
  $region9: #{rubber_toy_forward.3} parent=0 // pred_fallthru
    _
  // Predicated region
  $region10: #{rubber_toy_forward.3} parent=0 // pred_check
    _
  $region11: #{rubber_toy_forward.3} parent=0 // pred_check_branch
    %13 = sbr.rel (0) target = $region13
  $region12: #{rubber_toy_forward.3} parent=0 // pred_region
    _
  $region13: #{rubber_toy_forward.3} parent=0 // pred_fallthru
    _
  %v15 = vld [vmem:[%s1] sm:$0xf]
  %v16 = vld [vmem:[%s1 + $0x4] sm:$0x3]
  %v17 = vld [vmem:[%s0] sm:$0xf]
  %v18 = vld [vmem:[%s0 + $0x4] sm:$0xf]
  %v19 = vld [vmem:[%s0 + $0x8] sm:$0xf]
  %v20 = vld [vmem:[%s0 + $0xc] sm:$0xf]
  %v21 = vld [vmem:[%s0 + $0x10] sm:$0xf]
  %v22 = vld [vmem:[%s0 + $0x14] sm:$0xf]
  %v23 = vld [vmem:[%s0 + $0x18] sm:$0xf]
  %v24 = vld [vmem:[%s0 + $0x1c] sm:$0xf]
  %v25 = vld [vmem:[%s0 + $0x20] sm:$0xf]
  %v26 = vld [vmem:[%s0 + $0x24] sm:$0xf]
  %v27 = vld [vmem:[%s0 + $0x28] sm:$0xf]
  %v28 = vld [vmem:[%s0 + $0x2c] sm:$0xf]
  %v29 = vld [vmem:[%s0 + $0x30] sm:$0xf]
  %v30 = vld [vmem:[%s0 + $0x34] sm:$0xf]
  %v31 = vld [vmem:[%s0 + $0x38] sm:$0xf]
  %v32 = vld [vmem:[%s0 + $0x3c] sm:$0xf]
  %v33 = vld [vmem:[%s0 + $0x40] sm:$0xf]
  %v34 = vld [vmem:[%s0 + $0x44] sm:$0xf]
  %v35 = vld [vmem:[%s0 + $0x48] sm:$0xf]
  %v36 = vld [vmem:[%s0 + $0x4c] sm:$0xf]
  %v37 = vld [vmem:[%s0 + $0x50] sm:$0xf]
  %v38 = vld [vmem:[%s0 + $0x54] sm:$0xf]
  %v39 = vld [vmem:[%s0 + $0x58] sm:$0xf]
  %v40 = vld [vmem:[%s0 + $0x5c] sm:$0xf]
  %v41 = vld [vmem:[%s0 + $0x60] sm:$0xf]
  %v42 = vld [vmem:[%s0 + $0x64] sm:$0xf]
  %v43 = vld [vmem:[%s0 + $0x68] sm:$0xf]
  %v44 = vld [vmem:[%s0 + $0x6c] sm:$0xf]
  %v45 = vld [vmem:[%s0 + $0x70] sm:$0xf]
  %v46 = vld [vmem:[%s0 + $0x74] sm:$0xf]
  %v47 = vld [vmem:[%s0 + $0x78] sm:$0xf]
  %v48 = vld [vmem:[%s0 + $0x7c] sm:$0xf]
  %v49 = vld [vmem:[%s0 + $0x80] sm:$0xf]
  %v50 = vld [vmem:[%s0 + $0x84] sm:$0xf]
  %v51 = vld [vmem:[%s0 + $0x88] sm:$0xf]
  %v52 = vld [vmem:[%s0 + $0x8c] sm:$0xf]
  %v53 = vld [vmem:[%s0 + $0x90] sm:$0xf]
  %v54 = vld [vmem:[%s0 + $0x94] sm:$0xf]
  %v55 = vld [vmem:[%s0 + $0x98] sm:$0xf]
  %v56 = vld [vmem:[%s0 + $0x9c] sm:$0xf]
  %v57 = vld [vmem:[%s0 + $0xa0] sm:$0xf]
  %v58 = vld [vmem:[%s0 + $0xa4] sm:$0xf]
  %v59 = vld [vmem:[%s0 + $0xa8] sm:$0xf]
  %v60 = vld [vmem:[%s0 + $0xac] sm:$0xf]
  %v61 = vld [vmem:[%s0 + $0xb0] sm:$0xf]
  %v62 = vld [vmem:[%s0 + $0xb4] sm:$0xf]
  %v63 = vld [vmem:[%s0 + $0xb8] sm:$0xf]
  %v64 = vld [vmem:[%s0 + $0xbc] sm:$0xf]
  %v65 = vld [vmem:[%s0 + $0xc0] sm:$0xf]
  %v66 = vld [vmem:[%s0 + $0xc4] sm:$0xf]
  %v67 = vld [vmem:[%s0 + $0xc8] sm:$0xf]
  %v68 = vld [vmem:[%s0 + $0xcc] sm:$0xf]
  %v69 = vld [vmem:[%s0 + $0xd0] sm:$0xf]
  %v70 = vld [vmem:[%s0 + $0xd4] sm:$0xf]
  %v71 = vld [vmem:[%s0 + $0xd8] sm:$0xf]
  %v72 = vld [vmem:[%s0 + $0xdc] sm:$0xf]
  %v73 = vld [vmem:[%s0 + $0xe0] sm:$0xf]
  %v74 = vld [vmem:[%s0 + $0xe4] sm:$0xf]
  %v75 = vld [vmem:[%s0 + $0xe8] sm:$0xf]
  %v76 = vld [vmem:[%s0 + $0xec] sm:$0xf]
  %v77 = vld [vmem:[%s0 + $0xf0] sm:$0xf]
  %v78 = vld [vmem:[%s0 + $0xf4] sm:$0xf]
  %v79 = vld [vmem:[%s0 + $0xf8] sm:$0xf]
  %v80 = vld [vmem:[%s0 + $0xfc] sm:$0xf]
  %v145 = vunpack.c.l.b16 %v17
  %v146 = vunpack.c.l.b16 %v18
  %v147 = vunpack.c.l.b16 %v19
  %v148 = vunpack.c.l.b16 %v20
  %v149 = vunpack.c.l.b16 %v21
  %v150 = vunpack.c.l.b16 %v22
  %v151 = vunpack.c.l.b16 %v23
  %v152 = vunpack.c.l.b16 %v24
  %v153 = vunpack.c.l.b16 %v25
  %v154 = vunpack.c.l.b16 %v26
  %v155 = vunpack.c.l.b16 %v27
  %v156 = vunpack.c.l.b16 %v28
  %v157 = vunpack.c.l.b16 %v29
  %v158 = vunpack.c.l.b16 %v30
  %v159 = vunpack.c.l.b16 %v31
  %v160 = vunpack.c.l.b16 %v32
  %v161 = vunpack.c.l.b16 %v33
  %v162 = vunpack.c.l.b16 %v34
  %v163 = vunpack.c.l.b16 %v35
  %v164 = vunpack.c.l.b16 %v36
  %v165 = vunpack.c.l.b16 %v37
  %v166 = vunpack.c.l.b16 %v38
  %v167 = vunpack.c.l.b16 %v39
  %v168 = vunpack.c.l.b16 %v40
  %v169 = vunpack.c.l.b16 %v41
  %v170 = vunpack.c.l.b16 %v42
  %v171 = vunpack.c.l.b16 %v43
  %v172 = vunpack.c.l.b16 %v44
  %v173 = vunpack.c.l.b16 %v45
  %v174 = vunpack.c.l.b16 %v46
  %v175 = vunpack.c.l.b16 %v47
  %v176 = vunpack.c.l.b16 %v48
  %v177 = vunpack.c.l.b16 %v49
  %v178 = vunpack.c.l.b16 %v50
  %v179 = vunpack.c.l.b16 %v51
  %v180 = vunpack.c.l.b16 %v52
  %v181 = vunpack.c.l.b16 %v53
  %v182 = vunpack.c.l.b16 %v54
  %v183 = vunpack.c.l.b16 %v55
  %v184 = vunpack.c.l.b16 %v56
  %v185 = vunpack.c.l.b16 %v57
  %v186 = vunpack.c.l.b16 %v58
  %v187 = vunpack.c.l.b16 %v59
  %v188 = vunpack.c.l.b16 %v60
  %v189 = vunpack.c.l.b16 %v61
  %v190 = vunpack.c.l.b16 %v62
  %v191 = vunpack.c.l.b16 %v63
  %v192 = vunpack.c.l.b16 %v64
  %v193 = vunpack.c.l.b16 %v65
  %v194 = vunpack.c.l.b16 %v66
  %v195 = vunpack.c.l.b16 %v67
  %v196 = vunpack.c.l.b16 %v68
  %v197 = vunpack.c.l.b16 %v69
  %v198 = vunpack.c.l.b16 %v70
  %v199 = vunpack.c.l.b16 %v71
  %v200 = vunpack.c.l.b16 %v72
  %v201 = vunpack.c.l.b16 %v73
  %v202 = vunpack.c.l.b16 %v74
  %v203 = vunpack.c.l.b16 %v75
  %v204 = vunpack.c.l.b16 %v76
  %v205 = vunpack.c.l.b16 %v77
  %v206 = vunpack.c.l.b16 %v78
  %v207 = vunpack.c.l.b16 %v79
  %v208 = vunpack.c.l.b16 %v80
  %v209 = vpack.c.b16 %v146, %v145
  %v210 = vpack.c.b16 %v148, %v147
  %v211 = vpack.c.b16 %v150, %v149
  %v212 = vpack.c.b16 %v152, %v151
  %v213 = vpack.c.b16 %v154, %v153
  %v214 = vpack.c.b16 %v156, %v155
  %v215 = vpack.c.b16 %v158, %v157
  %v216 = vpack.c.b16 %v160, %v159
  %v217 = vpack.c.b16 %v162, %v161
  %v218 = vpack.c.b16 %v164, %v163
  %v219 = vpack.c.b16 %v166, %v165
  %v220 = vpack.c.b16 %v168, %v167
  %v221 = vpack.c.b16 %v170, %v169
  %v222 = vpack.c.b16 %v172, %v171
  %v223 = vpack.c.b16 %v174, %v173
  %v224 = vpack.c.b16 %v176, %v175
  %v225 = vpack.c.b16 %v178, %v177
  %v226 = vpack.c.b16 %v180, %v179
  %v227 = vpack.c.b16 %v182, %v181
  %v228 = vpack.c.b16 %v184, %v183
  %v229 = vpack.c.b16 %v186, %v185
  %v230 = vpack.c.b16 %v188, %v187
  %v231 = vpack.c.b16 %v190, %v189
  %v232 = vpack.c.b16 %v192, %v191
  %v233 = vpack.c.b16 %v194, %v193
  %v234 = vpack.c.b16 %v196, %v195
  %v235 = vpack.c.b16 %v198, %v197
  %v236 = vpack.c.b16 %v200, %v199
  %v237 = vpack.c.b16 %v202, %v201
  %v238 = vpack.c.b16 %v204, %v203
  %v239 = vpack.c.b16 %v206, %v205
  %v240 = vpack.c.b16 %v208, %v207
  %v243 = vunpack.c.l.b16 %v15
  %v244 = vunpack.c.l.b16 %v16
  %v245 = vpack.c.b16 %v244, %v243
  %vm246 = vcmask 97280
  %v248 = vsel %vm246, %v209, 0
  %v251 = vsel %vm246, %v210, 0
  %v254 = vsel %vm246, %v211, 0
  %v257 = vsel %vm246, %v212, 0
  %v260 = vsel %vm246, %v213, 0
  %v263 = vsel %vm246, %v214, 0
  %v266 = vsel %vm246, %v215, 0
  %v269 = vsel %vm246, %v216, 0
  %v272 = vsel %vm246, %v217, 0
  %v275 = vsel %vm246, %v218, 0
  %v278 = vsel %vm246, %v219, 0
  %v281 = vsel %vm246, %v220, 0
  %v284 = vsel %vm246, %v221, 0
  %v287 = vsel %vm246, %v222, 0
  %v290 = vsel %vm246, %v223, 0
  %v293 = vsel %vm246, %v224, 0
  %v296 = vsel %vm246, %v225, 0
  %v299 = vsel %vm246, %v226, 0
  %v302 = vsel %vm246, %v227, 0
  %v305 = vsel %vm246, %v228, 0
  %v308 = vsel %vm246, %v229, 0
  %v311 = vsel %vm246, %v230, 0
  %v314 = vsel %vm246, %v231, 0
  %v317 = vsel %vm246, %v232, 0
  %v320 = vsel %vm246, %v233, 0
  %v323 = vsel %vm246, %v234, 0
  %v326 = vsel %vm246, %v235, 0
  %v329 = vsel %vm246, %v236, 0
  %v332 = vsel %vm246, %v237, 0
  %v335 = vsel %vm246, %v238, 0
  %v338 = vsel %vm246, %v239, 0
  %v341 = vsel %vm246, %v240, 0
  %vm343 = vcmask 1045504
  %v345 = vsel %vm343, %v245, 0
  %347 = vmatpush.bf16.msra.mxu0 0
  %348 = vmatpush.bf16.msra.mxu0 0
  %349 = vmatpush.bf16.msra.mxu0 0
  %350 = vmatpush.bf16.msra.mxu0 0
  %351 = vmatpush.bf16.msra.mxu0 0
  %352 = vmatpush.bf16.msra.mxu0 0
  %353 = vmatpush.bf16.msra.mxu0 0
  %354 = vmatpush.bf16.msra.mxu0 %v345
  %355 = vmatmul.bf16.gmra.mxu0 %v248
  %v356 = vpop.f32.mrf.mxu0
  %v357 = vadd.f32 0.0, %v356
  %v358 = vpop.f32.mrf.mxu0
  %v359 = vadd.f32 0.0, %v358
  %360 = vmatmul.bf16.gmra.mxu0 %v251
  %v361 = vpop.f32.mrf.mxu0
  %v362 = vadd.f32 0.0, %v361
  %v363 = vpop.f32.mrf.mxu0
  %v364 = vadd.f32 0.0, %v363
  %365 = vmatmul.bf16.gmra.mxu0 %v254
  %v366 = vpop.f32.mrf.mxu0
  %v367 = vadd.f32 0.0, %v366
  %v368 = vpop.f32.mrf.mxu0
  %v369 = vadd.f32 0.0, %v368
  %370 = vmatmul.bf16.gmra.mxu0 %v257
  %v371 = vpop.f32.mrf.mxu0
  %v372 = vadd.f32 0.0, %v371
  %v373 = vpop.f32.mrf.mxu0
  %v374 = vadd.f32 0.0, %v373
  %375 = vmatmul.bf16.gmra.mxu0 %v260
  %v376 = vpop.f32.mrf.mxu0
  %v377 = vadd.f32 0.0, %v376
  %v378 = vpop.f32.mrf.mxu0
  %v379 = vadd.f32 0.0, %v378
  %380 = vmatmul.bf16.gmra.mxu0 %v263
  %v381 = vpop.f32.mrf.mxu0
  %v382 = vadd.f32 0.0, %v381
  %v383 = vpop.f32.mrf.mxu0
  %v384 = vadd.f32 0.0, %v383
  %385 = vmatmul.bf16.gmra.mxu0 %v266
  %v386 = vpop.f32.mrf.mxu0
  %v387 = vadd.f32 0.0, %v386
  %v388 = vpop.f32.mrf.mxu0
  %v389 = vadd.f32 0.0, %v388
  %390 = vmatmul.bf16.gmra.mxu0 %v269
  %v391 = vpop.f32.mrf.mxu0
  %v392 = vadd.f32 0.0, %v391
  %v393 = vpop.f32.mrf.mxu0
  %v394 = vadd.f32 0.0, %v393
  %395 = vmatmul.bf16.gmra.mxu0 %v272
  %v396 = vpop.f32.mrf.mxu0
  %v397 = vadd.f32 0.0, %v396
  %v398 = vpop.f32.mrf.mxu0
  %v399 = vadd.f32 0.0, %v398
  %400 = vmatmul.bf16.gmra.mxu0 %v275
  %v401 = vpop.f32.mrf.mxu0
  %v402 = vadd.f32 0.0, %v401
  %v403 = vpop.f32.mrf.mxu0
  %v404 = vadd.f32 0.0, %v403
  %405 = vmatmul.bf16.gmra.mxu0 %v278
  %v406 = vpop.f32.mrf.mxu0
  %v407 = vadd.f32 0.0, %v406
  %v408 = vpop.f32.mrf.mxu0
  %v409 = vadd.f32 0.0, %v408
  %410 = vmatmul.bf16.gmra.mxu0 %v281
  %v411 = vpop.f32.mrf.mxu0
  %v412 = vadd.f32 0.0, %v411
  %v413 = vpop.f32.mrf.mxu0
  %v414 = vadd.f32 0.0, %v413
  %415 = vmatmul.bf16.gmra.mxu0 %v284
  %v416 = vpop.f32.mrf.mxu0
  %v417 = vadd.f32 0.0, %v416
  %v418 = vpop.f32.mrf.mxu0
  %v419 = vadd.f32 0.0, %v418
  %420 = vmatmul.bf16.gmra.mxu0 %v287
  %v421 = vpop.f32.mrf.mxu0
  %v422 = vadd.f32 0.0, %v421
  %v423 = vpop.f32.mrf.mxu0
  %v424 = vadd.f32 0.0, %v423
  %425 = vmatmul.bf16.gmra.mxu0 %v290
  %v426 = vpop.f32.mrf.mxu0
  %v427 = vadd.f32 0.0, %v426
  %v428 = vpop.f32.mrf.mxu0
  %v429 = vadd.f32 0.0, %v428
  %430 = vmatmul.bf16.gmra.mxu0 %v293
  %v431 = vpop.f32.mrf.mxu0
  %v432 = vadd.f32 0.0, %v431
  %v433 = vpop.f32.mrf.mxu0
  %v434 = vadd.f32 0.0, %v433
  %435 = vmatmul.bf16.gmra.mxu0 %v296
  %v436 = vpop.f32.mrf.mxu0
  %v437 = vadd.f32 0.0, %v436
  %v438 = vpop.f32.mrf.mxu0
  %v439 = vadd.f32 0.0, %v438
  %440 = vmatmul.bf16.gmra.mxu0 %v299
  %v441 = vpop.f32.mrf.mxu0
  %v442 = vadd.f32 0.0, %v441
  %v443 = vpop.f32.mrf.mxu0
  %v444 = vadd.f32 0.0, %v443
  %445 = vmatmul.bf16.gmra.mxu0 %v302
  %v446 = vpop.f32.mrf.mxu0
  %v447 = vadd.f32 0.0, %v446
  %v448 = vpop.f32.mrf.mxu0
  %v449 = vadd.f32 0.0, %v448
  %450 = vmatmul.bf16.gmra.mxu0 %v305
  %v451 = vpop.f32.mrf.mxu0
  %v452 = vadd.f32 0.0, %v451
  %v453 = vpop.f32.mrf.mxu0
  %v454 = vadd.f32 0.0, %v453
  %455 = vmatmul.bf16.gmra.mxu0 %v308
  %v456 = vpop.f32.mrf.mxu0
  %v457 = vadd.f32 0.0, %v456
  %v458 = vpop.f32.mrf.mxu0
  %v459 = vadd.f32 0.0, %v458
  %460 = vmatmul.bf16.gmra.mxu0 %v311
  %v461 = vpop.f32.mrf.mxu0
  %v462 = vadd.f32 0.0, %v461
  %v463 = vpop.f32.mrf.mxu0
  %v464 = vadd.f32 0.0, %v463
  %465 = vmatmul.bf16.gmra.mxu0 %v314
  %v466 = vpop.f32.mrf.mxu0
  %v467 = vadd.f32 0.0, %v466
  %v468 = vpop.f32.mrf.mxu0
  %v469 = vadd.f32 0.0, %v468
  %470 = vmatmul.bf16.gmra.mxu0 %v317
  %v471 = vpop.f32.mrf.mxu0
  %v472 = vadd.f32 0.0, %v471
  %v473 = vpop.f32.mrf.mxu0
  %v474 = vadd.f32 0.0, %v473
  %475 = vmatmul.bf16.gmra.mxu0 %v320
  %v476 = vpop.f32.mrf.mxu0
  %v477 = vadd.f32 0.0, %v476
  %v478 = vpop.f32.mrf.mxu0
  %v479 = vadd.f32 0.0, %v478
  %480 = vmatmul.bf16.gmra.mxu0 %v323
  %v481 = vpop.f32.mrf.mxu0
  %v482 = vadd.f32 0.0, %v481
  %v483 = vpop.f32.mrf.mxu0
  %v484 = vadd.f32 0.0, %v483
  %485 = vmatmul.bf16.gmra.mxu0 %v326
  %v486 = vpop.f32.mrf.mxu0
  %v487 = vadd.f32 0.0, %v486
  %v488 = vpop.f32.mrf.mxu0
  %v489 = vadd.f32 0.0, %v488
  %490 = vmatmul.bf16.gmra.mxu0 %v329
  %v491 = vpop.f32.mrf.mxu0
  %v492 = vadd.f32 0.0, %v491
  %v493 = vpop.f32.mrf.mxu0
  %v494 = vadd.f32 0.0, %v493
  %495 = vmatmul.bf16.gmra.mxu0 %v332
  %v496 = vpop.f32.mrf.mxu0
  %v497 = vadd.f32 0.0, %v496
  %v498 = vpop.f32.mrf.mxu0
  %v499 = vadd.f32 0.0, %v498
  %500 = vmatmul.bf16.gmra.mxu0 %v335
  %v501 = vpop.f32.mrf.mxu0
  %v502 = vadd.f32 0.0, %v501
  %v503 = vpop.f32.mrf.mxu0
  %v504 = vadd.f32 0.0, %v503
  %505 = vmatmul.bf16.gmra.mxu0 %v338
  %v506 = vpop.f32.mrf.mxu0
  %v507 = vadd.f32 0.0, %v506
  %v508 = vpop.f32.mrf.mxu0
  %v509 = vadd.f32 0.0, %v508
  %510 = vmatmul.bf16.gmra.mxu0 %v341
  %v511 = vpop.f32.mrf.mxu0
  %v512 = vadd.f32 0.0, %v511
  %v513 = vpop.f32.mrf.mxu0
  %v514 = vadd.f32 0.0, %v513
  %515 = vdwg.mxu0
  %s516 = scalar_lea.vmem %s0, 256
  %v517 = vld [vmem:[%s516] sm:$0xf]
  %v518 = vld [vmem:[%s516 + $0x4] sm:$0xf]
  %v519 = vld [vmem:[%s516 + $0x8] sm:$0xf]
  %v520 = vld [vmem:[%s516 + $0xc] sm:$0xf]
  %v521 = vld [vmem:[%s516 + $0x10] sm:$0xf]
  %v522 = vld [vmem:[%s516 + $0x14] sm:$0xf]
  %v523 = vld [vmem:[%s516 + $0x18] sm:$0xf]
  %v524 = vld [vmem:[%s516 + $0x1c] sm:$0xf]
  %v525 = vld [vmem:[%s516 + $0x20] sm:$0xf]
  %v526 = vld [vmem:[%s516 + $0x24] sm:$0xf]
  %v527 = vld [vmem:[%s516 + $0x28] sm:$0xf]
  %v528 = vld [vmem:[%s516 + $0x2c] sm:$0xf]
  %v529 = vld [vmem:[%s516 + $0x30] sm:$0xf]
  %v530 = vld [vmem:[%s516 + $0x34] sm:$0xf]
  %v531 = vld [vmem:[%s516 + $0x38] sm:$0xf]
  %v532 = vld [vmem:[%s516 + $0x3c] sm:$0xf]
  %v533 = vld [vmem:[%s516 + $0x40] sm:$0xf]
  %v534 = vld [vmem:[%s516 + $0x44] sm:$0xf]
  %v535 = vld [vmem:[%s516 + $0x48] sm:$0xf]
  %v536 = vld [vmem:[%s516 + $0x4c] sm:$0xf]
  %v537 = vld [vmem:[%s516 + $0x50] sm:$0xf]
  %v538 = vld [vmem:[%s516 + $0x54] sm:$0xf]
  %v539 = vld [vmem:[%s516 + $0x58] sm:$0xf]
  %v540 = vld [vmem:[%s516 + $0x5c] sm:$0xf]
  %v541 = vld [vmem:[%s516 + $0x60] sm:$0xf]
  %v542 = vld [vmem:[%s516 + $0x64] sm:$0xf]
  %v543 = vld [vmem:[%s516 + $0x68] sm:$0xf]
  %v544 = vld [vmem:[%s516 + $0x6c] sm:$0xf]
  %v545 = vld [vmem:[%s516 + $0x70] sm:$0xf]
  %v546 = vld [vmem:[%s516 + $0x74] sm:$0xf]
  %v547 = vld [vmem:[%s516 + $0x78] sm:$0xf]
  %v548 = vld [vmem:[%s516 + $0x7c] sm:$0xf]
  %v549 = vld [vmem:[%s516 + $0x80] sm:$0xf]
  %v550 = vld [vmem:[%s516 + $0x84] sm:$0xf]
  %v551 = vld [vmem:[%s516 + $0x88] sm:$0xf]
  %v552 = vld [vmem:[%s516 + $0x8c] sm:$0xf]
  %v553 = vld [vmem:[%s516 + $0x90] sm:$0xf]
  %v554 = vld [vmem:[%s516 + $0x94] sm:$0xf]
  %v555 = vld [vmem:[%s516 + $0x98] sm:$0xf]
  %v556 = vld [vmem:[%s516 + $0x9c] sm:$0xf]
  %v557 = vld [vmem:[%s516 + $0xa0] sm:$0xf]
  %v558 = vld [vmem:[%s516 + $0xa4] sm:$0xf]
  %v559 = vld [vmem:[%s516 + $0xa8] sm:$0xf]
  %v560 = vld [vmem:[%s516 + $0xac] sm:$0xf]
  %v561 = vld [vmem:[%s516 + $0xb0] sm:$0xf]
  %v562 = vld [vmem:[%s516 + $0xb4] sm:$0xf]
  %v563 = vld [vmem:[%s516 + $0xb8] sm:$0xf]
  %v564 = vld [vmem:[%s516 + $0xbc] sm:$0xf]
  %v565 = vld [vmem:[%s516 + $0xc0] sm:$0xf]
  %v566 = vld [vmem:[%s516 + $0xc4] sm:$0xf]
  %v567 = vld [vmem:[%s516 + $0xc8] sm:$0xf]
  %v568 = vld [vmem:[%s516 + $0xcc] sm:$0xf]
  %v569 = vld [vmem:[%s516 + $0xd0] sm:$0xf]
  %v570 = vld [vmem:[%s516 + $0xd4] sm:$0xf]
  %v571 = vld [vmem:[%s516 + $0xd8] sm:$0xf]
  %v572 = vld [vmem:[%s516 + $0xdc] sm:$0xf]
  %v573 = vld [vmem:[%s516 + $0xe0] sm:$0xf]
  %v574 = vld [vmem:[%s516 + $0xe4] sm:$0xf]
  %v575 = vld [vmem:[%s516 + $0xe8] sm:$0xf]
  %v576 = vld [vmem:[%s516 + $0xec] sm:$0xf]
  %v577 = vld [vmem:[%s516 + $0xf0] sm:$0xf]
  %v578 = vld [vmem:[%s516 + $0xf4] sm:$0xf]
  %v579 = vld [vmem:[%s516 + $0xf8] sm:$0xf]
  %v580 = vld [vmem:[%s516 + $0xfc] sm:$0xf]
  %v645 = vunpack.c.l.b16 %v517
  %v646 = vunpack.c.l.b16 %v518
  %v647 = vunpack.c.l.b16 %v519
  %v648 = vunpack.c.l.b16 %v520
  %v649 = vunpack.c.l.b16 %v521
  %v650 = vunpack.c.l.b16 %v522
  %v651 = vunpack.c.l.b16 %v523
  %v652 = vunpack.c.l.b16 %v524
  %v653 = vunpack.c.l.b16 %v525
  %v654 = vunpack.c.l.b16 %v526
  %v655 = vunpack.c.l.b16 %v527
  %v656 = vunpack.c.l.b16 %v528
  %v657 = vunpack.c.l.b16 %v529
  %v658 = vunpack.c.l.b16 %v530
  %v659 = vunpack.c.l.b16 %v531
  %v660 = vunpack.c.l.b16 %v532
  %v661 = vunpack.c.l.b16 %v533
  %v662 = vunpack.c.l.b16 %v534
  %v663 = vunpack.c.l.b16 %v535
  %v664 = vunpack.c.l.b16 %v536
  %v665 = vunpack.c.l.b16 %v537
  %v666 = vunpack.c.l.b16 %v538
  %v667 = vunpack.c.l.b16 %v539
  %v668 = vunpack.c.l.b16 %v540
  %v669 = vunpack.c.l.b16 %v541
  %v670 = vunpack.c.l.b16 %v542
  %v671 = vunpack.c.l.b16 %v543
  %v672 = vunpack.c.l.b16 %v544
  %v673 = vunpack.c.l.b16 %v545
  %v674 = vunpack.c.l.b16 %v546
  %v675 = vunpack.c.l.b16 %v547
  %v676 = vunpack.c.l.b16 %v548
  %v677 = vunpack.c.l.b16 %v549
  %v678 = vunpack.c.l.b16 %v550
  %v679 = vunpack.c.l.b16 %v551
  %v680 = vunpack.c.l.b16 %v552
  %v681 = vunpack.c.l.b16 %v553
  %v682 = vunpack.c.l.b16 %v554
  %v683 = vunpack.c.l.b16 %v555
  %v684 = vunpack.c.l.b16 %v556
  %v685 = vunpack.c.l.b16 %v557
  %v686 = vunpack.c.l.b16 %v558
  %v687 = vunpack.c.l.b16 %v559
  %v688 = vunpack.c.l.b16 %v560
  %v689 = vunpack.c.l.b16 %v561
  %v690 = vunpack.c.l.b16 %v562
  %v691 = vunpack.c.l.b16 %v563
  %v692 = vunpack.c.l.b16 %v564
  %v693 = vunpack.c.l.b16 %v565
  %v694 = vunpack.c.l.b16 %v566
  %v695 = vunpack.c.l.b16 %v567
  %v696 = vunpack.c.l.b16 %v568
  %v697 = vunpack.c.l.b16 %v569
  %v698 = vunpack.c.l.b16 %v570
  %v699 = vunpack.c.l.b16 %v571
  %v700 = vunpack.c.l.b16 %v572
  %v701 = vunpack.c.l.b16 %v573
  %v702 = vunpack.c.l.b16 %v574
  %v703 = vunpack.c.l.b16 %v575
  %v704 = vunpack.c.l.b16 %v576
  %v705 = vunpack.c.l.b16 %v577
  %v706 = vunpack.c.l.b16 %v578
  %v707 = vunpack.c.l.b16 %v579
  %v708 = vunpack.c.l.b16 %v580
  %v709 = vpack.c.b16 %v646, %v645
  %v710 = vpack.c.b16 %v648, %v647
  %v711 = vpack.c.b16 %v650, %v649
  %v712 = vpack.c.b16 %v652, %v651
  %v713 = vpack.c.b16 %v654, %v653
  %v714 = vpack.c.b16 %v656, %v655
  %v715 = vpack.c.b16 %v658, %v657
  %v716 = vpack.c.b16 %v660, %v659
  %v717 = vpack.c.b16 %v662, %v661
  %v718 = vpack.c.b16 %v664, %v663
  %v719 = vpack.c.b16 %v666, %v665
  %v720 = vpack.c.b16 %v668, %v667
  %v721 = vpack.c.b16 %v670, %v669
  %v722 = vpack.c.b16 %v672, %v671
  %v723 = vpack.c.b16 %v674, %v673
  %v724 = vpack.c.b16 %v676, %v675
  %v725 = vpack.c.b16 %v678, %v677
  %v726 = vpack.c.b16 %v680, %v679
  %v727 = vpack.c.b16 %v682, %v681
  %v728 = vpack.c.b16 %v684, %v683
  %v729 = vpack.c.b16 %v686, %v685
  %v730 = vpack.c.b16 %v688, %v687
  %v731 = vpack.c.b16 %v690, %v689
  %v732 = vpack.c.b16 %v692, %v691
  %v733 = vpack.c.b16 %v694, %v693
  %v734 = vpack.c.b16 %v696, %v695
  %v735 = vpack.c.b16 %v698, %v697
  %v736 = vpack.c.b16 %v700, %v699
  %v737 = vpack.c.b16 %v702, %v701
  %v738 = vpack.c.b16 %v704, %v703
  %v739 = vpack.c.b16 %v706, %v705
  %v740 = vpack.c.b16 %v708, %v707
  %v742 = vsel %vm246, %v709, 0
  %v745 = vsel %vm246, %v710, 0
  %v748 = vsel %vm246, %v711, 0
  %v751 = vsel %vm246, %v712, 0
  %v754 = vsel %vm246, %v713, 0
  %v757 = vsel %vm246, %v714, 0
  %v760 = vsel %vm246, %v715, 0
  %v763 = vsel %vm246, %v716, 0
  %v766 = vsel %vm246, %v717, 0
  %v769 = vsel %vm246, %v718, 0
  %v772 = vsel %vm246, %v719, 0
  %v775 = vsel %vm246, %v720, 0
  %v778 = vsel %vm246, %v721, 0
  %v781 = vsel %vm246, %v722, 0
  %v784 = vsel %vm246, %v723, 0
  %v787 = vsel %vm246, %v724, 0
  %v790 = vsel %vm246, %v725, 0
  %v793 = vsel %vm246, %v726, 0
  %v796 = vsel %vm246, %v727, 0
  %v799 = vsel %vm246, %v728, 0
  %v802 = vsel %vm246, %v729, 0
  %v805 = vsel %vm246, %v730, 0
  %v808 = vsel %vm246, %v731, 0
  %v811 = vsel %vm246, %v732, 0
  %v814 = vsel %vm246, %v733, 0
  %v817 = vsel %vm246, %v734, 0
  %v820 = vsel %vm246, %v735, 0
  %v823 = vsel %vm246, %v736, 0
  %v826 = vsel %vm246, %v737, 0
  %v829 = vsel %vm246, %v738, 0
  %v832 = vsel %vm246, %v739, 0
  %v835 = vsel %vm246, %v740, 0
  %837 = vmatpush.bf16.msra.mxu0 0
  %838 = vmatpush.bf16.msra.mxu0 0
  %839 = vmatpush.bf16.msra.mxu0 0
  %840 = vmatpush.bf16.msra.mxu0 0
  %841 = vmatpush.bf16.msra.mxu0 0
  %842 = vmatpush.bf16.msra.mxu0 0
  %843 = vmatpush.bf16.msra.mxu0 0
  %844 = vmatpush.bf16.msra.mxu0 %v345
  %845 = vmatmul.bf16.gmra.mxu0 %v742
  %v846 = vpop.f32.mrf.mxu0
  %v847 = vadd.f32 0.0, %v846
  %v848 = vpop.f32.mrf.mxu0
  %v849 = vadd.f32 0.0, %v848
  %850 = vmatmul.bf16.gmra.mxu0 %v745
  %v851 = vpop.f32.mrf.mxu0
  %v852 = vadd.f32 0.0, %v851
  %v853 = vpop.f32.mrf.mxu0
  %v854 = vadd.f32 0.0, %v853
  %855 = vmatmul.bf16.gmra.mxu0 %v748
  %v856 = vpop.f32.mrf.mxu0
  %v857 = vadd.f32 0.0, %v856
  %v858 = vpop.f32.mrf.mxu0
  %v859 = vadd.f32 0.0, %v858
  %860 = vmatmul.bf16.gmra.mxu0 %v751
  %v861 = vpop.f32.mrf.mxu0
  %v862 = vadd.f32 0.0, %v861
  %v863 = vpop.f32.mrf.mxu0
  %v864 = vadd.f32 0.0, %v863
  %865 = vmatmul.bf16.gmra.mxu0 %v754
  %v866 = vpop.f32.mrf.mxu0
  %v867 = vadd.f32 0.0, %v866
  %v868 = vpop.f32.mrf.mxu0
  %v869 = vadd.f32 0.0, %v868
  %870 = vmatmul.bf16.gmra.mxu0 %v757
  %v871 = vpop.f32.mrf.mxu0
  %v872 = vadd.f32 0.0, %v871
  %v873 = vpop.f32.mrf.mxu0
  %v874 = vadd.f32 0.0, %v873
  %875 = vmatmul.bf16.gmra.mxu0 %v760
  %v876 = vpop.f32.mrf.mxu0
  %v877 = vadd.f32 0.0, %v876
  %v878 = vpop.f32.mrf.mxu0
  %v879 = vadd.f32 0.0, %v878
  %880 = vmatmul.bf16.gmra.mxu0 %v763
  %v881 = vpop.f32.mrf.mxu0
  %v882 = vadd.f32 0.0, %v881
  %v883 = vpop.f32.mrf.mxu0
  %v884 = vadd.f32 0.0, %v883
  %885 = vmatmul.bf16.gmra.mxu0 %v766
  %v886 = vpop.f32.mrf.mxu0
  %v887 = vadd.f32 0.0, %v886
  %v888 = vpop.f32.mrf.mxu0
  %v889 = vadd.f32 0.0, %v888
  %890 = vmatmul.bf16.gmra.mxu0 %v769
  %v891 = vpop.f32.mrf.mxu0
  %v892 = vadd.f32 0.0, %v891
  %v893 = vpop.f32.mrf.mxu0
  %v894 = vadd.f32 0.0, %v893
  %895 = vmatmul.bf16.gmra.mxu0 %v772
  %v896 = vpop.f32.mrf.mxu0
  %v897 = vadd.f32 0.0, %v896
  %v898 = vpop.f32.mrf.mxu0
  %v899 = vadd.f32 0.0, %v898
  %900 = vmatmul.bf16.gmra.mxu0 %v775
  %v901 = vpop.f32.mrf.mxu0
  %v902 = vadd.f32 0.0, %v901
  %v903 = vpop.f32.mrf.mxu0
  %v904 = vadd.f32 0.0, %v903
  %905 = vmatmul.bf16.gmra.mxu0 %v778
  %v906 = vpop.f32.mrf.mxu0
  %v907 = vadd.f32 0.0, %v906
  %v908 = vpop.f32.mrf.mxu0
  %v909 = vadd.f32 0.0, %v908
  %910 = vmatmul.bf16.gmra.mxu0 %v781
  %v911 = vpop.f32.mrf.mxu0
  %v912 = vadd.f32 0.0, %v911
  %v913 = vpop.f32.mrf.mxu0
  %v914 = vadd.f32 0.0, %v913
  %915 = vmatmul.bf16.gmra.mxu0 %v784
  %v916 = vpop.f32.mrf.mxu0
  %v917 = vadd.f32 0.0, %v916
  %v918 = vpop.f32.mrf.mxu0
  %v919 = vadd.f32 0.0, %v918
  %920 = vmatmul.bf16.gmra.mxu0 %v787
  %v921 = vpop.f32.mrf.mxu0
  %v922 = vadd.f32 0.0, %v921
  %v923 = vpop.f32.mrf.mxu0
  %v924 = vadd.f32 0.0, %v923
  %925 = vmatmul.bf16.gmra.mxu0 %v790
  %v926 = vpop.f32.mrf.mxu0
  %v927 = vadd.f32 0.0, %v926
  %v928 = vpop.f32.mrf.mxu0
  %v929 = vadd.f32 0.0, %v928
  %930 = vmatmul.bf16.gmra.mxu0 %v793
  %v931 = vpop.f32.mrf.mxu0
  %v932 = vadd.f32 0.0, %v931
  %v933 = vpop.f32.mrf.mxu0
  %v934 = vadd.f32 0.0, %v933
  %935 = vmatmul.bf16.gmra.mxu0 %v796
  %v936 = vpop.f32.mrf.mxu0
  %v937 = vadd.f32 0.0, %v936
  %v938 = vpop.f32.mrf.mxu0
  %v939 = vadd.f32 0.0, %v938
  %940 = vmatmul.bf16.gmra.mxu0 %v799
  %v941 = vpop.f32.mrf.mxu0
  %v942 = vadd.f32 0.0, %v941
  %v943 = vpop.f32.mrf.mxu0
  %v944 = vadd.f32 0.0, %v943
  %945 = vmatmul.bf16.gmra.mxu0 %v802
  %v946 = vpop.f32.mrf.mxu0
  %v947 = vadd.f32 0.0, %v946
  %v948 = vpop.f32.mrf.mxu0
  %v949 = vadd.f32 0.0, %v948
  %950 = vmatmul.bf16.gmra.mxu0 %v805
  %v951 = vpop.f32.mrf.mxu0
  %v952 = vadd.f32 0.0, %v951
  %v953 = vpop.f32.mrf.mxu0
  %v954 = vadd.f32 0.0, %v953
  %955 = vmatmul.bf16.gmra.mxu0 %v808
  %v956 = vpop.f32.mrf.mxu0
  %v957 = vadd.f32 0.0, %v956
  %v958 = vpop.f32.mrf.mxu0
  %v959 = vadd.f32 0.0, %v958
  %960 = vmatmul.bf16.gmra.mxu0 %v811
  %v961 = vpop.f32.mrf.mxu0
  %v962 = vadd.f32 0.0, %v961
  %v963 = vpop.f32.mrf.mxu0
  %v964 = vadd.f32 0.0, %v963
  %965 = vmatmul.bf16.gmra.mxu0 %v814
  %v966 = vpop.f32.mrf.mxu0
  %v967 = vadd.f32 0.0, %v966
  %v968 = vpop.f32.mrf.mxu0
  %v969 = vadd.f32 0.0, %v968
  %970 = vmatmul.bf16.gmra.mxu0 %v817
  %v971 = vpop.f32.mrf.mxu0
  %v972 = vadd.f32 0.0, %v971
  %v973 = vpop.f32.mrf.mxu0
  %v974 = vadd.f32 0.0, %v973
  %975 = vmatmul.bf16.gmra.mxu0 %v820
  %v976 = vpop.f32.mrf.mxu0
  %v977 = vadd.f32 0.0, %v976
  %v978 = vpop.f32.mrf.mxu0
  %v979 = vadd.f32 0.0, %v978
  %980 = vmatmul.bf16.gmra.mxu0 %v823
  %v981 = vpop.f32.mrf.mxu0
  %v982 = vadd.f32 0.0, %v981
  %v983 = vpop.f32.mrf.mxu0
  %v984 = vadd.f32 0.0, %v983
  %985 = vmatmul.bf16.gmra.mxu0 %v826
  %v986 = vpop.f32.mrf.mxu0
  %v987 = vadd.f32 0.0, %v986
  %v988 = vpop.f32.mrf.mxu0
  %v989 = vadd.f32 0.0, %v988
  %990 = vmatmul.bf16.gmra.mxu0 %v829
  %v991 = vpop.f32.mrf.mxu0
  %v992 = vadd.f32 0.0, %v991
  %v993 = vpop.f32.mrf.mxu0
  %v994 = vadd.f32 0.0, %v993
  %995 = vmatmul.bf16.gmra.mxu0 %v832
  %v996 = vpop.f32.mrf.mxu0
  %v997 = vadd.f32 0.0, %v996
  %v998 = vpop.f32.mrf.mxu0
  %v999 = vadd.f32 0.0, %v998
  %1000 = vmatmul.bf16.gmra.mxu0 %v835
  %v1001 = vpop.f32.mrf.mxu0
  %v1002 = vadd.f32 0.0, %v1001
  %v1003 = vpop.f32.mrf.mxu0
  %v1004 = vadd.f32 0.0, %v1003
  %1005 = vdwg.mxu0
  %v1006 = vmax.f32 %v357, %v847
  %v1007 = vmax.f32 %v359, %v849
  %v1008 = vmax.f32 %v362, %v852
  %v1009 = vmax.f32 %v364, %v854
  %v1010 = vmax.f32 %v367, %v857
  %v1011 = vmax.f32 %v369, %v859
  %v1012 = vmax.f32 %v372, %v862
  %v1013 = vmax.f32 %v374, %v864
  %v1014 = vmax.f32 %v377, %v867
  %v1015 = vmax.f32 %v379, %v869
  %v1016 = vmax.f32 %v382, %v872
  %v1017 = vmax.f32 %v384, %v874
  %v1018 = vmax.f32 %v387, %v877
  %v1019 = vmax.f32 %v389, %v879
  %v1020 = vmax.f32 %v392, %v882
  %v1021 = vmax.f32 %v394, %v884
  %v1022 = vmax.f32 %v397, %v887
  %v1023 = vmax.f32 %v399, %v889
  %v1024 = vmax.f32 %v402, %v892
  %v1025 = vmax.f32 %v404, %v894
  %v1026 = vmax.f32 %v407, %v897
  %v1027 = vmax.f32 %v409, %v899
  %v1028 = vmax.f32 %v412, %v902
  %v1029 = vmax.f32 %v414, %v904
  %v1030 = vmax.f32 %v417, %v907
  %v1031 = vmax.f32 %v419, %v909
  %v1032 = vmax.f32 %v422, %v912
  %v1033 = vmax.f32 %v424, %v914
  %v1034 = vmax.f32 %v427, %v917
  %v1035 = vmax.f32 %v429, %v919
  %v1036 = vmax.f32 %v432, %v922
  %v1037 = vmax.f32 %v434, %v924
  %v1038 = vmax.f32 %v437, %v927
  %v1039 = vmax.f32 %v439, %v929
  %v1040 = vmax.f32 %v442, %v932
  %v1041 = vmax.f32 %v444, %v934
  %v1042 = vmax.f32 %v447, %v937
  %v1043 = vmax.f32 %v449, %v939
  %v1044 = vmax.f32 %v452, %v942
  %v1045 = vmax.f32 %v454, %v944
  %v1046 = vmax.f32 %v457, %v947
  %v1047 = vmax.f32 %v459, %v949
  %v1048 = vmax.f32 %v462, %v952
  %v1049 = vmax.f32 %v464, %v954
  %v1050 = vmax.f32 %v467, %v957
  %v1051 = vmax.f32 %v469, %v959
  %v1052 = vmax.f32 %v472, %v962
  %v1053 = vmax.f32 %v474, %v964
  %v1054 = vmax.f32 %v477, %v967
  %v1055 = vmax.f32 %v479, %v969
  %v1056 = vmax.f32 %v482, %v972
  %v1057 = vmax.f32 %v484, %v974
  %v1058 = vmax.f32 %v487, %v977
  %v1059 = vmax.f32 %v489, %v979
  %v1060 = vmax.f32 %v492, %v982
  %v1061 = vmax.f32 %v494, %v984
  %v1062 = vmax.f32 %v497, %v987
  %v1063 = vmax.f32 %v499, %v989
  %v1064 = vmax.f32 %v502, %v992
  %v1065 = vmax.f32 %v504, %v994
  %v1066 = vmax.f32 %v507, %v997
  %v1067 = vmax.f32 %v509, %v999
  %v1068 = vmax.f32 %v512, %v1002
  %v1069 = vmax.f32 %v514, %v1004
  %s1070 = scalar_lea.vmem %s0, 512
  %v1071 = vld [vmem:[%s1070] sm:$0xf]
  %v1072 = vld [vmem:[%s1070 + $0x4] sm:$0xf]
  %v1073 = vld [vmem:[%s1070 + $0x8] sm:$0xf]
  %v1074 = vld [vmem:[%s1070 + $0xc] sm:$0xf]
  %v1075 = vld [vmem:[%s1070 + $0x10] sm:$0xf]
  %v1076 = vld [vmem:[%s1070 + $0x14] sm:$0xf]
  %v1077 = vld [vmem:[%s1070 + $0x18] sm:$0xf]
  %v1078 = vld [vmem:[%s1070 + $0x1c] sm:$0xf]
  %v1079 = vld [vmem:[%s1070 + $0x20] sm:$0xf]
  %v1080 = vld [vmem:[%s1070 + $0x24] sm:$0xf]
  %v1081 = vld [vmem:[%s1070 + $0x28] sm:$0xf]
  %v1082 = vld [vmem:[%s1070 + $0x2c] sm:$0xf]
  %v1083 = vld [vmem:[%s1070 + $0x30] sm:$0xf]
  %v1084 = vld [vmem:[%s1070 + $0x34] sm:$0xf]
  %v1085 = vld [vmem:[%s1070 + $0x38] sm:$0xf]
  %v1086 = vld [vmem:[%s1070 + $0x3c] sm:$0xf]
  %v1087 = vld [vmem:[%s1070 + $0x40] sm:$0xf]
  %v1088 = vld [vmem:[%s1070 + $0x44] sm:$0xf]
  %v1089 = vld [vmem:[%s1070 + $0x48] sm:$0xf]
  %v1090 = vld [vmem:[%s1070 + $0x4c] sm:$0xf]
  %v1091 = vld [vmem:[%s1070 + $0x50] sm:$0xf]
  %v1092 = vld [vmem:[%s1070 + $0x54] sm:$0xf]
  %v1093 = vld [vmem:[%s1070 + $0x58] sm:$0xf]
  %v1094 = vld [vmem:[%s1070 + $0x5c] sm:$0xf]
  %v1095 = vld [vmem:[%s1070 + $0x60] sm:$0xf]
  %v1096 = vld [vmem:[%s1070 + $0x64] sm:$0xf]
  %v1097 = vld [vmem:[%s1070 + $0x68] sm:$0xf]
  %v1098 = vld [vmem:[%s1070 + $0x6c] sm:$0xf]
  %v1099 = vld [vmem:[%s1070 + $0x70] sm:$0xf]
  %v1100 = vld [vmem:[%s1070 + $0x74] sm:$0xf]
  %v1101 = vld [vmem:[%s1070 + $0x78] sm:$0xf]
  %v1102 = vld [vmem:[%s1070 + $0x7c] sm:$0xf]
  %v1103 = vld [vmem:[%s1070 + $0x80] sm:$0xf]
  %v1104 = vld [vmem:[%s1070 + $0x84] sm:$0xf]
  %v1105 = vld [vmem:[%s1070 + $0x88] sm:$0xf]
  %v1106 = vld [vmem:[%s1070 + $0x8c] sm:$0xf]
  %v1107 = vld [vmem:[%s1070 + $0x90] sm:$0xf]
  %v1108 = vld [vmem:[%s1070 + $0x94] sm:$0xf]
  %v1109 = vld [vmem:[%s1070 + $0x98] sm:$0xf]
  %v1110 = vld [vmem:[%s1070 + $0x9c] sm:$0xf]
  %v1111 = vld [vmem:[%s1070 + $0xa0] sm:$0xf]
  %v1112 = vld [vmem:[%s1070 + $0xa4] sm:$0xf]
  %v1113 = vld [vmem:[%s1070 + $0xa8] sm:$0xf]
  %v1114 = vld [vmem:[%s1070 + $0xac] sm:$0xf]
  %v1115 = vld [vmem:[%s1070 + $0xb0] sm:$0xf]
  %v1116 = vld [vmem:[%s1070 + $0xb4] sm:$0xf]
  %v1117 = vld [vmem:[%s1070 + $0xb8] sm:$0xf]
  %v1118 = vld [vmem:[%s1070 + $0xbc] sm:$0xf]
  %v1119 = vld [vmem:[%s1070 + $0xc0] sm:$0xf]
  %v1120 = vld [vmem:[%s1070 + $0xc4] sm:$0xf]
  %v1121 = vld [vmem:[%s1070 + $0xc8] sm:$0xf]
  %v1122 = vld [vmem:[%s1070 + $0xcc] sm:$0xf]
  %v1123 = vld [vmem:[%s1070 + $0xd0] sm:$0xf]
  %v1124 = vld [vmem:[%s1070 + $0xd4] sm:$0xf]
  %v1125 = vld [vmem:[%s1070 + $0xd8] sm:$0xf]
  %v1126 = vld [vmem:[%s1070 + $0xdc] sm:$0xf]
  %v1127 = vld [vmem:[%s1070 + $0xe0] sm:$0xf]
  %v1128 = vld [vmem:[%s1070 + $0xe4] sm:$0xf]
  %v1129 = vld [vmem:[%s1070 + $0xe8] sm:$0xf]
  %v1130 = vld [vmem:[%s1070 + $0xec] sm:$0xf]
  %v1131 = vld [vmem:[%s1070 + $0xf0] sm:$0xf]
  %v1132 = vld [vmem:[%s1070 + $0xf4] sm:$0xf]
  %v1133 = vld [vmem:[%s1070 + $0xf8] sm:$0xf]
  %v1134 = vld [vmem:[%s1070 + $0xfc] sm:$0xf]
  %v1199 = vunpack.c.l.b16 %v1071
  %v1200 = vunpack.c.l.b16 %v1072
  %v1201 = vunpack.c.l.b16 %v1073
  %v1202 = vunpack.c.l.b16 %v1074
  %v1203 = vunpack.c.l.b16 %v1075
  %v1204 = vunpack.c.l.b16 %v1076
  %v1205 = vunpack.c.l.b16 %v1077
  %v1206 = vunpack.c.l.b16 %v1078
  %v1207 = vunpack.c.l.b16 %v1079
  %v1208 = vunpack.c.l.b16 %v1080
  %v1209 = vunpack.c.l.b16 %v1081
  %v1210 = vunpack.c.l.b16 %v1082
  %v1211 = vunpack.c.l.b16 %v1083
  %v1212 = vunpack.c.l.b16 %v1084
  %v1213 = vunpack.c.l.b16 %v1085
  %v1214 = vunpack.c.l.b16 %v1086
  %v1215 = vunpack.c.l.b16 %v1087
  %v1216 = vunpack.c.l.b16 %v1088
  %v1217 = vunpack.c.l.b16 %v1089
  %v1218 = vunpack.c.l.b16 %v1090
  %v1219 = vunpack.c.l.b16 %v1091
  %v1220 = vunpack.c.l.b16 %v1092
  %v1221 = vunpack.c.l.b16 %v1093
  %v1222 = vunpack.c.l.b16 %v1094
  %v1223 = vunpack.c.l.b16 %v1095
  %v1224 = vunpack.c.l.b16 %v1096
  %v1225 = vunpack.c.l.b16 %v1097
  %v1226 = vunpack.c.l.b16 %v1098
  %v1227 = vunpack.c.l.b16 %v1099
  %v1228 = vunpack.c.l.b16 %v1100
  %v1229 = vunpack.c.l.b16 %v1101
  %v1230 = vunpack.c.l.b16 %v1102
  %v1231 = vunpack.c.l.b16 %v1103
  %v1232 = vunpack.c.l.b16 %v1104
  %v1233 = vunpack.c.l.b16 %v1105
  %v1234 = vunpack.c.l.b16 %v1106
  %v1235 = vunpack.c.l.b16 %v1107
  %v1236 = vunpack.c.l.b16 %v1108
  %v1237 = vunpack.c.l.b16 %v1109
  %v1238 = vunpack.c.l.b16 %v1110
  %v1239 = vunpack.c.l.b16 %v1111
  %v1240 = vunpack.c.l.b16 %v1112
  %v1241 = vunpack.c.l.b16 %v1113
  %v1242 = vunpack.c.l.b16 %v1114
  %v1243 = vunpack.c.l.b16 %v1115
  %v1244 = vunpack.c.l.b16 %v1116
  %v1245 = vunpack.c.l.b16 %v1117
  %v1246 = vunpack.c.l.b16 %v1118
  %v1247 = vunpack.c.l.b16 %v1119
  %v1248 = vunpack.c.l.b16 %v1120
  %v1249 = vunpack.c.l.b16 %v1121
  %v1250 = vunpack.c.l.b16 %v1122
  %v1251 = vunpack.c.l.b16 %v1123
  %v1252 = vunpack.c.l.b16 %v1124
  %v1253 = vunpack.c.l.b16 %v1125
  %v1254 = vunpack.c.l.b16 %v1126
  %v1255 = vunpack.c.l.b16 %v1127
  %v1256 = vunpack.c.l.b16 %v1128
  %v1257 = vunpack.c.l.b16 %v1129
  %v1258 = vunpack.c.l.b16 %v1130
  %v1259 = vunpack.c.l.b16 %v1131
  %v1260 = vunpack.c.l.b16 %v1132
  %v1261 = vunpack.c.l.b16 %v1133
  %v1262 = vunpack.c.l.b16 %v1134
  %v1263 = vpack.c.b16 %v1200, %v1199
  %v1264 = vpack.c.b16 %v1202, %v1201
  %v1265 = vpack.c.b16 %v1204, %v1203
  %v1266 = vpack.c.b16 %v1206, %v1205
  %v1267 = vpack.c.b16 %v1208, %v1207
  %v1268 = vpack.c.b16 %v1210, %v1209
  %v1269 = vpack.c.b16 %v1212, %v1211
  %v1270 = vpack.c.b16 %v1214, %v1213
  %v1271 = vpack.c.b16 %v1216, %v1215
  %v1272 = vpack.c.b16 %v1218, %v1217
  %v1273 = vpack.c.b16 %v1220, %v1219
  %v1274 = vpack.c.b16 %v1222, %v1221
  %v1275 = vpack.c.b16 %v1224, %v1223
  %v1276 = vpack.c.b16 %v1226, %v1225
  %v1277 = vpack.c.b16 %v1228, %v1227
  %v1278 = vpack.c.b16 %v1230, %v1229
  %v1279 = vpack.c.b16 %v1232, %v1231
  %v1280 = vpack.c.b16 %v1234, %v1233
  %v1281 = vpack.c.b16 %v1236, %v1235
  %v1282 = vpack.c.b16 %v1238, %v1237
  %v1283 = vpack.c.b16 %v1240, %v1239
  %v1284 = vpack.c.b16 %v1242, %v1241
  %v1285 = vpack.c.b16 %v1244, %v1243
  %v1286 = vpack.c.b16 %v1246, %v1245
  %v1287 = vpack.c.b16 %v1248, %v1247
  %v1288 = vpack.c.b16 %v1250, %v1249
  %v1289 = vpack.c.b16 %v1252, %v1251
  %v1290 = vpack.c.b16 %v1254, %v1253
  %v1291 = vpack.c.b16 %v1256, %v1255
  %v1292 = vpack.c.b16 %v1258, %v1257
  %v1293 = vpack.c.b16 %v1260, %v1259
  %v1294 = vpack.c.b16 %v1262, %v1261
  %v1296 = vsel %vm246, %v1263, 0
  %v1299 = vsel %vm246, %v1264, 0
  %v1302 = vsel %vm246, %v1265, 0
  %v1305 = vsel %vm246, %v1266, 0
  %v1308 = vsel %vm246, %v1267, 0
  %v1311 = vsel %vm246, %v1268, 0
  %v1314 = vsel %vm246, %v1269, 0
  %v1317 = vsel %vm246, %v1270, 0
  %v1320 = vsel %vm246, %v1271, 0
  %v1323 = vsel %vm246, %v1272, 0
  %v1326 = vsel %vm246, %v1273, 0
  %v1329 = vsel %vm246, %v1274, 0
  %v1332 = vsel %vm246, %v1275, 0
  %v1335 = vsel %vm246, %v1276, 0
  %v1338 = vsel %vm246, %v1277, 0
  %v1341 = vsel %vm246, %v1278, 0
  %v1344 = vsel %vm246, %v1279, 0
  %v1347 = vsel %vm246, %v1280, 0
  %v1350 = vsel %vm246, %v1281, 0
  %v1353 = vsel %vm246, %v1282, 0
  %v1356 = vsel %vm246, %v1283, 0
  %v1359 = vsel %vm246, %v1284, 0
  %v1362 = vsel %vm246, %v1285, 0
  %v1365 = vsel %vm246, %v1286, 0
  %v1368 = vsel %vm246, %v1287, 0
  %v1371 = vsel %vm246, %v1288, 0
  %v1374 = vsel %vm246, %v1289, 0
  %v1377 = vsel %vm246, %v1290, 0
  %v1380 = vsel %vm246, %v1291, 0
  %v1383 = vsel %vm246, %v1292, 0
  %v1386 = vsel %vm246, %v1293, 0
  %v1389 = vsel %vm246, %v1294, 0
  %1391 = vmatpush.bf16.msra.mxu0 0
  %1392 = vmatpush.bf16.msra.mxu0 0
  %1393 = vmatpush.bf16.msra.mxu0 0
  %1394 = vmatpush.bf16.msra.mxu0 0
  %1395 = vmatpush.bf16.msra.mxu0 0
  %1396 = vmatpush.bf16.msra.mxu0 0
  %1397 = vmatpush.bf16.msra.mxu0 0
  %1398 = vmatpush.bf16.msra.mxu0 %v345
  %1399 = vmatmul.bf16.gmra.mxu0 %v1296
  %v1400 = vpop.f32.mrf.mxu0
  %v1401 = vadd.f32 0.0, %v1400
  %v1402 = vpop.f32.mrf.mxu0
  %v1403 = vadd.f32 0.0, %v1402
  %1404 = vmatmul.bf16.gmra.mxu0 %v1299
  %v1405 = vpop.f32.mrf.mxu0
  %v1406 = vadd.f32 0.0, %v1405
  %v1407 = vpop.f32.mrf.mxu0
  %v1408 = vadd.f32 0.0, %v1407
  %1409 = vmatmul.bf16.gmra.mxu0 %v1302
  %v1410 = vpop.f32.mrf.mxu0
  %v1411 = vadd.f32 0.0, %v1410
  %v1412 = vpop.f32.mrf.mxu0
  %v1413 = vadd.f32 0.0, %v1412
  %1414 = vmatmul.bf16.gmra.mxu0 %v1305
  %v1415 = vpop.f32.mrf.mxu0
  %v1416 = vadd.f32 0.0, %v1415
  %v1417 = vpop.f32.mrf.mxu0
  %v1418 = vadd.f32 0.0, %v1417
  %1419 = vmatmul.bf16.gmra.mxu0 %v1308
  %v1420 = vpop.f32.mrf.mxu0
  %v1421 = vadd.f32 0.0, %v1420
  %v1422 = vpop.f32.mrf.mxu0
  %v1423 = vadd.f32 0.0, %v1422
  %1424 = vmatmul.bf16.gmra.mxu0 %v1311
  %v1425 = vpop.f32.mrf.mxu0
  %v1426 = vadd.f32 0.0, %v1425
  %v1427 = vpop.f32.mrf.mxu0
  %v1428 = vadd.f32 0.0, %v1427
  %1429 = vmatmul.bf16.gmra.mxu0 %v1314
  %v1430 = vpop.f32.mrf.mxu0
  %v1431 = vadd.f32 0.0, %v1430
  %v1432 = vpop.f32.mrf.mxu0
  %v1433 = vadd.f32 0.0, %v1432
  %1434 = vmatmul.bf16.gmra.mxu0 %v1317
  %v1435 = vpop.f32.mrf.mxu0
  %v1436 = vadd.f32 0.0, %v1435
  %v1437 = vpop.f32.mrf.mxu0
  %v1438 = vadd.f32 0.0, %v1437
  %1439 = vmatmul.bf16.gmra.mxu0 %v1320
  %v1440 = vpop.f32.mrf.mxu0
  %v1441 = vadd.f32 0.0, %v1440
  %v1442 = vpop.f32.mrf.mxu0
  %v1443 = vadd.f32 0.0, %v1442
  %1444 = vmatmul.bf16.gmra.mxu0 %v1323
  %v1445 = vpop.f32.mrf.mxu0
  %v1446 = vadd.f32 0.0, %v1445
  %v1447 = vpop.f32.mrf.mxu0
  %v1448 = vadd.f32 0.0, %v1447
  %1449 = vmatmul.bf16.gmra.mxu0 %v1326
  %v1450 = vpop.f32.mrf.mxu0
  %v1451 = vadd.f32 0.0, %v1450
  %v1452 = vpop.f32.mrf.mxu0
  %v1453 = vadd.f32 0.0, %v1452
  %1454 = vmatmul.bf16.gmra.mxu0 %v1329
  %v1455 = vpop.f32.mrf.mxu0
  %v1456 = vadd.f32 0.0, %v1455
  %v1457 = vpop.f32.mrf.mxu0
  %v1458 = vadd.f32 0.0, %v1457
  %1459 = vmatmul.bf16.gmra.mxu0 %v1332
  %v1460 = vpop.f32.mrf.mxu0
  %v1461 = vadd.f32 0.0, %v1460
  %v1462 = vpop.f32.mrf.mxu0
  %v1463 = vadd.f32 0.0, %v1462
  %1464 = vmatmul.bf16.gmra.mxu0 %v1335
  %v1465 = vpop.f32.mrf.mxu0
  %v1466 = vadd.f32 0.0, %v1465
  %v1467 = vpop.f32.mrf.mxu0
  %v1468 = vadd.f32 0.0, %v1467
  %1469 = vmatmul.bf16.gmra.mxu0 %v1338
  %v1470 = vpop.f32.mrf.mxu0
  %v1471 = vadd.f32 0.0, %v1470
  %v1472 = vpop.f32.mrf.mxu0
  %v1473 = vadd.f32 0.0, %v1472
  %1474 = vmatmul.bf16.gmra.mxu0 %v1341
  %v1475 = vpop.f32.mrf.mxu0
  %v1476 = vadd.f32 0.0, %v1475
  %v1477 = vpop.f32.mrf.mxu0
  %v1478 = vadd.f32 0.0, %v1477
  %1479 = vmatmul.bf16.gmra.mxu0 %v1344
  %v1480 = vpop.f32.mrf.mxu0
  %v1481 = vadd.f32 0.0, %v1480
  %v1482 = vpop.f32.mrf.mxu0
  %v1483 = vadd.f32 0.0, %v1482
  %1484 = vmatmul.bf16.gmra.mxu0 %v1347
  %v1485 = vpop.f32.mrf.mxu0
  %v1486 = vadd.f32 0.0, %v1485
  %v1487 = vpop.f32.mrf.mxu0
  %v1488 = vadd.f32 0.0, %v1487
  %1489 = vmatmul.bf16.gmra.mxu0 %v1350
  %v1490 = vpop.f32.mrf.mxu0
  %v1491 = vadd.f32 0.0, %v1490
  %v1492 = vpop.f32.mrf.mxu0
  %v1493 = vadd.f32 0.0, %v1492
  %1494 = vmatmul.bf16.gmra.mxu0 %v1353
  %v1495 = vpop.f32.mrf.mxu0
  %v1496 = vadd.f32 0.0, %v1495
  %v1497 = vpop.f32.mrf.mxu0
  %v1498 = vadd.f32 0.0, %v1497
  %1499 = vmatmul.bf16.gmra.mxu0 %v1356
  %v1500 = vpop.f32.mrf.mxu0
  %v1501 = vadd.f32 0.0, %v1500
  %v1502 = vpop.f32.mrf.mxu0
  %v1503 = vadd.f32 0.0, %v1502
  %1504 = vmatmul.bf16.gmra.mxu0 %v1359
  %v1505 = vpop.f32.mrf.mxu0
  %v1506 = vadd.f32 0.0, %v1505
  %v1507 = vpop.f32.mrf.mxu0
  %v1508 = vadd.f32 0.0, %v1507
  %1509 = vmatmul.bf16.gmra.mxu0 %v1362
  %v1510 = vpop.f32.mrf.mxu0
  %v1511 = vadd.f32 0.0, %v1510
  %v1512 = vpop.f32.mrf.mxu0
  %v1513 = vadd.f32 0.0, %v1512
  %1514 = vmatmul.bf16.gmra.mxu0 %v1365
  %v1515 = vpop.f32.mrf.mxu0
  %v1516 = vadd.f32 0.0, %v1515
  %v1517 = vpop.f32.mrf.mxu0
  %v1518 = vadd.f32 0.0, %v1517
  %1519 = vmatmul.bf16.gmra.mxu0 %v1368
  %v1520 = vpop.f32.mrf.mxu0
  %v1521 = vadd.f32 0.0, %v1520
  %v1522 = vpop.f32.mrf.mxu0
  %v1523 = vadd.f32 0.0, %v1522
  %1524 = vmatmul.bf16.gmra.mxu0 %v1371
  %v1525 = vpop.f32.mrf.mxu0
  %v1526 = vadd.f32 0.0, %v1525
  %v1527 = vpop.f32.mrf.mxu0
  %v1528 = vadd.f32 0.0, %v1527
  %1529 = vmatmul.bf16.gmra.mxu0 %v1374
  %v1530 = vpop.f32.mrf.mxu0
  %v1531 = vadd.f32 0.0, %v1530
  %v1532 = vpop.f32.mrf.mxu0
  %v1533 = vadd.f32 0.0, %v1532
  %1534 = vmatmul.bf16.gmra.mxu0 %v1377
  %v1535 = vpop.f32.mrf.mxu0
  %v1536 = vadd.f32 0.0, %v1535
  %v1537 = vpop.f32.mrf.mxu0
  %v1538 = vadd.f32 0.0, %v1537
  %1539 = vmatmul.bf16.gmra.mxu0 %v1380
  %v1540 = vpop.f32.mrf.mxu0
  %v1541 = vadd.f32 0.0, %v1540
  %v1542 = vpop.f32.mrf.mxu0
  %v1543 = vadd.f32 0.0, %v1542
  %1544 = vmatmul.bf16.gmra.mxu0 %v1383
  %v1545 = vpop.f32.mrf.mxu0
  %v1546 = vadd.f32 0.0, %v1545
  %v1547 = vpop.f32.mrf.mxu0
  %v1548 = vadd.f32 0.0, %v1547
  %1549 = vmatmul.bf16.gmra.mxu0 %v1386
  %v1550 = vpop.f32.mrf.mxu0
  %v1551 = vadd.f32 0.0, %v1550
  %v1552 = vpop.f32.mrf.mxu0
  %v1553 = vadd.f32 0.0, %v1552
  %1554 = vmatmul.bf16.gmra.mxu0 %v1389
  %v1555 = vpop.f32.mrf.mxu0
  %v1556 = vadd.f32 0.0, %v1555
  %v1557 = vpop.f32.mrf.mxu0
  %v1558 = vadd.f32 0.0, %v1557
  %1559 = vdwg.mxu0
  %s1560 = scalar_lea.vmem %s0, 768
  %v1561 = vld [vmem:[%s1560] sm:$0xf]
  %v1562 = vld [vmem:[%s1560 + $0x4] sm:$0xf]
  %v1563 = vld [vmem:[%s1560 + $0x8] sm:$0xf]
  %v1564 = vld [vmem:[%s1560 + $0xc] sm:$0xf]
  %v1565 = vld [vmem:[%s1560 + $0x10] sm:$0xf]
  %v1566 = vld [vmem:[%s1560 + $0x14] sm:$0xf]
  %v1567 = vld [vmem:[%s1560 + $0x18] sm:$0xf]
  %v1568 = vld [vmem:[%s1560 + $0x1c] sm:$0xf]
  %v1569 = vld [vmem:[%s1560 + $0x20] sm:$0xf]
  %v1570 = vld [vmem:[%s1560 + $0x24] sm:$0xf]
  %v1571 = vld [vmem:[%s1560 + $0x28] sm:$0xf]
  %v1572 = vld [vmem:[%s1560 + $0x2c] sm:$0xf]
  %v1573 = vld [vmem:[%s1560 + $0x30] sm:$0xf]
  %v1574 = vld [vmem:[%s1560 + $0x34] sm:$0xf]
  %v1575 = vld [vmem:[%s1560 + $0x38] sm:$0xf]
  %v1576 = vld [vmem:[%s1560 + $0x3c] sm:$0xf]
  %v1577 = vld [vmem:[%s1560 + $0x40] sm:$0xf]
  %v1578 = vld [vmem:[%s1560 + $0x44] sm:$0xf]
  %v1579 = vld [vmem:[%s1560 + $0x48] sm:$0xf]
  %v1580 = vld [vmem:[%s1560 + $0x4c] sm:$0xf]
  %v1581 = vld [vmem:[%s1560 + $0x50] sm:$0xf]
  %v1582 = vld [vmem:[%s1560 + $0x54] sm:$0xf]
  %v1583 = vld [vmem:[%s1560 + $0x58] sm:$0xf]
  %v1584 = vld [vmem:[%s1560 + $0x5c] sm:$0xf]
  %v1585 = vld [vmem:[%s1560 + $0x60] sm:$0xf]
  %v1586 = vld [vmem:[%s1560 + $0x64] sm:$0xf]
  %v1587 = vld [vmem:[%s1560 + $0x68] sm:$0xf]
  %v1588 = vld [vmem:[%s1560 + $0x6c] sm:$0xf]
  %v1589 = vld [vmem:[%s1560 + $0x70] sm:$0xf]
  %v1590 = vld [vmem:[%s1560 + $0x74] sm:$0xf]
  %v1591 = vld [vmem:[%s1560 + $0x78] sm:$0xf]
  %v1592 = vld [vmem:[%s1560 + $0x7c] sm:$0xf]
  %v1593 = vld [vmem:[%s1560 + $0x80] sm:$0xf]
  %v1594 = vld [vmem:[%s1560 + $0x84] sm:$0xf]
  %v1595 = vld [vmem:[%s1560 + $0x88] sm:$0xf]
  %v1596 = vld [vmem:[%s1560 + $0x8c] sm:$0xf]
  %v1597 = vld [vmem:[%s1560 + $0x90] sm:$0xf]
  %v1598 = vld [vmem:[%s1560 + $0x94] sm:$0xf]
  %v1599 = vld [vmem:[%s1560 + $0x98] sm:$0xf]
  %v1600 = vld [vmem:[%s1560 + $0x9c] sm:$0xf]
  %v1601 = vld [vmem:[%s1560 + $0xa0] sm:$0xf]
  %v1602 = vld [vmem:[%s1560 + $0xa4] sm:$0xf]
  %v1603 = vld [vmem:[%s1560 + $0xa8] sm:$0xf]
  %v1604 = vld [vmem:[%s1560 + $0xac] sm:$0xf]
  %v1605 = vld [vmem:[%s1560 + $0xb0] sm:$0xf]
  %v1606 = vld [vmem:[%s1560 + $0xb4] sm:$0xf]
  %v1607 = vld [vmem:[%s1560 + $0xb8] sm:$0xf]
  %v1608 = vld [vmem:[%s1560 + $0xbc] sm:$0xf]
  %v1609 = vld [vmem:[%s1560 + $0xc0] sm:$0xf]
  %v1610 = vld [vmem:[%s1560 + $0xc4] sm:$0xf]
  %v1611 = vld [vmem:[%s1560 + $0xc8] sm:$0xf]
  %v1612 = vld [vmem:[%s1560 + $0xcc] sm:$0xf]
  %v1613 = vld [vmem:[%s1560 + $0xd0] sm:$0xf]
  %v1614 = vld [vmem:[%s1560 + $0xd4] sm:$0xf]
  %v1615 = vld [vmem:[%s1560 + $0xd8] sm:$0xf]
  %v1616 = vld [vmem:[%s1560 + $0xdc] sm:$0xf]
  %v1617 = vld [vmem:[%s1560 + $0xe0] sm:$0xf]
  %v1618 = vld [vmem:[%s1560 + $0xe4] sm:$0xf]
  %v1619 = vld [vmem:[%s1560 + $0xe8] sm:$0xf]
  %v1620 = vld [vmem:[%s1560 + $0xec] sm:$0xf]
  %v1621 = vld [vmem:[%s1560 + $0xf0] sm:$0xf]
  %v1622 = vld [vmem:[%s1560 + $0xf4] sm:$0xf]
  %v1623 = vld [vmem:[%s1560 + $0xf8] sm:$0xf]
  %v1624 = vld [vmem:[%s1560 + $0xfc] sm:$0xf]
  %v1689 = vunpack.c.l.b16 %v1561
  %v1690 = vunpack.c.l.b16 %v1562
  %v1691 = vunpack.c.l.b16 %v1563
  %v1692 = vunpack.c.l.b16 %v1564
  %v1693 = vunpack.c.l.b16 %v1565
  %v1694 = vunpack.c.l.b16 %v1566
  %v1695 = vunpack.c.l.b16 %v1567
  %v1696 = vunpack.c.l.b16 %v1568
  %v1697 = vunpack.c.l.b16 %v1569
  %v1698 = vunpack.c.l.b16 %v1570
  %v1699 = vunpack.c.l.b16 %v1571
  %v1700 = vunpack.c.l.b16 %v1572
  %v1701 = vunpack.c.l.b16 %v1573
  %v1702 = vunpack.c.l.b16 %v1574
  %v1703 = vunpack.c.l.b16 %v1575
  %v1704 = vunpack.c.l.b16 %v1576
  %v1705 = vunpack.c.l.b16 %v1577
  %v1706 = vunpack.c.l.b16 %v1578
  %v1707 = vunpack.c.l.b16 %v1579
  %v1708 = vunpack.c.l.b16 %v1580
  %v1709 = vunpack.c.l.b16 %v1581
  %v1710 = vunpack.c.l.b16 %v1582
  %v1711 = vunpack.c.l.b16 %v1583
  %v1712 = vunpack.c.l.b16 %v1584
  %v1713 = vunpack.c.l.b16 %v1585
  %v1714 = vunpack.c.l.b16 %v1586
  %v1715 = vunpack.c.l.b16 %v1587
  %v1716 = vunpack.c.l.b16 %v1588
  %v1717 = vunpack.c.l.b16 %v1589
  %v1718 = vunpack.c.l.b16 %v1590
  %v1719 = vunpack.c.l.b16 %v1591
  %v1720 = vunpack.c.l.b16 %v1592
  %v1721 = vunpack.c.l.b16 %v1593
  %v1722 = vunpack.c.l.b16 %v1594
  %v1723 = vunpack.c.l.b16 %v1595
  %v1724 = vunpack.c.l.b16 %v1596
  %v1725 = vunpack.c.l.b16 %v1597
  %v1726 = vunpack.c.l.b16 %v1598
  %v1727 = vunpack.c.l.b16 %v1599
  %v1728 = vunpack.c.l.b16 %v1600
  %v1729 = vunpack.c.l.b16 %v1601
  %v1730 = vunpack.c.l.b16 %v1602
  %v1731 = vunpack.c.l.b16 %v1603
  %v1732 = vunpack.c.l.b16 %v1604
  %v1733 = vunpack.c.l.b16 %v1605
  %v1734 = vunpack.c.l.b16 %v1606
  %v1735 = vunpack.c.l.b16 %v1607
  %v1736 = vunpack.c.l.b16 %v1608
  %v1737 = vunpack.c.l.b16 %v1609
  %v1738 = vunpack.c.l.b16 %v1610
  %v1739 = vunpack.c.l.b16 %v1611
  %v1740 = vunpack.c.l.b16 %v1612
  %v1741 = vunpack.c.l.b16 %v1613
  %v1742 = vunpack.c.l.b16 %v1614
  %v1743 = vunpack.c.l.b16 %v1615
  %v1744 = vunpack.c.l.b16 %v1616
  %v1745 = vunpack.c.l.b16 %v1617
  %v1746 = vunpack.c.l.b16 %v1618
  %v1747 = vunpack.c.l.b16 %v1619
  %v1748 = vunpack.c.l.b16 %v1620
  %v1749 = vunpack.c.l.b16 %v1621
  %v1750 = vunpack.c.l.b16 %v1622
  %v1751 = vunpack.c.l.b16 %v1623
  %v1752 = vunpack.c.l.b16 %v1624
  %v1753 = vpack.c.b16 %v1690, %v1689
  %v1754 = vpack.c.b16 %v1692, %v1691
  %v1755 = vpack.c.b16 %v1694, %v1693
  %v1756 = vpack.c.b16 %v1696, %v1695
  %v1757 = vpack.c.b16 %v1698, %v1697
  %v1758 = vpack.c.b16 %v1700, %v1699
  %v1759 = vpack.c.b16 %v1702, %v1701
  %v1760 = vpack.c.b16 %v1704, %v1703
  %v1761 = vpack.c.b16 %v1706, %v1705
  %v1762 = vpack.c.b16 %v1708, %v1707
  %v1763 = vpack.c.b16 %v1710, %v1709
  %v1764 = vpack.c.b16 %v1712, %v1711
  %v1765 = vpack.c.b16 %v1714, %v1713
  %v1766 = vpack.c.b16 %v1716, %v1715
  %v1767 = vpack.c.b16 %v1718, %v1717
  %v1768 = vpack.c.b16 %v1720, %v1719
  %v1769 = vpack.c.b16 %v1722, %v1721
  %v1770 = vpack.c.b16 %v1724, %v1723
  %v1771 = vpack.c.b16 %v1726, %v1725
  %v1772 = vpack.c.b16 %v1728, %v1727
  %v1773 = vpack.c.b16 %v1730, %v1729
  %v1774 = vpack.c.b16 %v1732, %v1731
  %v1775 = vpack.c.b16 %v1734, %v1733
  %v1776 = vpack.c.b16 %v1736, %v1735
  %v1777 = vpack.c.b16 %v1738, %v1737
  %v1778 = vpack.c.b16 %v1740, %v1739
  %v1779 = vpack.c.b16 %v1742, %v1741
  %v1780 = vpack.c.b16 %v1744, %v1743
  %v1781 = vpack.c.b16 %v1746, %v1745
  %v1782 = vpack.c.b16 %v1748, %v1747
  %v1783 = vpack.c.b16 %v1750, %v1749
  %v1784 = vpack.c.b16 %v1752, %v1751
  %v1786 = vsel %vm246, %v1753, 0
  %v1789 = vsel %vm246, %v1754, 0
  %v1792 = vsel %vm246, %v1755, 0
  %v1795 = vsel %vm246, %v1756, 0
  %v1798 = vsel %vm246, %v1757, 0
  %v1801 = vsel %vm246, %v1758, 0
  %v1804 = vsel %vm246, %v1759, 0
  %v1807 = vsel %vm246, %v1760, 0
  %v1810 = vsel %vm246, %v1761, 0
  %v1813 = vsel %vm246, %v1762, 0
  %v1816 = vsel %vm246, %v1763, 0
  %v1819 = vsel %vm246, %v1764, 0
  %v1822 = vsel %vm246, %v1765, 0
  %v1825 = vsel %vm246, %v1766, 0
  %v1828 = vsel %vm246, %v1767, 0
  %v1831 = vsel %vm246, %v1768, 0
  %v1834 = vsel %vm246, %v1769, 0
  %v1837 = vsel %vm246, %v1770, 0
  %v1840 = vsel %vm246, %v1771, 0
  %v1843 = vsel %vm246, %v1772, 0
  %v1846 = vsel %vm246, %v1773, 0
  %v1849 = vsel %vm246, %v1774, 0
  %v1852 = vsel %vm246, %v1775, 0
  %v1855 = vsel %vm246, %v1776, 0
  %v1858 = vsel %vm246, %v1777, 0
  %v1861 = vsel %vm246, %v1778, 0
  %v1864 = vsel %vm246, %v1779, 0
  %v1867 = vsel %vm246, %v1780, 0
  %v1870 = vsel %vm246, %v1781, 0
  %v1873 = vsel %vm246, %v1782, 0
  %v1876 = vsel %vm246, %v1783, 0
  %v1879 = vsel %vm246, %v1784, 0
  %1881 = vmatpush.bf16.msra.mxu0 0
  %1882 = vmatpush.bf16.msra.mxu0 0
  %1883 = vmatpush.bf16.msra.mxu0 0
  %1884 = vmatpush.bf16.msra.mxu0 0
  %1885 = vmatpush.bf16.msra.mxu0 0
  %1886 = vmatpush.bf16.msra.mxu0 0
  %1887 = vmatpush.bf16.msra.mxu0 0
  %1888 = vmatpush.bf16.msra.mxu0 %v345
  %1889 = vmatmul.bf16.gmra.mxu0 %v1786
  %v1890 = vpop.f32.mrf.mxu0
  %v1891 = vadd.f32 0.0, %v1890
  %v1892 = vpop.f32.mrf.mxu0
  %v1893 = vadd.f32 0.0, %v1892
  %1894 = vmatmul.bf16.gmra.mxu0 %v1789
  %v1895 = vpop.f32.mrf.mxu0
  %v1896 = vadd.f32 0.0, %v1895
  %v1897 = vpop.f32.mrf.mxu0
  %v1898 = vadd.f32 0.0, %v1897
  %1899 = vmatmul.bf16.gmra.mxu0 %v1792
  %v1900 = vpop.f32.mrf.mxu0
  %v1901 = vadd.f32 0.0, %v1900
  %v1902 = vpop.f32.mrf.mxu0
  %v1903 = vadd.f32 0.0, %v1902
  %1904 = vmatmul.bf16.gmra.mxu0 %v1795
  %v1905 = vpop.f32.mrf.mxu0
  %v1906 = vadd.f32 0.0, %v1905
  %v1907 = vpop.f32.mrf.mxu0
  %v1908 = vadd.f32 0.0, %v1907
  %1909 = vmatmul.bf16.gmra.mxu0 %v1798
  %v1910 = vpop.f32.mrf.mxu0
  %v1911 = vadd.f32 0.0, %v1910
  %v1912 = vpop.f32.mrf.mxu0
  %v1913 = vadd.f32 0.0, %v1912
  %1914 = vmatmul.bf16.gmra.mxu0 %v1801
  %v1915 = vpop.f32.mrf.mxu0
  %v1916 = vadd.f32 0.0, %v1915
  %v1917 = vpop.f32.mrf.mxu0
  %v1918 = vadd.f32 0.0, %v1917
  %1919 = vmatmul.bf16.gmra.mxu0 %v1804
  %v1920 = vpop.f32.mrf.mxu0
  %v1921 = vadd.f32 0.0, %v1920
  %v1922 = vpop.f32.mrf.mxu0
  %v1923 = vadd.f32 0.0, %v1922
  %1924 = vmatmul.bf16.gmra.mxu0 %v1807
  %v1925 = vpop.f32.mrf.mxu0
  %v1926 = vadd.f32 0.0, %v1925
  %v1927 = vpop.f32.mrf.mxu0
  %v1928 = vadd.f32 0.0, %v1927
  %1929 = vmatmul.bf16.gmra.mxu0 %v1810
  %v1930 = vpop.f32.mrf.mxu0
  %v1931 = vadd.f32 0.0, %v1930
  %v1932 = vpop.f32.mrf.mxu0
  %v1933 = vadd.f32 0.0, %v1932
  %1934 = vmatmul.bf16.gmra.mxu0 %v1813
  %v1935 = vpop.f32.mrf.mxu0
  %v1936 = vadd.f32 0.0, %v1935
  %v1937 = vpop.f32.mrf.mxu0
  %v1938 = vadd.f32 0.0, %v1937
  %1939 = vmatmul.bf16.gmra.mxu0 %v1816
  %v1940 = vpop.f32.mrf.mxu0
  %v1941 = vadd.f32 0.0, %v1940
  %v1942 = vpop.f32.mrf.mxu0
  %v1943 = vadd.f32 0.0, %v1942
  %1944 = vmatmul.bf16.gmra.mxu0 %v1819
  %v1945 = vpop.f32.mrf.mxu0
  %v1946 = vadd.f32 0.0, %v1945
  %v1947 = vpop.f32.mrf.mxu0
  %v1948 = vadd.f32 0.0, %v1947
  %1949 = vmatmul.bf16.gmra.mxu0 %v1822
  %v1950 = vpop.f32.mrf.mxu0
  %v1951 = vadd.f32 0.0, %v1950
  %v1952 = vpop.f32.mrf.mxu0
  %v1953 = vadd.f32 0.0, %v1952
  %1954 = vmatmul.bf16.gmra.mxu0 %v1825
  %v1955 = vpop.f32.mrf.mxu0
  %v1956 = vadd.f32 0.0, %v1955
  %v1957 = vpop.f32.mrf.mxu0
  %v1958 = vadd.f32 0.0, %v1957
  %1959 = vmatmul.bf16.gmra.mxu0 %v1828
  %v1960 = vpop.f32.mrf.mxu0
  %v1961 = vadd.f32 0.0, %v1960
  %v1962 = vpop.f32.mrf.mxu0
  %v1963 = vadd.f32 0.0, %v1962
  %1964 = vmatmul.bf16.gmra.mxu0 %v1831
  %v1965 = vpop.f32.mrf.mxu0
  %v1966 = vadd.f32 0.0, %v1965
  %v1967 = vpop.f32.mrf.mxu0
  %v1968 = vadd.f32 0.0, %v1967
  %1969 = vmatmul.bf16.gmra.mxu0 %v1834
  %v1970 = vpop.f32.mrf.mxu0
  %v1971 = vadd.f32 0.0, %v1970
  %v1972 = vpop.f32.mrf.mxu0
  %v1973 = vadd.f32 0.0, %v1972
  %1974 = vmatmul.bf16.gmra.mxu0 %v1837
  %v1975 = vpop.f32.mrf.mxu0
  %v1976 = vadd.f32 0.0, %v1975
  %v1977 = vpop.f32.mrf.mxu0
  %v1978 = vadd.f32 0.0, %v1977
  %1979 = vmatmul.bf16.gmra.mxu0 %v1840
  %v1980 = vpop.f32.mrf.mxu0
  %v1981 = vadd.f32 0.0, %v1980
  %v1982 = vpop.f32.mrf.mxu0
  %v1983 = vadd.f32 0.0, %v1982
  %1984 = vmatmul.bf16.gmra.mxu0 %v1843
  %v1985 = vpop.f32.mrf.mxu0
  %v1986 = vadd.f32 0.0, %v1985
  %v1987 = vpop.f32.mrf.mxu0
  %v1988 = vadd.f32 0.0, %v1987
  %1989 = vmatmul.bf16.gmra.mxu0 %v1846
  %v1990 = vpop.f32.mrf.mxu0
  %v1991 = vadd.f32 0.0, %v1990
  %v1992 = vpop.f32.mrf.mxu0
  %v1993 = vadd.f32 0.0, %v1992
  %1994 = vmatmul.bf16.gmra.mxu0 %v1849
  %v1995 = vpop.f32.mrf.mxu0
  %v1996 = vadd.f32 0.0, %v1995
  %v1997 = vpop.f32.mrf.mxu0
  %v1998 = vadd.f32 0.0, %v1997
  %1999 = vmatmul.bf16.gmra.mxu0 %v1852
  %v2000 = vpop.f32.mrf.mxu0
  %v2001 = vadd.f32 0.0, %v2000
  %v2002 = vpop.f32.mrf.mxu0
  %v2003 = vadd.f32 0.0, %v2002
  %2004 = vmatmul.bf16.gmra.mxu0 %v1855
  %v2005 = vpop.f32.mrf.mxu0
  %v2006 = vadd.f32 0.0, %v2005
  %v2007 = vpop.f32.mrf.mxu0
  %v2008 = vadd.f32 0.0, %v2007
  %2009 = vmatmul.bf16.gmra.mxu0 %v1858
  %v2010 = vpop.f32.mrf.mxu0
  %v2011 = vadd.f32 0.0, %v2010
  %v2012 = vpop.f32.mrf.mxu0
  %v2013 = vadd.f32 0.0, %v2012
  %2014 = vmatmul.bf16.gmra.mxu0 %v1861
  %v2015 = vpop.f32.mrf.mxu0
  %v2016 = vadd.f32 0.0, %v2015
  %v2017 = vpop.f32.mrf.mxu0
  %v2018 = vadd.f32 0.0, %v2017
  %2019 = vmatmul.bf16.gmra.mxu0 %v1864
  %v2020 = vpop.f32.mrf.mxu0
  %v2021 = vadd.f32 0.0, %v2020
  %v2022 = vpop.f32.mrf.mxu0
  %v2023 = vadd.f32 0.0, %v2022
  %2024 = vmatmul.bf16.gmra.mxu0 %v1867
  %v2025 = vpop.f32.mrf.mxu0
  %v2026 = vadd.f32 0.0, %v2025
  %v2027 = vpop.f32.mrf.mxu0
  %v2028 = vadd.f32 0.0, %v2027
  %2029 = vmatmul.bf16.gmra.mxu0 %v1870
  %v2030 = vpop.f32.mrf.mxu0
  %v2031 = vadd.f32 0.0, %v2030
  %v2032 = vpop.f32.mrf.mxu0
  %v2033 = vadd.f32 0.0, %v2032
  %2034 = vmatmul.bf16.gmra.mxu0 %v1873
  %v2035 = vpop.f32.mrf.mxu0
  %v2036 = vadd.f32 0.0, %v2035
  %v2037 = vpop.f32.mrf.mxu0
  %v2038 = vadd.f32 0.0, %v2037
  %2039 = vmatmul.bf16.gmra.mxu0 %v1876
  %v2040 = vpop.f32.mrf.mxu0
  %v2041 = vadd.f32 0.0, %v2040
  %v2042 = vpop.f32.mrf.mxu0
  %v2043 = vadd.f32 0.0, %v2042
  %2044 = vmatmul.bf16.gmra.mxu0 %v1879
  %v2045 = vpop.f32.mrf.mxu0
  %v2046 = vadd.f32 0.0, %v2045
  %v2047 = vpop.f32.mrf.mxu0
  %v2048 = vadd.f32 0.0, %v2047
  %2049 = vdwg.mxu0
  %v2050 = vmax.f32 %v1401, %v1891
  %v2051 = vmax.f32 %v1403, %v1893
  %v2052 = vmax.f32 %v1406, %v1896
  %v2053 = vmax.f32 %v1408, %v1898
  %v2054 = vmax.f32 %v1411, %v1901
  %v2055 = vmax.f32 %v1413, %v1903
  %v2056 = vmax.f32 %v1416, %v1906
  %v2057 = vmax.f32 %v1418, %v1908
  %v2058 = vmax.f32 %v1421, %v1911
  %v2059 = vmax.f32 %v1423, %v1913
  %v2060 = vmax.f32 %v1426, %v1916
  %v2061 = vmax.f32 %v1428, %v1918
  %v2062 = vmax.f32 %v1431, %v1921
  %v2063 = vmax.f32 %v1433, %v1923
  %v2064 = vmax.f32 %v1436, %v1926
  %v2065 = vmax.f32 %v1438, %v1928
  %v2066 = vmax.f32 %v1441, %v1931
  %v2067 = vmax.f32 %v1443, %v1933
  %v2068 = vmax.f32 %v1446, %v1936
  %v2069 = vmax.f32 %v1448, %v1938
  %v2070 = vmax.f32 %v1451, %v1941
  %v2071 = vmax.f32 %v1453, %v1943
  %v2072 = vmax.f32 %v1456, %v1946
  %v2073 = vmax.f32 %v1458, %v1948
  %v2074 = vmax.f32 %v1461, %v1951
  %v2075 = vmax.f32 %v1463, %v1953
  %v2076 = vmax.f32 %v1466, %v1956
  %v2077 = vmax.f32 %v1468, %v1958
  %v2078 = vmax.f32 %v1471, %v1961
  %v2079 = vmax.f32 %v1473, %v1963
  %v2080 = vmax.f32 %v1476, %v1966
  %v2081 = vmax.f32 %v1478, %v1968
  %v2082 = vmax.f32 %v1481, %v1971
  %v2083 = vmax.f32 %v1483, %v1973
  %v2084 = vmax.f32 %v1486, %v1976
  %v2085 = vmax.f32 %v1488, %v1978
  %v2086 = vmax.f32 %v1491, %v1981
  %v2087 = vmax.f32 %v1493, %v1983
  %v2088 = vmax.f32 %v1496, %v1986
  %v2089 = vmax.f32 %v1498, %v1988
  %v2090 = vmax.f32 %v1501, %v1991
  %v2091 = vmax.f32 %v1503, %v1993
  %v2092 = vmax.f32 %v1506, %v1996
  %v2093 = vmax.f32 %v1508, %v1998
  %v2094 = vmax.f32 %v1511, %v2001
  %v2095 = vmax.f32 %v1513, %v2003
  %v2096 = vmax.f32 %v1516, %v2006
  %v2097 = vmax.f32 %v1518, %v2008
  %v2098 = vmax.f32 %v1521, %v2011
  %v2099 = vmax.f32 %v1523, %v2013
  %v2100 = vmax.f32 %v1526, %v2016
  %v2101 = vmax.f32 %v1528, %v2018
  %v2102 = vmax.f32 %v1531, %v2021
  %v2103 = vmax.f32 %v1533, %v2023
  %v2104 = vmax.f32 %v1536, %v2026
  %v2105 = vmax.f32 %v1538, %v2028
  %v2106 = vmax.f32 %v1541, %v2031
  %v2107 = vmax.f32 %v1543, %v2033
  %v2108 = vmax.f32 %v1546, %v2036
  %v2109 = vmax.f32 %v1548, %v2038
  %v2110 = vmax.f32 %v1551, %v2041
  %v2111 = vmax.f32 %v1553, %v2043
  %v2112 = vmax.f32 %v1556, %v2046
  %v2113 = vmax.f32 %v1558, %v2048
  %v2114 = vmax.f32 %v1006, %v2050
  %v2115 = vmax.f32 %v1007, %v2051
  %v2116 = vmax.f32 %v1008, %v2052
  %v2117 = vmax.f32 %v1009, %v2053
  %v2118 = vmax.f32 %v1010, %v2054
  %v2119 = vmax.f32 %v1011, %v2055
  %v2120 = vmax.f32 %v1012, %v2056
  %v2121 = vmax.f32 %v1013, %v2057
  %v2122 = vmax.f32 %v1014, %v2058
  %v2123 = vmax.f32 %v1015, %v2059
  %v2124 = vmax.f32 %v1016, %v2060
  %v2125 = vmax.f32 %v1017, %v2061
  %v2126 = vmax.f32 %v1018, %v2062
  %v2127 = vmax.f32 %v1019, %v2063
  %v2128 = vmax.f32 %v1020, %v2064
  %v2129 = vmax.f32 %v1021, %v2065
  %v2130 = vmax.f32 %v1022, %v2066
  %v2131 = vmax.f32 %v1023, %v2067
  %v2132 = vmax.f32 %v1024, %v2068
  %v2133 = vmax.f32 %v1025, %v2069
  %v2134 = vmax.f32 %v1026, %v2070
  %v2135 = vmax.f32 %v1027, %v2071
  %v2136 = vmax.f32 %v1028, %v2072
  %v2137 = vmax.f32 %v1029, %v2073
  %v2138 = vmax.f32 %v1030, %v2074
  %v2139 = vmax.f32 %v1031, %v2075
  %v2140 = vmax.f32 %v1032, %v2076
  %v2141 = vmax.f32 %v1033, %v2077
  %v2142 = vmax.f32 %v1034, %v2078
  %v2143 = vmax.f32 %v1035, %v2079
  %v2144 = vmax.f32 %v1036, %v2080
  %v2145 = vmax.f32 %v1037, %v2081
  %v2146 = vmax.f32 %v1038, %v2082
  %v2147 = vmax.f32 %v1039, %v2083
  %v2148 = vmax.f32 %v1040, %v2084
  %v2149 = vmax.f32 %v1041, %v2085
  %v2150 = vmax.f32 %v1042, %v2086
  %v2151 = vmax.f32 %v1043, %v2087
  %v2152 = vmax.f32 %v1044, %v2088
  %v2153 = vmax.f32 %v1045, %v2089
  %v2154 = vmax.f32 %v1046, %v2090
  %v2155 = vmax.f32 %v1047, %v2091
  %v2156 = vmax.f32 %v1048, %v2092
  %v2157 = vmax.f32 %v1049, %v2093
  %v2158 = vmax.f32 %v1050, %v2094
  %v2159 = vmax.f32 %v1051, %v2095
  %v2160 = vmax.f32 %v1052, %v2096
  %v2161 = vmax.f32 %v1053, %v2097
  %v2162 = vmax.f32 %v1054, %v2098
  %v2163 = vmax.f32 %v1055, %v2099
  %v2164 = vmax.f32 %v1056, %v2100
  %v2165 = vmax.f32 %v1057, %v2101
  %v2166 = vmax.f32 %v1058, %v2102
  %v2167 = vmax.f32 %v1059, %v2103
  %v2168 = vmax.f32 %v1060, %v2104
  %v2169 = vmax.f32 %v1061, %v2105
  %v2170 = vmax.f32 %v1062, %v2106
  %v2171 = vmax.f32 %v1063, %v2107
  %v2172 = vmax.f32 %v1064, %v2108
  %v2173 = vmax.f32 %v1065, %v2109
  %v2174 = vmax.f32 %v1066, %v2110
  %v2175 = vmax.f32 %v1067, %v2111
  %v2176 = vmax.f32 %v1068, %v2112
  %v2177 = vmax.f32 %v1069, %v2113
  %v2178 = vld [vmem:[%s2] sm:$0x1]
  %v2180 = vperm.slane %v2178, 0
  %v2182 = vadd.f32 %v2114, %v2180
  %v2183 = vadd.f32 %v2115, %v2180
  %v2184 = vadd.f32 %v2116, %v2180
  %v2185 = vadd.f32 %v2117, %v2180
  %v2186 = vadd.f32 %v2118, %v2180
  %v2187 = vadd.f32 %v2119, %v2180
  %v2188 = vadd.f32 %v2120, %v2180
  %v2189 = vadd.f32 %v2121, %v2180
  %v2190 = vadd.f32 %v2122, %v2180
  %v2191 = vadd.f32 %v2123, %v2180
  %v2192 = vadd.f32 %v2124, %v2180
  %v2193 = vadd.f32 %v2125, %v2180
  %v2194 = vadd.f32 %v2126, %v2180
  %v2195 = vadd.f32 %v2127, %v2180
  %v2196 = vadd.f32 %v2128, %v2180
  %v2197 = vadd.f32 %v2129, %v2180
  %v2198 = vadd.f32 %v2130, %v2180
  %v2199 = vadd.f32 %v2131, %v2180
  %v2200 = vadd.f32 %v2132, %v2180
  %v2201 = vadd.f32 %v2133, %v2180
  %v2202 = vadd.f32 %v2134, %v2180
  %v2203 = vadd.f32 %v2135, %v2180
  %v2204 = vadd.f32 %v2136, %v2180
  %v2205 = vadd.f32 %v2137, %v2180
  %v2206 = vadd.f32 %v2138, %v2180
  %v2207 = vadd.f32 %v2139, %v2180
  %v2208 = vadd.f32 %v2140, %v2180
  %v2209 = vadd.f32 %v2141, %v2180
  %v2210 = vadd.f32 %v2142, %v2180
  %v2211 = vadd.f32 %v2143, %v2180
  %v2212 = vadd.f32 %v2144, %v2180
  %v2213 = vadd.f32 %v2145, %v2180
  %v2214 = vadd.f32 %v2146, %v2180
  %v2215 = vadd.f32 %v2147, %v2180
  %v2216 = vadd.f32 %v2148, %v2180
  %v2217 = vadd.f32 %v2149, %v2180
  %v2218 = vadd.f32 %v2150, %v2180
  %v2219 = vadd.f32 %v2151, %v2180
  %v2220 = vadd.f32 %v2152, %v2180
  %v2221 = vadd.f32 %v2153, %v2180
  %v2222 = vadd.f32 %v2154, %v2180
  %v2223 = vadd.f32 %v2155, %v2180
  %v2224 = vadd.f32 %v2156, %v2180
  %v2225 = vadd.f32 %v2157, %v2180
  %v2226 = vadd.f32 %v2158, %v2180
  %v2227 = vadd.f32 %v2159, %v2180
  %v2228 = vadd.f32 %v2160, %v2180
  %v2229 = vadd.f32 %v2161, %v2180
  %v2230 = vadd.f32 %v2162, %v2180
  %v2231 = vadd.f32 %v2163, %v2180
  %v2232 = vadd.f32 %v2164, %v2180
  %v2233 = vadd.f32 %v2165, %v2180
  %v2234 = vadd.f32 %v2166, %v2180
  %v2235 = vadd.f32 %v2167, %v2180
  %v2236 = vadd.f32 %v2168, %v2180
  %v2237 = vadd.f32 %v2169, %v2180
  %v2238 = vadd.f32 %v2170, %v2180
  %v2239 = vadd.f32 %v2171, %v2180
  %v2240 = vadd.f32 %v2172, %v2180
  %v2241 = vadd.f32 %v2173, %v2180
  %v2242 = vadd.f32 %v2174, %v2180
  %v2243 = vadd.f32 %v2175, %v2180
  %v2244 = vadd.f32 %v2176, %v2180
  %v2245 = vadd.f32 %v2177, %v2180
  %v2246 = vmax.f32 %v2182, 0.0
  %v2247 = vmax.f32 %v2183, 0.0
  %v2248 = vmax.f32 %v2184, 0.0
  %v2249 = vmax.f32 %v2185, 0.0
  %v2250 = vmax.f32 %v2186, 0.0
  %v2251 = vmax.f32 %v2187, 0.0
  %v2252 = vmax.f32 %v2188, 0.0
  %v2253 = vmax.f32 %v2189, 0.0
  %v2254 = vmax.f32 %v2190, 0.0
  %v2255 = vmax.f32 %v2191, 0.0
  %v2256 = vmax.f32 %v2192, 0.0
  %v2257 = vmax.f32 %v2193, 0.0
  %v2258 = vmax.f32 %v2194, 0.0
  %v2259 = vmax.f32 %v2195, 0.0
  %v2260 = vmax.f32 %v2196, 0.0
  %v2261 = vmax.f32 %v2197, 0.0
  %v2262 = vmax.f32 %v2198, 0.0
  %v2263 = vmax.f32 %v2199, 0.0
  %v2264 = vmax.f32 %v2200, 0.0
  %v2265 = vmax.f32 %v2201, 0.0
  %v2266 = vmax.f32 %v2202, 0.0
  %v2267 = vmax.f32 %v2203, 0.0
  %v2268 = vmax.f32 %v2204, 0.0
  %v2269 = vmax.f32 %v2205, 0.0
  %v2270 = vmax.f32 %v2206, 0.0
  %v2271 = vmax.f32 %v2207, 0.0
  %v2272 = vmax.f32 %v2208, 0.0
  %v2273 = vmax.f32 %v2209, 0.0
  %v2274 = vmax.f32 %v2210, 0.0
  %v2275 = vmax.f32 %v2211, 0.0
  %v2276 = vmax.f32 %v2212, 0.0
  %v2277 = vmax.f32 %v2213, 0.0
  %v2278 = vmax.f32 %v2214, 0.0
  %v2279 = vmax.f32 %v2215, 0.0
  %v2280 = vmax.f32 %v2216, 0.0
  %v2281 = vmax.f32 %v2217, 0.0
  %v2282 = vmax.f32 %v2218, 0.0
  %v2283 = vmax.f32 %v2219, 0.0
  %v2284 = vmax.f32 %v2220, 0.0
  %v2285 = vmax.f32 %v2221, 0.0
  %v2286 = vmax.f32 %v2222, 0.0
  %v2287 = vmax.f32 %v2223, 0.0
  %v2288 = vmax.f32 %v2224, 0.0
  %v2289 = vmax.f32 %v2225, 0.0
  %v2290 = vmax.f32 %v2226, 0.0
  %v2291 = vmax.f32 %v2227, 0.0
  %v2292 = vmax.f32 %v2228, 0.0
  %v2293 = vmax.f32 %v2229, 0.0
  %v2294 = vmax.f32 %v2230, 0.0
  %v2295 = vmax.f32 %v2231, 0.0
  %v2296 = vmax.f32 %v2232, 0.0
  %v2297 = vmax.f32 %v2233, 0.0
  %v2298 = vmax.f32 %v2234, 0.0
  %v2299 = vmax.f32 %v2235, 0.0
  %v2300 = vmax.f32 %v2236, 0.0
  %v2301 = vmax.f32 %v2237, 0.0
  %v2302 = vmax.f32 %v2238, 0.0
  %v2303 = vmax.f32 %v2239, 0.0
  %v2304 = vmax.f32 %v2240, 0.0
  %v2305 = vmax.f32 %v2241, 0.0
  %v2306 = vmax.f32 %v2242, 0.0
  %v2307 = vmax.f32 %v2243, 0.0
  %v2308 = vmax.f32 %v2244, 0.0
  %v2309 = vmax.f32 %v2245, 0.0
  %v2310 = vpack.c.bf16 %v2246, %v2246
  %v2311 = vpack.c.bf16 %v2247, %v2247
  %v2312 = vpack.c.bf16 %v2248, %v2248
  %v2313 = vpack.c.bf16 %v2249, %v2249
  %v2314 = vpack.c.bf16 %v2250, %v2250
  %v2315 = vpack.c.bf16 %v2251, %v2251
  %v2316 = vpack.c.bf16 %v2252, %v2252
  %v2317 = vpack.c.bf16 %v2253, %v2253
  %v2318 = vpack.c.bf16 %v2254, %v2254
  %v2319 = vpack.c.bf16 %v2255, %v2255
  %v2320 = vpack.c.bf16 %v2256, %v2256
  %v2321 = vpack.c.bf16 %v2257, %v2257
  %v2322 = vpack.c.bf16 %v2258, %v2258
  %v2323 = vpack.c.bf16 %v2259, %v2259
  %v2324 = vpack.c.bf16 %v2260, %v2260
  %v2325 = vpack.c.bf16 %v2261, %v2261
  %v2326 = vpack.c.bf16 %v2262, %v2262
  %v2327 = vpack.c.bf16 %v2263, %v2263
  %v2328 = vpack.c.bf16 %v2264, %v2264
  %v2329 = vpack.c.bf16 %v2265, %v2265
  %v2330 = vpack.c.bf16 %v2266, %v2266
  %v2331 = vpack.c.bf16 %v2267, %v2267
  %v2332 = vpack.c.bf16 %v2268, %v2268
  %v2333 = vpack.c.bf16 %v2269, %v2269
  %v2334 = vpack.c.bf16 %v2270, %v2270
  %v2335 = vpack.c.bf16 %v2271, %v2271
  %v2336 = vpack.c.bf16 %v2272, %v2272
  %v2337 = vpack.c.bf16 %v2273, %v2273
  %v2338 = vpack.c.bf16 %v2274, %v2274
  %v2339 = vpack.c.bf16 %v2275, %v2275
  %v2340 = vpack.c.bf16 %v2276, %v2276
  %v2341 = vpack.c.bf16 %v2277, %v2277
  %v2342 = vpack.c.bf16 %v2278, %v2278
  %v2343 = vpack.c.bf16 %v2279, %v2279
  %v2344 = vpack.c.bf16 %v2280, %v2280
  %v2345 = vpack.c.bf16 %v2281, %v2281
  %v2346 = vpack.c.bf16 %v2282, %v2282
  %v2347 = vpack.c.bf16 %v2283, %v2283
  %v2348 = vpack.c.bf16 %v2284, %v2284
  %v2349 = vpack.c.bf16 %v2285, %v2285
  %v2350 = vpack.c.bf16 %v2286, %v2286
  %v2351 = vpack.c.bf16 %v2287, %v2287
  %v2352 = vpack.c.bf16 %v2288, %v2288
  %v2353 = vpack.c.bf16 %v2289, %v2289
  %v2354 = vpack.c.bf16 %v2290, %v2290
  %v2355 = vpack.c.bf16 %v2291, %v2291
  %v2356 = vpack.c.bf16 %v2292, %v2292
  %v2357 = vpack.c.bf16 %v2293, %v2293
  %v2358 = vpack.c.bf16 %v2294, %v2294
  %v2359 = vpack.c.bf16 %v2295, %v2295
  %v2360 = vpack.c.bf16 %v2296, %v2296
  %v2361 = vpack.c.bf16 %v2297, %v2297
  %v2362 = vpack.c.bf16 %v2298, %v2298
  %v2363 = vpack.c.bf16 %v2299, %v2299
  %v2364 = vpack.c.bf16 %v2300, %v2300
  %v2365 = vpack.c.bf16 %v2301, %v2301
  %v2366 = vpack.c.bf16 %v2302, %v2302
  %v2367 = vpack.c.bf16 %v2303, %v2303
  %v2368 = vpack.c.bf16 %v2304, %v2304
  %v2369 = vpack.c.bf16 %v2305, %v2305
  %v2370 = vpack.c.bf16 %v2306, %v2306
  %v2371 = vpack.c.bf16 %v2307, %v2307
  %v2372 = vpack.c.bf16 %v2308, %v2308
  %v2373 = vpack.c.bf16 %v2309, %v2309
  %vm2374 = vcmask 257024
  %2375 = vst.msk [vmem:[%s3] sm:$0xf] %vm2374, %v2310
  %2376 = vst.msk [vmem:[%s3 + $0x4] sm:$0xf] %vm2374, %v2311
  %2377 = vst.msk [vmem:[%s3 + $0x8] sm:$0xf] %vm2374, %v2312
  %2378 = vst.msk [vmem:[%s3 + $0xc] sm:$0xf] %vm2374, %v2313
  %2379 = vst.msk [vmem:[%s3 + $0x10] sm:$0xf] %vm2374, %v2314
  %2380 = vst.msk [vmem:[%s3 + $0x14] sm:$0xf] %vm2374, %v2315
  %2381 = vst.msk [vmem:[%s3 + $0x18] sm:$0xf] %vm2374, %v2316
  %2382 = vst.msk [vmem:[%s3 + $0x1c] sm:$0xf] %vm2374, %v2317
  %2383 = vst.msk [vmem:[%s3 + $0x20] sm:$0xf] %vm2374, %v2318
  %2384 = vst.msk [vmem:[%s3 + $0x24] sm:$0xf] %vm2374, %v2319
  %2385 = vst.msk [vmem:[%s3 + $0x28] sm:$0xf] %vm2374, %v2320
  %2386 = vst.msk [vmem:[%s3 + $0x2c] sm:$0xf] %vm2374, %v2321
  %2387 = vst.msk [vmem:[%s3 + $0x30] sm:$0xf] %vm2374, %v2322
  %2388 = vst.msk [vmem:[%s3 + $0x34] sm:$0xf] %vm2374, %v2323
  %2389 = vst.msk [vmem:[%s3 + $0x38] sm:$0xf] %vm2374, %v2324
  %2390 = vst.msk [vmem:[%s3 + $0x3c] sm:$0xf] %vm2374, %v2325
  %2391 = vst.msk [vmem:[%s3 + $0x40] sm:$0xf] %vm2374, %v2326
  %2392 = vst.msk [vmem:[%s3 + $0x44] sm:$0xf] %vm2374, %v2327
  %2393 = vst.msk [vmem:[%s3 + $0x48] sm:$0xf] %vm2374, %v2328
  %2394 = vst.msk [vmem:[%s3 + $0x4c] sm:$0xf] %vm2374, %v2329
  %2395 = vst.msk [vmem:[%s3 + $0x50] sm:$0xf] %vm2374, %v2330
  %2396 = vst.msk [vmem:[%s3 + $0x54] sm:$0xf] %vm2374, %v2331
  %2397 = vst.msk [vmem:[%s3 + $0x58] sm:$0xf] %vm2374, %v2332
  %2398 = vst.msk [vmem:[%s3 + $0x5c] sm:$0xf] %vm2374, %v2333
  %2399 = vst.msk [vmem:[%s3 + $0x60] sm:$0xf] %vm2374, %v2334
  %2400 = vst.msk [vmem:[%s3 + $0x64] sm:$0xf] %vm2374, %v2335
  %2401 = vst.msk [vmem:[%s3 + $0x68] sm:$0xf] %vm2374, %v2336
  %2402 = vst.msk [vmem:[%s3 + $0x6c] sm:$0xf] %vm2374, %v2337
  %2403 = vst.msk [vmem:[%s3 + $0x70] sm:$0xf] %vm2374, %v2338
  %2404 = vst.msk [vmem:[%s3 + $0x74] sm:$0xf] %vm2374, %v2339
  %2405 = vst.msk [vmem:[%s3 + $0x78] sm:$0xf] %vm2374, %v2340
  %2406 = vst.msk [vmem:[%s3 + $0x7c] sm:$0xf] %vm2374, %v2341
  %2407 = vst.msk [vmem:[%s3 + $0x80] sm:$0xf] %vm2374, %v2342
  %2408 = vst.msk [vmem:[%s3 + $0x84] sm:$0xf] %vm2374, %v2343
  %2409 = vst.msk [vmem:[%s3 + $0x88] sm:$0xf] %vm2374, %v2344
  %2410 = vst.msk [vmem:[%s3 + $0x8c] sm:$0xf] %vm2374, %v2345
  %2411 = vst.msk [vmem:[%s3 + $0x90] sm:$0xf] %vm2374, %v2346
  %2412 = vst.msk [vmem:[%s3 + $0x94] sm:$0xf] %vm2374, %v2347
  %2413 = vst.msk [vmem:[%s3 + $0x98] sm:$0xf] %vm2374, %v2348
  %2414 = vst.msk [vmem:[%s3 + $0x9c] sm:$0xf] %vm2374, %v2349
  %2415 = vst.msk [vmem:[%s3 + $0xa0] sm:$0xf] %vm2374, %v2350
  %2416 = vst.msk [vmem:[%s3 + $0xa4] sm:$0xf] %vm2374, %v2351
  %2417 = vst.msk [vmem:[%s3 + $0xa8] sm:$0xf] %vm2374, %v2352
  %2418 = vst.msk [vmem:[%s3 + $0xac] sm:$0xf] %vm2374, %v2353
  %2419 = vst.msk [vmem:[%s3 + $0xb0] sm:$0xf] %vm2374, %v2354
  %2420 = vst.msk [vmem:[%s3 + $0xb4] sm:$0xf] %vm2374, %v2355
  %2421 = vst.msk [vmem:[%s3 + $0xb8] sm:$0xf] %vm2374, %v2356
  %2422 = vst.msk [vmem:[%s3 + $0xbc] sm:$0xf] %vm2374, %v2357
  %2423 = vst.msk [vmem:[%s3 + $0xc0] sm:$0xf] %vm2374, %v2358
  %2424 = vst.msk [vmem:[%s3 + $0xc4] sm:$0xf] %vm2374, %v2359
  %2425 = vst.msk [vmem:[%s3 + $0xc8] sm:$0xf] %vm2374, %v2360
  %2426 = vst.msk [vmem:[%s3 + $0xcc] sm:$0xf] %vm2374, %v2361
  %2427 = vst.msk [vmem:[%s3 + $0xd0] sm:$0xf] %vm2374, %v2362
  %2428 = vst.msk [vmem:[%s3 + $0xd4] sm:$0xf] %vm2374, %v2363
  %2429 = vst.msk [vmem:[%s3 + $0xd8] sm:$0xf] %vm2374, %v2364
  %2430 = vst.msk [vmem:[%s3 + $0xdc] sm:$0xf] %vm2374, %v2365
  %2431 = vst.msk [vmem:[%s3 + $0xe0] sm:$0xf] %vm2374, %v2366
  %2432 = vst.msk [vmem:[%s3 + $0xe4] sm:$0xf] %vm2374, %v2367
  %2433 = vst.msk [vmem:[%s3 + $0xe8] sm:$0xf] %vm2374, %v2368
  %2434 = vst.msk [vmem:[%s3 + $0xec] sm:$0xf] %vm2374, %v2369
  %2435 = vst.msk [vmem:[%s3 + $0xf0] sm:$0xf] %vm2374, %v2370
  %2436 = vst.msk [vmem:[%s3 + $0xf4] sm:$0xf] %vm2374, %v2371
  %2437 = vst.msk [vmem:[%s3 + $0xf8] sm:$0xf] %vm2374, %v2372
  %2438 = vst.msk [vmem:[%s3 + $0xfc] sm:$0xf] %vm2374, %v2373
  // Predicated region
  $region14: #{rubber_toy_forward.3} parent=0 // pred_check
    _
  $region15: #{rubber_toy_forward.3} parent=0 // pred_check_branch
    %2440 = sbr.rel (0) target = $region17
  $region16: #{rubber_toy_forward.3} parent=0 // pred_region
    _
  $region17: #{rubber_toy_forward.3} parent=0 // pred_fallthru
    _
  // Predicated region
  $region18: #{rubber_toy_forward.3} parent=0 // pred_check
    _
  $region19: #{rubber_toy_forward.3} parent=0 // pred_check_branch
    %2442 = sbr.rel (0) target = $region21
  $region20: #{rubber_toy_forward.3} parent=0 // pred_region
    _
  $region21: #{rubber_toy_forward.3} parent=0 // pred_fallthru
    _

// kernel: rubber_toy_forward.4
$region0: #{rubber_toy_forward.4}
  #allocation0 [shape = 'u32[]', space=smem, size = 0x4, offset = 0x4, fixed_abs, tag = 'smem constant byte address 0x4 - core index']
  #allocation1 [shape = 'u32[72,128]{1,0:T(1,128)}', space=vmem, size = 0x9000, scoped, tag = 'internal scratch']
  %s0 = inlined_call_operand.vmem [shape: bf16[4,128,128], index: 0, kind: input, shape index: {}]
  %s1 = inlined_call_operand.vmem [shape: bf16[128,64], index: 1, kind: input, shape index: {}]
  %s2 = inlined_call_operand.vmem [shape: f32[1,64], index: 2, kind: input, shape index: {}]
  %s3 = inlined_call_operand.vmem [shape: bf16[128,64], index: 3, kind: output, shape index: {}]
  %s4 = sld [smem:[#allocation0]]
  $region22: #{rubber_toy_forward.4} parent=0
    _
  %s6 = ssub.s32 1, %s4
  %s7 = scalar_select 0, %s6, %s4
  // Predicated region
  $region2: #{rubber_toy_forward.4} parent=0 // pred_check
    _
  $region3: #{rubber_toy_forward.4} parent=0 // pred_check_branch
    %9 = sbr.rel (0) target = $region5
  $region4: #{rubber_toy_forward.4} parent=0 // pred_region
    _
  $region5: #{rubber_toy_forward.4} parent=0 // pred_fallthru
    _
  // Predicated region
  $region6: #{rubber_toy_forward.4} parent=0 // pred_check
    _
  $region7: #{rubber_toy_forward.4} parent=0 // pred_check_branch
    %11 = sbr.rel (0) target = $region9
  $region8: #{rubber_toy_forward.4} parent=0 // pred_region
    _
  $region9: #{rubber_toy_forward.4} parent=0 // pred_fallthru
    _
  // Predicated region
  $region10: #{rubber_toy_forward.4} parent=0 // pred_check
    _
  $region11: #{rubber_toy_forward.4} parent=0 // pred_check_branch
    %13 = sbr.rel (0) target = $region13
  $region12: #{rubber_toy_forward.4} parent=0 // pred_region
    _
  $region13: #{rubber_toy_forward.4} parent=0 // pred_fallthru
    _
  %v14 = vld [vmem:[%s1] sm:$0xf]
  %v15 = vld [vmem:[%s1 + $0x4] sm:$0xf]
  %v16 = vld [vmem:[%s1 + $0x8] sm:$0xf]
  %v17 = vld [vmem:[%s1 + $0xc] sm:$0xf]
  %v18 = vld [vmem:[%s1 + $0x10] sm:$0xf]
  %v19 = vld [vmem:[%s1 + $0x14] sm:$0xf]
  %v20 = vld [vmem:[%s1 + $0x18] sm:$0xf]
  %v21 = vld [vmem:[%s1 + $0x1c] sm:$0xf]
  %v22 = vld [vmem:[%s1 + $0x20] sm:$0xf]
  %v23 = vld [vmem:[%s1 + $0x24] sm:$0xf]
  %v24 = vld [vmem:[%s1 + $0x28] sm:$0xf]
  %v25 = vld [vmem:[%s1 + $0x2c] sm:$0xf]
  %v26 = vld [vmem:[%s1 + $0x30] sm:$0xf]
  %v27 = vld [vmem:[%s1 + $0x34] sm:$0xf]
  %v28 = vld [vmem:[%s1 + $0x38] sm:$0xf]
  %v29 = vld [vmem:[%s1 + $0x3c] sm:$0xf]
  %v30 = vld [vmem:[%s0] sm:$0xf]
  %v31 = vld [vmem:[%s0 + $0x4] sm:$0xf]
  %v32 = vld [vmem:[%s0 + $0x8] sm:$0xf]
  %v33 = vld [vmem:[%s0 + $0xc] sm:$0xf]
  %v34 = vld [vmem:[%s0 + $0x10] sm:$0xf]
  %v35 = vld [vmem:[%s0 + $0x14] sm:$0xf]
  %v36 = vld [vmem:[%s0 + $0x18] sm:$0xf]
  %v37 = vld [vmem:[%s0 + $0x1c] sm:$0xf]
  %v38 = vld [vmem:[%s0 + $0x20] sm:$0xf]
  %v39 = vld [vmem:[%s0 + $0x24] sm:$0xf]
  %v40 = vld [vmem:[%s0 + $0x28] sm:$0xf]
  %v41 = vld [vmem:[%s0 + $0x2c] sm:$0xf]
  %v42 = vld [vmem:[%s0 + $0x30] sm:$0xf]
  %v43 = vld [vmem:[%s0 + $0x34] sm:$0xf]
  %v44 = vld [vmem:[%s0 + $0x38] sm:$0xf]
  %v45 = vld [vmem:[%s0 + $0x3c] sm:$0xf]
  %v62 = vunpack.c.l.b16 %v30
  %v63 = vunpack.c.l.b16 %v31
  %v64 = vunpack.c.l.b16 %v32
  %v65 = vunpack.c.l.b16 %v33
  %v66 = vunpack.c.l.b16 %v34
  %v67 = vunpack.c.l.b16 %v35
  %v68 = vunpack.c.l.b16 %v36
  %v69 = vunpack.c.l.b16 %v37
  %v70 = vunpack.c.l.b16 %v38
  %v71 = vunpack.c.l.b16 %v39
  %v72 = vunpack.c.l.b16 %v40
  %v73 = vunpack.c.l.b16 %v41
  %v74 = vunpack.c.l.b16 %v42
  %v75 = vunpack.c.l.b16 %v43
  %v76 = vunpack.c.l.b16 %v44
  %v77 = vunpack.c.l.b16 %v45
  %v78 = vpack.c.b16 %v63, %v62
  %v79 = vpack.c.b16 %v65, %v64
  %v80 = vpack.c.b16 %v67, %v66
  %v81 = vpack.c.b16 %v69, %v68
  %v82 = vpack.c.b16 %v71, %v70
  %v83 = vpack.c.b16 %v73, %v72
  %v84 = vpack.c.b16 %v75, %v74
  %v85 = vpack.c.b16 %v77, %v76
  %v110 = vunpack.c.l.b16 %v14
  %v111 = vunpack.c.l.b16 %v15
  %v112 = vunpack.c.l.b16 %v16
  %v113 = vunpack.c.l.b16 %v17
  %v114 = vunpack.c.l.b16 %v18
  %v115 = vunpack.c.l.b16 %v19
  %v116 = vunpack.c.l.b16 %v20
  %v117 = vunpack.c.l.b16 %v21
  %v118 = vunpack.c.l.b16 %v22
  %v119 = vunpack.c.l.b16 %v23
  %v120 = vunpack.c.l.b16 %v24
  %v121 = vunpack.c.l.b16 %v25
  %v122 = vunpack.c.l.b16 %v26
  %v123 = vunpack.c.l.b16 %v27
  %v124 = vunpack.c.l.b16 %v28
  %v125 = vunpack.c.l.b16 %v29
  %v126 = vpack.c.b16 %v111, %v110
  %v127 = vpack.c.b16 %v113, %v112
  %v128 = vpack.c.b16 %v115, %v114
  %v129 = vpack.c.b16 %v117, %v116
  %v130 = vpack.c.b16 %v119, %v118
  %v131 = vpack.c.b16 %v121, %v120
  %v132 = vpack.c.b16 %v123, %v122
  %v133 = vpack.c.b16 %v125, %v124
  %142 = vmatpush.bf16.msra.mxu0 %v133
  %143 = vmatpush.bf16.msra.mxu0 %v132
  %144 = vmatpush.bf16.msra.mxu0 %v131
  %145 = vmatpush.bf16.msra.mxu0 %v130
  %146 = vmatpush.bf16.msra.mxu0 %v129
  %147 = vmatpush.bf16.msra.mxu0 %v128
  %148 = vmatpush.bf16.msra.mxu0 %v127
  %149 = vmatpush.bf16.msra.mxu0 %v126
  %150 = vmatmul.bf16.gmra.mxu0 %v78
  %v151 = vpop.f32.mrf.mxu0
  %v152 = vadd.f32 0.0, %v151
  %v153 = vpop.f32.mrf.mxu0
  %v154 = vadd.f32 0.0, %v153
  %155 = vmatmul.bf16.gmra.mxu0 %v79
  %v156 = vpop.f32.mrf.mxu0
  %v157 = vadd.f32 0.0, %v156
  %v158 = vpop.f32.mrf.mxu0
  %v159 = vadd.f32 0.0, %v158
  %160 = vmatmul.bf16.gmra.mxu0 %v80
  %v161 = vpop.f32.mrf.mxu0
  %v162 = vadd.f32 0.0, %v161
  %v163 = vpop.f32.mrf.mxu0
  %v164 = vadd.f32 0.0, %v163
  %165 = vmatmul.bf16.gmra.mxu0 %v81
  %v166 = vpop.f32.mrf.mxu0
  %v167 = vadd.f32 0.0, %v166
  %v168 = vpop.f32.mrf.mxu0
  %v169 = vadd.f32 0.0, %v168
  %170 = vmatmul.bf16.gmra.mxu0 %v82
  %v171 = vpop.f32.mrf.mxu0
  %v172 = vadd.f32 0.0, %v171
  %v173 = vpop.f32.mrf.mxu0
  %v174 = vadd.f32 0.0, %v173
  %175 = vmatmul.bf16.gmra.mxu0 %v83
  %v176 = vpop.f32.mrf.mxu0
  %v177 = vadd.f32 0.0, %v176
  %v178 = vpop.f32.mrf.mxu0
  %v179 = vadd.f32 0.0, %v178
  %180 = vmatmul.bf16.gmra.mxu0 %v84
  %v181 = vpop.f32.mrf.mxu0
  %v182 = vadd.f32 0.0, %v181
  %v183 = vpop.f32.mrf.mxu0
  %v184 = vadd.f32 0.0, %v183
  %185 = vmatmul.bf16.gmra.mxu0 %v85
  %v186 = vpop.f32.mrf.mxu0
  %v187 = vadd.f32 0.0, %v186
  %v188 = vpop.f32.mrf.mxu0
  %v189 = vadd.f32 0.0, %v188
  %190 = vdwg.mxu0
  %s191 = scalar_lea.vmem %s0, 64
  %v192 = vld [vmem:[%s191] sm:$0xf]
  %v193 = vld [vmem:[%s191 + $0x4] sm:$0xf]
  %v194 = vld [vmem:[%s191 + $0x8] sm:$0xf]
  %v195 = vld [vmem:[%s191 + $0xc] sm:$0xf]
  %v196 = vld [vmem:[%s191 + $0x10] sm:$0xf]
  %v197 = vld [vmem:[%s191 + $0x14] sm:$0xf]
  %v198 = vld [vmem:[%s191 + $0x18] sm:$0xf]
  %v199 = vld [vmem:[%s191 + $0x1c] sm:$0xf]
  %v200 = vld [vmem:[%s191 + $0x20] sm:$0xf]
  %v201 = vld [vmem:[%s191 + $0x24] sm:$0xf]
  %v202 = vld [vmem:[%s191 + $0x28] sm:$0xf]
  %v203 = vld [vmem:[%s191 + $0x2c] sm:$0xf]
  %v204 = vld [vmem:[%s191 + $0x30] sm:$0xf]
  %v205 = vld [vmem:[%s191 + $0x34] sm:$0xf]
  %v206 = vld [vmem:[%s191 + $0x38] sm:$0xf]
  %v207 = vld [vmem:[%s191 + $0x3c] sm:$0xf]
  %v224 = vunpack.c.l.b16 %v192
  %v225 = vunpack.c.l.b16 %v193
  %v226 = vunpack.c.l.b16 %v194
  %v227 = vunpack.c.l.b16 %v195
  %v228 = vunpack.c.l.b16 %v196
  %v229 = vunpack.c.l.b16 %v197
  %v230 = vunpack.c.l.b16 %v198
  %v231 = vunpack.c.l.b16 %v199
  %v232 = vunpack.c.l.b16 %v200
  %v233 = vunpack.c.l.b16 %v201
  %v234 = vunpack.c.l.b16 %v202
  %v235 = vunpack.c.l.b16 %v203
  %v236 = vunpack.c.l.b16 %v204
  %v237 = vunpack.c.l.b16 %v205
  %v238 = vunpack.c.l.b16 %v206
  %v239 = vunpack.c.l.b16 %v207
  %v240 = vpack.c.b16 %v225, %v224
  %v241 = vpack.c.b16 %v227, %v226
  %v242 = vpack.c.b16 %v229, %v228
  %v243 = vpack.c.b16 %v231, %v230
  %v244 = vpack.c.b16 %v233, %v232
  %v245 = vpack.c.b16 %v235, %v234
  %v246 = vpack.c.b16 %v237, %v236
  %v247 = vpack.c.b16 %v239, %v238
  %256 = vmatpush.bf16.msra.mxu0 %v133
  %257 = vmatpush.bf16.msra.mxu0 %v132
  %258 = vmatpush.bf16.msra.mxu0 %v131
  %259 = vmatpush.bf16.msra.mxu0 %v130
  %260 = vmatpush.bf16.msra.mxu0 %v129
  %261 = vmatpush.bf16.msra.mxu0 %v128
  %262 = vmatpush.bf16.msra.mxu0 %v127
  %263 = vmatpush.bf16.msra.mxu0 %v126
  %264 = vmatmul.bf16.gmra.mxu0 %v240
  %v265 = vpop.f32.mrf.mxu0
  %v266 = vadd.f32 0.0, %v265
  %v267 = vpop.f32.mrf.mxu0
  %v268 = vadd.f32 0.0, %v267
  %269 = vmatmul.bf16.gmra.mxu0 %v241
  %v270 = vpop.f32.mrf.mxu0
  %v271 = vadd.f32 0.0, %v270
  %v272 = vpop.f32.mrf.mxu0
  %v273 = vadd.f32 0.0, %v272
  %274 = vmatmul.bf16.gmra.mxu0 %v242
  %v275 = vpop.f32.mrf.mxu0
  %v276 = vadd.f32 0.0, %v275
  %v277 = vpop.f32.mrf.mxu0
  %v278 = vadd.f32 0.0, %v277
  %279 = vmatmul.bf16.gmra.mxu0 %v243
  %v280 = vpop.f32.mrf.mxu0
  %v281 = vadd.f32 0.0, %v280
  %v282 = vpop.f32.mrf.mxu0
  %v283 = vadd.f32 0.0, %v282
  %284 = vmatmul.bf16.gmra.mxu0 %v244
  %v285 = vpop.f32.mrf.mxu0
  %v286 = vadd.f32 0.0, %v285
  %v287 = vpop.f32.mrf.mxu0
  %v288 = vadd.f32 0.0, %v287
  %289 = vmatmul.bf16.gmra.mxu0 %v245
  %v290 = vpop.f32.mrf.mxu0
  %v291 = vadd.f32 0.0, %v290
  %v292 = vpop.f32.mrf.mxu0
  %v293 = vadd.f32 0.0, %v292
  %294 = vmatmul.bf16.gmra.mxu0 %v246
  %v295 = vpop.f32.mrf.mxu0
  %v296 = vadd.f32 0.0, %v295
  %v297 = vpop.f32.mrf.mxu0
  %v298 = vadd.f32 0.0, %v297
  %299 = vmatmul.bf16.gmra.mxu0 %v247
  %v300 = vpop.f32.mrf.mxu0
  %v301 = vadd.f32 0.0, %v300
  %v302 = vpop.f32.mrf.mxu0
  %v303 = vadd.f32 0.0, %v302
  %304 = vdwg.mxu0
  %v305 = vmax.f32 %v152, %v266
  %v306 = vmax.f32 %v154, %v268
  %v307 = vmax.f32 %v157, %v271
  %v308 = vmax.f32 %v159, %v273
  %v309 = vmax.f32 %v162, %v276
  %v310 = vmax.f32 %v164, %v278
  %v311 = vmax.f32 %v167, %v281
  %v312 = vmax.f32 %v169, %v283
  %v313 = vmax.f32 %v172, %v286
  %v314 = vmax.f32 %v174, %v288
  %v315 = vmax.f32 %v177, %v291
  %v316 = vmax.f32 %v179, %v293
  %v317 = vmax.f32 %v182, %v296
  %v318 = vmax.f32 %v184, %v298
  %v319 = vmax.f32 %v187, %v301
  %v320 = vmax.f32 %v189, %v303
  %s321 = scalar_lea.vmem %s0, 128
  %v322 = vld [vmem:[%s321] sm:$0xf]
  %v323 = vld [vmem:[%s321 + $0x4] sm:$0xf]
  %v324 = vld [vmem:[%s321 + $0x8] sm:$0xf]
  %v325 = vld [vmem:[%s321 + $0xc] sm:$0xf]
  %v326 = vld [vmem:[%s321 + $0x10] sm:$0xf]
  %v327 = vld [vmem:[%s321 + $0x14] sm:$0xf]
  %v328 = vld [vmem:[%s321 + $0x18] sm:$0xf]
  %v329 = vld [vmem:[%s321 + $0x1c] sm:$0xf]
  %v330 = vld [vmem:[%s321 + $0x20] sm:$0xf]
  %v331 = vld [vmem:[%s321 + $0x24] sm:$0xf]
  %v332 = vld [vmem:[%s321 + $0x28] sm:$0xf]
  %v333 = vld [vmem:[%s321 + $0x2c] sm:$0xf]
  %v334 = vld [vmem:[%s321 + $0x30] sm:$0xf]
  %v335 = vld [vmem:[%s321 + $0x34] sm:$0xf]
  %v336 = vld [vmem:[%s321 + $0x38] sm:$0xf]
  %v337 = vld [vmem:[%s321 + $0x3c] sm:$0xf]
  %v354 = vunpack.c.l.b16 %v322
  %v355 = vunpack.c.l.b16 %v323
  %v356 = vunpack.c.l.b16 %v324
  %v357 = vunpack.c.l.b16 %v325
  %v358 = vunpack.c.l.b16 %v326
  %v359 = vunpack.c.l.b16 %v327
  %v360 = vunpack.c.l.b16 %v328
  %v361 = vunpack.c.l.b16 %v329
  %v362 = vunpack.c.l.b16 %v330
  %v363 = vunpack.c.l.b16 %v331
  %v364 = vunpack.c.l.b16 %v332
  %v365 = vunpack.c.l.b16 %v333
  %v366 = vunpack.c.l.b16 %v334
  %v367 = vunpack.c.l.b16 %v335
  %v368 = vunpack.c.l.b16 %v336
  %v369 = vunpack.c.l.b16 %v337
  %v370 = vpack.c.b16 %v355, %v354
  %v371 = vpack.c.b16 %v357, %v356
  %v372 = vpack.c.b16 %v359, %v358
  %v373 = vpack.c.b16 %v361, %v360
  %v374 = vpack.c.b16 %v363, %v362
  %v375 = vpack.c.b16 %v365, %v364
  %v376 = vpack.c.b16 %v367, %v366
  %v377 = vpack.c.b16 %v369, %v368
  %386 = vmatpush.bf16.msra.mxu0 %v133
  %387 = vmatpush.bf16.msra.mxu0 %v132
  %388 = vmatpush.bf16.msra.mxu0 %v131
  %389 = vmatpush.bf16.msra.mxu0 %v130
  %390 = vmatpush.bf16.msra.mxu0 %v129
  %391 = vmatpush.bf16.msra.mxu0 %v128
  %392 = vmatpush.bf16.msra.mxu0 %v127
  %393 = vmatpush.bf16.msra.mxu0 %v126
  %394 = vmatmul.bf16.gmra.mxu0 %v370
  %v395 = vpop.f32.mrf.mxu0
  %v396 = vadd.f32 0.0, %v395
  %v397 = vpop.f32.mrf.mxu0
  %v398 = vadd.f32 0.0, %v397
  %399 = vmatmul.bf16.gmra.mxu0 %v371
  %v400 = vpop.f32.mrf.mxu0
  %v401 = vadd.f32 0.0, %v400
  %v402 = vpop.f32.mrf.mxu0
  %v403 = vadd.f32 0.0, %v402
  %404 = vmatmul.bf16.gmra.mxu0 %v372
  %v405 = vpop.f32.mrf.mxu0
  %v406 = vadd.f32 0.0, %v405
  %v407 = vpop.f32.mrf.mxu0
  %v408 = vadd.f32 0.0, %v407
  %409 = vmatmul.bf16.gmra.mxu0 %v373
  %v410 = vpop.f32.mrf.mxu0
  %v411 = vadd.f32 0.0, %v410
  %v412 = vpop.f32.mrf.mxu0
  %v413 = vadd.f32 0.0, %v412
  %414 = vmatmul.bf16.gmra.mxu0 %v374
  %v415 = vpop.f32.mrf.mxu0
  %v416 = vadd.f32 0.0, %v415
  %v417 = vpop.f32.mrf.mxu0
  %v418 = vadd.f32 0.0, %v417
  %419 = vmatmul.bf16.gmra.mxu0 %v375
  %v420 = vpop.f32.mrf.mxu0
  %v421 = vadd.f32 0.0, %v420
  %v422 = vpop.f32.mrf.mxu0
  %v423 = vadd.f32 0.0, %v422
  %424 = vmatmul.bf16.gmra.mxu0 %v376
  %v425 = vpop.f32.mrf.mxu0
  %v426 = vadd.f32 0.0, %v425
  %v427 = vpop.f32.mrf.mxu0
  %v428 = vadd.f32 0.0, %v427
  %429 = vmatmul.bf16.gmra.mxu0 %v377
  %v430 = vpop.f32.mrf.mxu0
  %v431 = vadd.f32 0.0, %v430
  %v432 = vpop.f32.mrf.mxu0
  %v433 = vadd.f32 0.0, %v432
  %434 = vdwg.mxu0
  %s435 = scalar_lea.vmem %s0, 192
  %v436 = vld [vmem:[%s435] sm:$0xf]
  %v437 = vld [vmem:[%s435 + $0x4] sm:$0xf]
  %v438 = vld [vmem:[%s435 + $0x8] sm:$0xf]
  %v439 = vld [vmem:[%s435 + $0xc] sm:$0xf]
  %v440 = vld [vmem:[%s435 + $0x10] sm:$0xf]
  %v441 = vld [vmem:[%s435 + $0x14] sm:$0xf]
  %v442 = vld [vmem:[%s435 + $0x18] sm:$0xf]
  %v443 = vld [vmem:[%s435 + $0x1c] sm:$0xf]
  %v444 = vld [vmem:[%s435 + $0x20] sm:$0xf]
  %v445 = vld [vmem:[%s435 + $0x24] sm:$0xf]
  %v446 = vld [vmem:[%s435 + $0x28] sm:$0xf]
  %v447 = vld [vmem:[%s435 + $0x2c] sm:$0xf]
  %v448 = vld [vmem:[%s435 + $0x30] sm:$0xf]
  %v449 = vld [vmem:[%s435 + $0x34] sm:$0xf]
  %v450 = vld [vmem:[%s435 + $0x38] sm:$0xf]
  %v451 = vld [vmem:[%s435 + $0x3c] sm:$0xf]
  %v468 = vunpack.c.l.b16 %v436
  %v469 = vunpack.c.l.b16 %v437
  %v470 = vunpack.c.l.b16 %v438
  %v471 = vunpack.c.l.b16 %v439
  %v472 = vunpack.c.l.b16 %v440
  %v473 = vunpack.c.l.b16 %v441
  %v474 = vunpack.c.l.b16 %v442
  %v475 = vunpack.c.l.b16 %v443
  %v476 = vunpack.c.l.b16 %v444
  %v477 = vunpack.c.l.b16 %v445
  %v478 = vunpack.c.l.b16 %v446
  %v479 = vunpack.c.l.b16 %v447
  %v480 = vunpack.c.l.b16 %v448
  %v481 = vunpack.c.l.b16 %v449
  %v482 = vunpack.c.l.b16 %v450
  %v483 = vunpack.c.l.b16 %v451
  %v484 = vpack.c.b16 %v469, %v468
  %v485 = vpack.c.b16 %v471, %v470
  %v486 = vpack.c.b16 %v473, %v472
  %v487 = vpack.c.b16 %v475, %v474
  %v488 = vpack.c.b16 %v477, %v476
  %v489 = vpack.c.b16 %v479, %v478
  %v490 = vpack.c.b16 %v481, %v480
  %v491 = vpack.c.b16 %v483, %v482
  %500 = vmatpush.bf16.msra.mxu0 %v133
  %501 = vmatpush.bf16.msra.mxu0 %v132
  %502 = vmatpush.bf16.msra.mxu0 %v131
  %503 = vmatpush.bf16.msra.mxu0 %v130
  %504 = vmatpush.bf16.msra.mxu0 %v129
  %505 = vmatpush.bf16.msra.mxu0 %v128
  %506 = vmatpush.bf16.msra.mxu0 %v127
  %507 = vmatpush.bf16.msra.mxu0 %v126
  %508 = vmatmul.bf16.gmra.mxu0 %v484
  %v509 = vpop.f32.mrf.mxu0
  %v510 = vadd.f32 0.0, %v509
  %v511 = vpop.f32.mrf.mxu0
  %v512 = vadd.f32 0.0, %v511
  %513 = vmatmul.bf16.gmra.mxu0 %v485
  %v514 = vpop.f32.mrf.mxu0
  %v515 = vadd.f32 0.0, %v514
  %v516 = vpop.f32.mrf.mxu0
  %v517 = vadd.f32 0.0, %v516
  %518 = vmatmul.bf16.gmra.mxu0 %v486
  %v519 = vpop.f32.mrf.mxu0
  %v520 = vadd.f32 0.0, %v519
  %v521 = vpop.f32.mrf.mxu0
  %v522 = vadd.f32 0.0, %v521
  %523 = vmatmul.bf16.gmra.mxu0 %v487
  %v524 = vpop.f32.mrf.mxu0
  %v525 = vadd.f32 0.0, %v524
  %v526 = vpop.f32.mrf.mxu0
  %v527 = vadd.f32 0.0, %v526
  %528 = vmatmul.bf16.gmra.mxu0 %v488
  %v529 = vpop.f32.mrf.mxu0
  %v530 = vadd.f32 0.0, %v529
  %v531 = vpop.f32.mrf.mxu0
  %v532 = vadd.f32 0.0, %v531
  %533 = vmatmul.bf16.gmra.mxu0 %v489
  %v534 = vpop.f32.mrf.mxu0
  %v535 = vadd.f32 0.0, %v534
  %v536 = vpop.f32.mrf.mxu0
  %v537 = vadd.f32 0.0, %v536
  %538 = vmatmul.bf16.gmra.mxu0 %v490
  %v539 = vpop.f32.mrf.mxu0
  %v540 = vadd.f32 0.0, %v539
  %v541 = vpop.f32.mrf.mxu0
  %v542 = vadd.f32 0.0, %v541
  %543 = vmatmul.bf16.gmra.mxu0 %v491
  %v544 = vpop.f32.mrf.mxu0
  %v545 = vadd.f32 0.0, %v544
  %v546 = vpop.f32.mrf.mxu0
  %v547 = vadd.f32 0.0, %v546
  %548 = vdwg.mxu0
  %v549 = vmax.f32 %v396, %v510
  %v550 = vmax.f32 %v398, %v512
  %v551 = vmax.f32 %v401, %v515
  %v552 = vmax.f32 %v403, %v517
  %v553 = vmax.f32 %v406, %v520
  %v554 = vmax.f32 %v408, %v522
  %v555 = vmax.f32 %v411, %v525
  %v556 = vmax.f32 %v413, %v527
  %v557 = vmax.f32 %v416, %v530
  %v558 = vmax.f32 %v418, %v532
  %v559 = vmax.f32 %v421, %v535
  %v560 = vmax.f32 %v423, %v537
  %v561 = vmax.f32 %v426, %v540
  %v562 = vmax.f32 %v428, %v542
  %v563 = vmax.f32 %v431, %v545
  %v564 = vmax.f32 %v433, %v547
  %v565 = vmax.f32 %v305, %v549
  %v566 = vmax.f32 %v306, %v550
  %v567 = vmax.f32 %v307, %v551
  %v568 = vmax.f32 %v308, %v552
  %v569 = vmax.f32 %v309, %v553
  %v570 = vmax.f32 %v310, %v554
  %v571 = vmax.f32 %v311, %v555
  %v572 = vmax.f32 %v312, %v556
  %v573 = vmax.f32 %v313, %v557
  %v574 = vmax.f32 %v314, %v558
  %v575 = vmax.f32 %v315, %v559
  %v576 = vmax.f32 %v316, %v560
  %v577 = vmax.f32 %v317, %v561
  %v578 = vmax.f32 %v318, %v562
  %v579 = vmax.f32 %v319, %v563
  %v580 = vmax.f32 %v320, %v564
  %v581 = vld [vmem:[%s2] sm:$0x1]
  %v583 = vperm.slane %v581, 0
  %v585 = vadd.f32 %v565, %v583
  %v586 = vadd.f32 %v566, %v583
  %v587 = vadd.f32 %v567, %v583
  %v588 = vadd.f32 %v568, %v583
  %v589 = vadd.f32 %v569, %v583
  %v590 = vadd.f32 %v570, %v583
  %v591 = vadd.f32 %v571, %v583
  %v592 = vadd.f32 %v572, %v583
  %v593 = vadd.f32 %v573, %v583
  %v594 = vadd.f32 %v574, %v583
  %v595 = vadd.f32 %v575, %v583
  %v596 = vadd.f32 %v576, %v583
  %v597 = vadd.f32 %v577, %v583
  %v598 = vadd.f32 %v578, %v583
  %v599 = vadd.f32 %v579, %v583
  %v600 = vadd.f32 %v580, %v583
  %v601 = vmax.f32 %v585, 0.0
  %v602 = vmax.f32 %v586, 0.0
  %v603 = vmax.f32 %v587, 0.0
  %v604 = vmax.f32 %v588, 0.0
  %v605 = vmax.f32 %v589, 0.0
  %v606 = vmax.f32 %v590, 0.0
  %v607 = vmax.f32 %v591, 0.0
  %v608 = vmax.f32 %v592, 0.0
  %v609 = vmax.f32 %v593, 0.0
  %v610 = vmax.f32 %v594, 0.0
  %v611 = vmax.f32 %v595, 0.0
  %v612 = vmax.f32 %v596, 0.0
  %v613 = vmax.f32 %v597, 0.0
  %v614 = vmax.f32 %v598, 0.0
  %v615 = vmax.f32 %v599, 0.0
  %v616 = vmax.f32 %v600, 0.0
  %v617 = vpack.c.bf16 %v601, %v601
  %v618 = vpack.c.bf16 %v602, %v602
  %v619 = vpack.c.bf16 %v603, %v603
  %v620 = vpack.c.bf16 %v604, %v604
  %v621 = vpack.c.bf16 %v605, %v605
  %v622 = vpack.c.bf16 %v606, %v606
  %v623 = vpack.c.bf16 %v607, %v607
  %v624 = vpack.c.bf16 %v608, %v608
  %v625 = vpack.c.bf16 %v609, %v609
  %v626 = vpack.c.bf16 %v610, %v610
  %v627 = vpack.c.bf16 %v611, %v611
  %v628 = vpack.c.bf16 %v612, %v612
  %v629 = vpack.c.bf16 %v613, %v613
  %v630 = vpack.c.bf16 %v614, %v614
  %v631 = vpack.c.bf16 %v615, %v615
  %v632 = vpack.c.bf16 %v616, %v616
  %vm633 = vcmask 519168
  %634 = vst.msk [vmem:[%s3] sm:$0xf] %vm633, %v617
  %635 = vst.msk [vmem:[%s3 + $0x4] sm:$0xf] %vm633, %v618
  %636 = vst.msk [vmem:[%s3 + $0x8] sm:$0xf] %vm633, %v619
  %637 = vst.msk [vmem:[%s3 + $0xc] sm:$0xf] %vm633, %v620
  %638 = vst.msk [vmem:[%s3 + $0x10] sm:$0xf] %vm633, %v621
  %639 = vst.msk [vmem:[%s3 + $0x14] sm:$0xf] %vm633, %v622
  %640 = vst.msk [vmem:[%s3 + $0x18] sm:$0xf] %vm633, %v623
  %641 = vst.msk [vmem:[%s3 + $0x1c] sm:$0xf] %vm633, %v624
  %642 = vst.msk [vmem:[%s3 + $0x20] sm:$0xf] %vm633, %v625
  %643 = vst.msk [vmem:[%s3 + $0x24] sm:$0xf] %vm633, %v626
  %644 = vst.msk [vmem:[%s3 + $0x28] sm:$0xf] %vm633, %v627
  %645 = vst.msk [vmem:[%s3 + $0x2c] sm:$0xf] %vm633, %v628
  %646 = vst.msk [vmem:[%s3 + $0x30] sm:$0xf] %vm633, %v629
  %647 = vst.msk [vmem:[%s3 + $0x34] sm:$0xf] %vm633, %v630
  %648 = vst.msk [vmem:[%s3 + $0x38] sm:$0xf] %vm633, %v631
  %649 = vst.msk [vmem:[%s3 + $0x3c] sm:$0xf] %vm633, %v632
  // Predicated region
  $region14: #{rubber_toy_forward.4} parent=0 // pred_check
    _
  $region15: #{rubber_toy_forward.4} parent=0 // pred_check_branch
    %651 = sbr.rel (0) target = $region17
  $region16: #{rubber_toy_forward.4} parent=0 // pred_region
    _
  $region17: #{rubber_toy_forward.4} parent=0 // pred_fallthru
    _
  // Predicated region
  $region18: #{rubber_toy_forward.4} parent=0 // pred_check
    _
  $region19: #{rubber_toy_forward.4} parent=0 // pred_check_branch
    %653 = sbr.rel (0) target = $region21
  $region20: #{rubber_toy_forward.4} parent=0 // pred_region
    _
  $region21: #{rubber_toy_forward.4} parent=0 // pred_fallthru
    _

// kernel: rubber_toy_forward.5
$region0: #{rubber_toy_forward.5}
  #allocation0 [shape = 'u32[]', space=smem, size = 0x4, offset = 0x4, fixed_abs, tag = 'smem constant byte address 0x4 - core index']
  #allocation1 [shape = 'u32[72,128]{1,0:T(1,128)}', space=vmem, size = 0x9000, scoped, tag = 'internal scratch']
  #allocation2 [shape = 'f32[16,300]{1,0:T(8,128)}', space=vmem, size = 0x6000, scoped, tag = 'scratch operand']
  %s0 = inlined_call_operand.vmem [shape: bf16[16,3584], index: 0, kind: input, shape index: {}]
  %s1 = inlined_call_operand.vmem [shape: bf16[3584,300], index: 1, kind: input, shape index: {}]
  %s2 = inlined_call_operand.vmem [shape: f32[1,300], index: 2, kind: input, shape index: {}]
  %s3 = inlined_call_operand.vmem [shape: bf16[300,100], index: 3, kind: input, shape index: {}]
  %s4 = inlined_call_operand.vmem [shape: f32[1,100], index: 4, kind: input, shape index: {}]
  %s5 = inlined_call_operand.vmem [shape: bf16[100,2], index: 5, kind: input, shape index: {}]
  %s6 = inlined_call_operand.vmem [shape: f32[1,2], index: 6, kind: input, shape index: {}]
  %s7 = inlined_call_operand.vmem [shape: f32[16,2], index: 7, kind: output, shape index: {}]
  %s8 = sld [smem:[#allocation0]]
  $region92: #{rubber_toy_forward.5} parent=0
    _
  %s10 = ssub.s32 1, %s8
  %s11 = scalar_select 0, %s10, %s8
  $region1: #{rubber_toy_forward.5} parent=0
    #allocation3 [shape = 'u8[32768]{0}', space=vmem, size = 0x8000, scoped, tag = 'input window, operand 0']
    loop: start=0, step=1, limit=9
    $region2: #{rubber_toy_forward.5} parent=1 // loop_pre_header
      _
    $region3: #{rubber_toy_forward.5} parent=1 // loop_header
      %s13 = sphi 0, %s17
      %p14 = scmp.ge.s32.totalorder %s13, 9
      %s20 = sphi 0, %s32
      %s21 = sphi 0, %s28
      %s22 = sphi 0, %s20
      %s23 = sphi 0, %s21
      %s24 = sphi 0, %s22
      %s25 = sphi 0, %s23
      %s37 = sphi 0, %s39
      %s40 = sphi 0, %s37
      %s41 = sphi 0, %s40
      %s57 = sphi 0, %s41
      %s63 = sphi 0, %s65
      %s66 = sphi 0, %s63
      %s67 = sphi 0, %s66
      %s83 = sphi 0, %s67
      %s87 = sphi 0, %s87
      %s89 = sphi 0, %s87
      %s90 = sphi 0, %s89
      %s104 = sphi 0, %s90
      %s108 = sphi 0, %s108
      %s110 = sphi 0, %s108
      %s111 = sphi 0, %s110
      %s125 = sphi 0, %s111
      %s129 = sphi 0, %s129
      %s131 = sphi 0, %s129
      %s132 = sphi 0, %s131
      %s146 = sphi 0, %s132
      %s150 = sphi 0, %s150
      %s152 = sphi 0, %s150
      %s153 = sphi 0, %s152
      %s167 = sphi 0, %s153
      %s171 = sphi 0, %s171
      %s173 = sphi 0, %s171
      %s174 = sphi 0, %s173
      %s188 = sphi 0, %s174
      %s194 = sphi 0, %s196
      %s197 = sphi 0, %s194
      %s198 = sphi 0, %s197
      %s214 = sphi 0, %s198
    $region4: #{rubber_toy_forward.5} parent=1 // loop_header_branch
      %16 = sbr.rel (%p14) target = $region8
    $region5: #{rubber_toy_forward.5} parent=1 // loop_body
      %s18 = ssub.s32 %s13, 1
      %s19 = ssub.s32 %s13, 2
      %s26 = sadd.s32 1, %s21
      %p27 = scmp.ge.s32.totalorder %s26, 7
      %s28 = scalar_select %p27, 0, %s26
      %s29 = sadd.s32 1, %s20
      %s30 = scalar_select %p27, %s29, %s20
      %p31 = scmp.ge.s32.totalorder %s30, 1
      %s32 = scalar_select %p31, 0, %s30
      %s33 = ssub.s32 %s20, %s32
      %s34 = ssub.s32 %s21, %s28
      %s35 = sor.u32 %s33, %s34
      %p36 = scmp.eq.s32.totalorder %s35, 0
      %s38 = sadd.s32 %s37, 1
      %s39 = scalar_select %p36, %s37, %s38
      %p42 = pneg %p36
      %p43 = scmp.eq.s32.totalorder %s13, 6
      %p44 = por %p42, %p43
      %p45 = scmp.ne.s32.totalorder %s37, %s40
      %p46 = scmp.eq.s32.totalorder %s13, 0
      %p47 = por %p45, %p46
      %p48 = scmp.ne.s32.totalorder %s37, %s40
      %p49 = scmp.eq.s32.totalorder %s18, 6
      %p50 = por %p48, %p49
      %p51 = scmp.ne.s32.totalorder %s40, %s41
      %p52 = scmp.eq.s32.totalorder %s18, 0
      %p53 = por %p51, %p52
      %p54 = scmp.ne.s32.totalorder %s40, %s41
      %p55 = scmp.eq.s32.totalorder %s19, 6
      %p56 = por %p54, %p55
      %p58 = scmp.ne.s32.totalorder %s41, %s57
      %p59 = scmp.eq.s32.totalorder %s19, 0
      %p60 = por %p58, %p59
      %s61 = ssub.s32 %s21, %s28
      %p62 = scmp.eq.s32.totalorder %s61, 0
      %s64 = sadd.s32 %s63, 1
      %s65 = scalar_select %p62, %s63, %s64
      %p68 = pneg %p62
      %p69 = scmp.eq.s32.totalorder %s13, 6
      %p70 = por %p68, %p69
      %p71 = scmp.ne.s32.totalorder %s63, %s66
      %p72 = scmp.eq.s32.totalorder %s13, 0
      %p73 = por %p71, %p72
      %p74 = scmp.ne.s32.totalorder %s63, %s66
      %p75 = scmp.eq.s32.totalorder %s18, 6
      %p76 = por %p74, %p75
      %p77 = scmp.ne.s32.totalorder %s66, %s67
      %p78 = scmp.eq.s32.totalorder %s18, 0
      %p79 = por %p77, %p78
      %p80 = scmp.ne.s32.totalorder %s66, %s67
      %p81 = scmp.eq.s32.totalorder %s19, 6
      %p82 = por %p80, %p81
      %p84 = scmp.ne.s32.totalorder %s67, %s83
      %p85 = scmp.eq.s32.totalorder %s19, 0
      %p86 = por %p84, %p85
      %s88 = sadd.s32 %s87, 1
      %p91 = scmp.eq.s32.totalorder %s13, 6
      %p92 = scmp.ne.s32.totalorder %s87, %s89
      %p93 = scmp.eq.s32.totalorder %s13, 0
      %p94 = por %p92, %p93
      %p95 = scmp.ne.s32.totalorder %s87, %s89
      %p96 = scmp.eq.s32.totalorder %s18, 6
      %p97 = por %p95, %p96
      %p98 = scmp.ne.s32.totalorder %s89, %s90
      %p99 = scmp.eq.s32.totalorder %s18, 0
      %p100 = por %p98, %p99
      %p101 = scmp.ne.s32.totalorder %s89, %s90
      %p102 = scmp.eq.s32.totalorder %s19, 6
      %p103 = por %p101, %p102
      %p105 = scmp.ne.s32.totalorder %s90, %s104
      %p106 = scmp.eq.s32.totalorder %s19, 0
      %p107 = por %p105, %p106
      %s109 = sadd.s32 %s108, 1
      %p112 = scmp.eq.s32.totalorder %s13, 6
      %p113 = scmp.ne.s32.totalorder %s108, %s110
      %p114 = scmp.eq.s32.totalorder %s13, 0
      %p115 = por %p113, %p114
      %p116 = scmp.ne.s32.totalorder %s108, %s110
      %p117 = scmp.eq.s32.totalorder %s18, 6
      %p118 = por %p116, %p117
      %p119 = scmp.ne.s32.totalorder %s110, %s111
      %p120 = scmp.eq.s32.totalorder %s18, 0
      %p121 = por %p119, %p120
      %p122 = scmp.ne.s32.totalorder %s110, %s111
      %p123 = scmp.eq.s32.totalorder %s19, 6
      %p124 = por %p122, %p123
      %p126 = scmp.ne.s32.totalorder %s111, %s125
      %p127 = scmp.eq.s32.totalorder %s19, 0
      %p128 = por %p126, %p127
      %s130 = sadd.s32 %s129, 1
      %p133 = scmp.eq.s32.totalorder %s13, 6
      %p134 = scmp.ne.s32.totalorder %s129, %s131
      %p135 = scmp.eq.s32.totalorder %s13, 0
      %p136 = por %p134, %p135
      %p137 = scmp.ne.s32.totalorder %s129, %s131
      %p138 = scmp.eq.s32.totalorder %s18, 6
      %p139 = por %p137, %p138
      %p140 = scmp.ne.s32.totalorder %s131, %s132
      %p141 = scmp.eq.s32.totalorder %s18, 0
      %p142 = por %p140, %p141
      %p143 = scmp.ne.s32.totalorder %s131, %s132
      %p144 = scmp.eq.s32.totalorder %s19, 6
      %p145 = por %p143, %p144
      %p147 = scmp.ne.s32.totalorder %s132, %s146
      %p148 = scmp.eq.s32.totalorder %s19, 0
      %p149 = por %p147, %p148
      %s151 = sadd.s32 %s150, 1
      %p154 = scmp.eq.s32.totalorder %s13, 6
      %p155 = scmp.ne.s32.totalorder %s150, %s152
      %p156 = scmp.eq.s32.totalorder %s13, 0
      %p157 = por %p155, %p156
      %p158 = scmp.ne.s32.totalorder %s150, %s152
      %p159 = scmp.eq.s32.totalorder %s18, 6
      %p160 = por %p158, %p159
      %p161 = scmp.ne.s32.totalorder %s152, %s153
      %p162 = scmp.eq.s32.totalorder %s18, 0
      %p163 = por %p161, %p162
      %p164 = scmp.ne.s32.totalorder %s152, %s153
      %p165 = scmp.eq.s32.totalorder %s19, 6
      %p166 = por %p164, %p165
      %p168 = scmp.ne.s32.totalorder %s153, %s167
      %p169 = scmp.eq.s32.totalorder %s19, 0
      %p170 = por %p168, %p169
      %s172 = sadd.s32 %s171, 1
      %p175 = scmp.eq.s32.totalorder %s13, 6
      %p176 = scmp.ne.s32.totalorder %s171, %s173
      %p177 = scmp.eq.s32.totalorder %s13, 0
      %p178 = por %p176, %p177
      %p179 = scmp.ne.s32.totalorder %s171, %s173
      %p180 = scmp.eq.s32.totalorder %s18, 6
      %p181 = por %p179, %p180
      %p182 = scmp.ne.s32.totalorder %s173, %s174
      %p183 = scmp.eq.s32.totalorder %s18, 0
      %p184 = por %p182, %p183
      %p185 = scmp.ne.s32.totalorder %s173, %s174
      %p186 = scmp.eq.s32.totalorder %s19, 6
      %p187 = por %p185, %p186
      %p189 = scmp.ne.s32.totalorder %s174, %s188
      %p190 = scmp.eq.s32.totalorder %s19, 0
      %p191 = por %p189, %p190
      %s192 = ssub.s32 %s20, %s32
      %p193 = scmp.eq.s32.totalorder %s192, 0
      %s195 = sadd.s32 %s194, 1
      %s196 = scalar_select %p193, %s194, %s195
      %p199 = pneg %p193
      %p200 = scmp.eq.s32.totalorder %s13, 6
      %p201 = por %p199, %p200
      %p202 = scmp.ne.s32.totalorder %s194, %s197
      %p203 = scmp.eq.s32.totalorder %s13, 0
      %p204 = por %p202, %p203
      %p205 = scmp.ne.s32.totalorder %s194, %s197
      %p206 = scmp.eq.s32.totalorder %s18, 6
      %p207 = por %p205, %p206
      %p208 = scmp.ne.s32.totalorder %s197, %s198
      %p209 = scmp.eq.s32.totalorder %s18, 0
      %p210 = por %p208, %p209
      %p211 = scmp.ne.s32.totalorder %s197, %s198
      %p212 = scmp.eq.s32.totalorder %s19, 6
      %p213 = por %p211, %p212
      %p215 = scmp.ne.s32.totalorder %s198, %s214
      %p216 = scmp.eq.s32.totalorder %s19, 0
      %p217 = por %p215, %p216
      %p218 = scmp.le.s32.totalorder 1, %s13
      %p219 = scmp.lt.s32.totalorder %s13, 8
      %p220 = pnand %p218, %p219
      %p221 = pneg %p220
      // Predicated region
      $region9: #{rubber_toy_forward.5} parent=5 // pred_check
        _
      $region10: #{rubber_toy_forward.5} parent=5 // pred_check_branch
        %223 = sbr.rel (%p220) target = $region12
      $region11: #{rubber_toy_forward.5} parent=5 // pred_region
        %s224 = ssub.s32 %s13, 1
        // Predicated region
        $region13: #{rubber_toy_forward.5} parent=11 // pred_check
          %p225 = pneg %p100
        $region14: #{rubber_toy_forward.5} parent=11 // pred_check_branch
          %227 = sbr.rel (%p225) target = $region16
        $region15: #{rubber_toy_forward.5} parent=11 // pred_region
          _
        $region16: #{rubber_toy_forward.5} parent=11 // pred_fallthru
          _
        // Predicated region
        $region17: #{rubber_toy_forward.5} parent=11 // pred_check
          %p228 = pneg %p121
        $region18: #{rubber_toy_forward.5} parent=11 // pred_check_branch
          %230 = sbr.rel (%p228) target = $region20
        $region19: #{rubber_toy_forward.5} parent=11 // pred_region
          _
        $region20: #{rubber_toy_forward.5} parent=11 // pred_fallthru
          _
        // Predicated region
        $region21: #{rubber_toy_forward.5} parent=11 // pred_check
          %p231 = pneg %p142
        $region22: #{rubber_toy_forward.5} parent=11 // pred_check_branch
          %233 = sbr.rel (%p231) target = $region24
        $region23: #{rubber_toy_forward.5} parent=11 // pred_region
          _
        $region24: #{rubber_toy_forward.5} parent=11 // pred_fallthru
          _
        // Predicated region
        $region25: #{rubber_toy_forward.5} parent=11 // pred_check
          %p234 = pneg %p163
        $region26: #{rubber_toy_forward.5} parent=11 // pred_check_branch
          %236 = sbr.rel (%p234) target = $region28
        $region27: #{rubber_toy_forward.5} parent=11 // pred_region
          _
        $region28: #{rubber_toy_forward.5} parent=11 // pred_fallthru
          _
        // Predicated region
        $region29: #{rubber_toy_forward.5} parent=11 // pred_check
          %p237 = pneg %p184
        $region30: #{rubber_toy_forward.5} parent=11 // pred_check_branch
          %239 = sbr.rel (%p237) target = $region32
        $region31: #{rubber_toy_forward.5} parent=11 // pred_region
          _
        $region32: #{rubber_toy_forward.5} parent=11 // pred_fallthru
          _
      $region12: #{rubber_toy_forward.5} parent=5 // pred_fallthru
        _
      %p240 = scmp.lt.s32.totalorder %s13, 7
      // Predicated region
      $region33: #{rubber_toy_forward.5} parent=5 // pred_check
        %p241 = pneg %p240
      $region34: #{rubber_toy_forward.5} parent=5 // pred_check_branch
        %243 = sbr.rel (%p241) target = $region36
      $region35: #{rubber_toy_forward.5} parent=5 // pred_region
        // Predicated region
        $region37: #{rubber_toy_forward.5} parent=35 // pred_check
          %p244 = pneg %p47
        $region38: #{rubber_toy_forward.5} parent=35 // pred_check_branch
          %246 = sbr.rel (%p244) target = $region40
        $region39: #{rubber_toy_forward.5} parent=35 // pred_region
          %s247 = sand.u32 %s37, 1
          %s248 = sand.u32 %s37, 1
          %s249 = smul.addr %s248, 32
          %s250 = scalar_lea.vmem [#allocation3], %s249
          %s251 = smul.u32 2, %s20
          %s252 = smul.u32 4, %s21
          %s253 = smul.addr %s251, 28
          %s254 = sadd.s32 %s252, %s253
          %s255 = smul.addr %s254, 4
          %s256 = scalar_lea.vmem %s0, %s255
          // Predicated region
          $region41: #{rubber_toy_forward.5} parent=39 // pred_check
            _
          $region42: #{rubber_toy_forward.5} parent=39 // pred_check_branch
            %258 = sbr.rel (0) target = $region44
          $region43: #{rubber_toy_forward.5} parent=39 // pred_region
            // Predicated region
            $region45: #{rubber_toy_forward.5} parent=43 // pred_check
              _
            $region46: #{rubber_toy_forward.5} parent=43 // pred_check_branch
              %260 = sbr.rel (0) target = $region48
            $region47: #{rubber_toy_forward.5} parent=43 // pred_region
              loop: start=0, step=1, limit=1
              $region49: #{rubber_toy_forward.5} parent=47 // loop_pre_header
                _
              $region50: #{rubber_toy_forward.5} parent=47 // loop_header
                %s262 = sphi 0, %s266
                %p263 = scmp.ge.s32.totalorder %s262, 1
                %s267 = sphi %s256, %s256
                %s268 = sphi %s250, %s250
              $region51: #{rubber_toy_forward.5} parent=47 // loop_header_branch
                %265 = sbr.rel (%p263) target = $region55
              $region52: #{rubber_toy_forward.5} parent=47 // loop_body
                %v269 = vld [vmem:[%s267] sm:$0xff]
                %270 = vst [vmem:[%s268] sm:$0xff] %v269
                %v271 = vld [vmem:[%s267 + $0x8] sm:$0xff]
                %272 = vst [vmem:[%s268 + $0x8] sm:$0xff] %v271
                %v273 = vld [vmem:[%s267 + $0x70] sm:$0xff]
                %274 = vst [vmem:[%s268 + $0x10] sm:$0xff] %v273
                %v275 = vld [vmem:[%s267 + $0x78] sm:$0xff]
                %276 = vst [vmem:[%s268 + $0x18] sm:$0xff] %v275
              $region53: #{rubber_toy_forward.5} parent=47 // loop_footer
                %s266 = sadd.s32 1, %s262
              $region54: #{rubber_toy_forward.5} parent=47 // loop_footer_branch
                %261 = sbr.rel target = $region50
              $region55: #{rubber_toy_forward.5} parent=47 // loop_exit
                _
            $region48: #{rubber_toy_forward.5} parent=43 // pred_fallthru
              _
            // Predicated region
            $region56: #{rubber_toy_forward.5} parent=43 // pred_check
              _
            $region57: #{rubber_toy_forward.5} parent=43 // pred_check_branch
              %278 = sbr.rel target = $region59
            $region58: #{rubber_toy_forward.5} parent=43 // pred_region
              _
            $region59: #{rubber_toy_forward.5} parent=43 // pred_fallthru
              _
          $region44: #{rubber_toy_forward.5} parent=39 // pred_fallthru
            _
          %279 = vnop
        $region40: #{rubber_toy_forward.5} parent=35 // pred_fallthru
          _
        // Predicated region
        $region60: #{rubber_toy_forward.5} parent=35 // pred_check
          %p280 = pneg %p73
        $region61: #{rubber_toy_forward.5} parent=35 // pred_check_branch
          %282 = sbr.rel (%p280) target = $region63
        $region62: #{rubber_toy_forward.5} parent=35 // pred_region
          %s283 = smul.u32 64, %s21
          %p284 = scmp.lt.s32.totalorder %s283, 447
          %s285 = scalar_select %p284, %s283, 447
          %s286 = smul.addr %s285, 3
          %s287 = smul.addr %s286, 4
          %s288 = scalar_lea.vmem %s1, %s287
          %s289 = smul.u32 64, %s21
        $region63: #{rubber_toy_forward.5} parent=35 // pred_fallthru
          _
      $region36: #{rubber_toy_forward.5} parent=5 // pred_fallthru
        _
      %p290 = scmp.le.s32.totalorder 1, %s13
      %p291 = scmp.lt.s32.totalorder %s13, 8
      %p292 = pnand %p290, %p291
      %p293 = pneg %p292
      // Predicated region
      $region64: #{rubber_toy_forward.5} parent=5 // pred_check
        _
      $region65: #{rubber_toy_forward.5} parent=5 // pred_check_branch
        %295 = sbr.rel (%p292) target = $region67
      $region66: #{rubber_toy_forward.5} parent=5 // pred_region
        %s296 = ssub.s32 %s13, 1
        %s297 = sand.u32 %s40, 1
        %s298 = sand.u32 %s40, 1
        %s299 = smul.addr %s298, 32
        %s300 = scalar_lea.vmem [#allocation3], %s299
        // Predicated region
        $region68: #{rubber_toy_forward.5} parent=66 // pred_check
          %p301 = pneg %p53
        $region69: #{rubber_toy_forward.5} parent=66 // pred_check_branch
          %303 = sbr.rel (%p301) target = $region71
        $region70: #{rubber_toy_forward.5} parent=66 // pred_region
          _
        $region71: #{rubber_toy_forward.5} parent=66 // pred_fallthru
          _
        %s304 = sand.u32 %s40, 1
        %s305 = sand.u32 %s40, 1
        %s306 = smul.addr %s305, 32
        %s307 = scalar_lea.vmem [#allocation3], %s306
        %p308 = pneg %p53
        %p309 = pneg %p50
        %s310 = smul.u32 64, %s23
        %p311 = scmp.lt.s32.totalorder %s310, 447
        %s312 = scalar_select %p311, %s310, 447
        %s313 = smul.addr %s312, 3
        %s314 = smul.addr %s313, 4
        %s315 = scalar_lea.vmem %s1, %s314
        %p316 = pneg %p79
        %p317 = pneg %p76
        %p318 = pneg %p100
        %p319 = pneg %p97
        %p320 = pneg %p121
        %p321 = pneg %p118
        %p322 = pneg %p142
        %p323 = pneg %p139
        %p324 = pneg %p163
        %p325 = pneg %p160
        %p326 = pneg %p184
        %p327 = pneg %p181
        %p328 = pneg %p210
        %p329 = pneg %p207
        %s330 = smul.u32 2, %s22
        %p331 = scmp.lt.s32.totalorder %s330, 1
        %s332 = scalar_select %p331, %s330, 1
        %s333 = smul.addr %s332, 8
        %s334 = scalar_lea.vmem %s7, %s333
        %s335 = smul.u32 2, %s22
        %s336 = smul.u32 4, %s23
        %s337 = smul.u32 64, %s23
        %p338 = scmp.lt.s32.totalorder %s337, 447
        %s339 = scalar_select %p338, %s337, 447
        %s340 = smul.addr %s339, 3
        %s341 = smul.addr %s340, 4
        %s342 = scalar_lea.vmem %s1, %s341
        %s343 = smul.u32 64, %s23
        %s344 = smul.u32 2, %s22
        %p345 = scmp.lt.s32.totalorder %s344, 1
        %s346 = scalar_select %p345, %s344, 1
        %s347 = smul.addr %s346, 8
        %s348 = scalar_lea.vmem %s7, %s347
        %s349 = smul.u32 2, %s22
        %p351 = scmp.eq.s32.totalorder %s23, 0
        // Predicated region
        $region72: #{rubber_toy_forward.5} parent=66 // pred_check
          %p352 = pneg %p351
        $region73: #{rubber_toy_forward.5} parent=66 // pred_check_branch
          %354 = sbr.rel (%p352) target = $region75
        $region74: #{rubber_toy_forward.5} parent=66 // pred_region
          %355 = vst [vmem:[#allocation2] sm:$0xff] 0.0
          %356 = vst [vmem:[#allocation2 + $0x8] sm:$0xff] 0.0
          %vm357 = vcmask 359424
          %358 = vst.msk [vmem:[#allocation2 + $0x10] sm:$0xff] %vm357, 0.0
          %359 = vst [vmem:[#allocation2 + $0x18] sm:$0xff] 0.0
          %360 = vst [vmem:[#allocation2 + $0x20] sm:$0xff] 0.0
          %361 = vst.msk [vmem:[#allocation2 + $0x28] sm:$0xff] %vm357, 0.0
        $region75: #{rubber_toy_forward.5} parent=66 // pred_fallthru
          _
        %v362 = vld [vmem:[#allocation2] sm:$0xff]
        %v363 = vld [vmem:[#allocation2 + $0x8] sm:$0xff]
        %v364 = vld [vmem:[#allocation2 + $0x10] sm:$0xff]
        %v365 = vld [vmem:[#allocation2 + $0x18] sm:$0xff]
        %v366 = vld [vmem:[#allocation2 + $0x20] sm:$0xff]
        %v367 = vld [vmem:[#allocation2 + $0x28] sm:$0xff]
        %v368 = vld [vmem:[%s300] sm:$0xff]
        %v369 = vld [vmem:[%s300 + $0x8] sm:$0xff]
        %v370 = vld [vmem:[%s300 + $0x10] sm:$0xff]
        %v371 = vld [vmem:[%s300 + $0x18] sm:$0xff]
        %v372 = vld [vmem:[%s342] sm:$0xff]
        %v373 = vld [vmem:[%s342 + $0x8] sm:$0xf]
        %v374 = vld [vmem:[%s342 + $0xc] sm:$0xff]
        %v375 = vld [vmem:[%s342 + $0x14] sm:$0xf]
        %v376 = vld [vmem:[%s342 + $0x18] sm:$0xff]
        %v377 = vld [vmem:[%s342 + $0x20] sm:$0xf]
        %v378 = vld [vmem:[%s342 + $0x24] sm:$0xff]
        %v379 = vld [vmem:[%s342 + $0x2c] sm:$0xf]
        %v380 = vld [vmem:[%s342 + $0x30] sm:$0xff]
        %v381 = vld [vmem:[%s342 + $0x38] sm:$0xf]
        %v382 = vld [vmem:[%s342 + $0x3c] sm:$0xff]
        %v383 = vld [vmem:[%s342 + $0x44] sm:$0xf]
        %v384 = vld [vmem:[%s342 + $0x48] sm:$0xff]
        %v385 = vld [vmem:[%s342 + $0x50] sm:$0xf]
        %v386 = vld [vmem:[%s342 + $0x54] sm:$0xff]
        %v387 = vld [vmem:[%s342 + $0x5c] sm:$0xf]
        %v388 = vld [vmem:[%s342 + $0x60] sm:$0xff]
        %v389 = vld [vmem:[%s342 + $0x68] sm:$0xf]
        %v390 = vld [vmem:[%s342 + $0x6c] sm:$0xff]
        %v391 = vld [vmem:[%s342 + $0x74] sm:$0xf]
        %v392 = vld [vmem:[%s342 + $0x78] sm:$0xff]
        %v393 = vld [vmem:[%s342 + $0x80] sm:$0xf]
        %v394 = vld [vmem:[%s342 + $0x84] sm:$0xff]
        %v395 = vld [vmem:[%s342 + $0x8c] sm:$0xf]
        %v396 = vld [vmem:[%s342 + $0x90] sm:$0xff]
        %v397 = vld [vmem:[%s342 + $0x98] sm:$0xf]
        %v398 = vld [vmem:[%s342 + $0x9c] sm:$0xff]
        %v399 = vld [vmem:[%s342 + $0xa4] sm:$0xf]
        %v400 = vld [vmem:[%s342 + $0xa8] sm:$0xff]
        %v401 = vld [vmem:[%s342 + $0xb0] sm:$0xf]
        %v402 = vld [vmem:[%s342 + $0xb4] sm:$0xff]
        %v403 = vld [vmem:[%s342 + $0xbc] sm:$0xf]
        %v404 = vld [vmem:[%s342 + $0xc0] sm:$0xff]
        %v405 = vld [vmem:[%s342 + $0xc8] sm:$0xf]
        %v406 = vld [vmem:[%s342 + $0xcc] sm:$0xff]
        %v407 = vld [vmem:[%s342 + $0xd4] sm:$0xf]
        %v408 = vld [vmem:[%s342 + $0xd8] sm:$0xff]
        %v409 = vld [vmem:[%s342 + $0xe0] sm:$0xf]
        %v410 = vld [vmem:[%s342 + $0xe4] sm:$0xff]
        %v411 = vld [vmem:[%s342 + $0xec] sm:$0xf]
        %v412 = vld [vmem:[%s342 + $0xf0] sm:$0xff]
        %v413 = vld [vmem:[%s342 + $0xf8] sm:$0xf]
        %v414 = vld [vmem:[%s342 + $0xfc] sm:$0xff]
        %v415 = vld [vmem:[%s342 + $0x104] sm:$0xf]
        %v416 = vld [vmem:[%s342 + $0x108] sm:$0xff]
        %v417 = vld [vmem:[%s342 + $0x110] sm:$0xf]
        %v418 = vld [vmem:[%s342 + $0x114] sm:$0xff]
        %v419 = vld [vmem:[%s342 + $0x11c] sm:$0xf]
        %v420 = vld [vmem:[%s342 + $0x120] sm:$0xff]
        %v421 = vld [vmem:[%s342 + $0x128] sm:$0xf]
        %v422 = vld [vmem:[%s342 + $0x12c] sm:$0xff]
        %v423 = vld [vmem:[%s342 + $0x134] sm:$0xf]
        %v424 = vld [vmem:[%s342 + $0x138] sm:$0xff]
        %v425 = vld [vmem:[%s342 + $0x140] sm:$0xf]
        %v426 = vld [vmem:[%s342 + $0x144] sm:$0xff]
        %v427 = vld [vmem:[%s342 + $0x14c] sm:$0xf]
        %v428 = vld [vmem:[%s342 + $0x150] sm:$0xff]
        %v429 = vld [vmem:[%s342 + $0x158] sm:$0xf]
        %v430 = vld [vmem:[%s342 + $0x15c] sm:$0xff]
        %v431 = vld [vmem:[%s342 + $0x164] sm:$0xf]
        %v432 = vld [vmem:[%s342 + $0x168] sm:$0xff]
        %v433 = vld [vmem:[%s342 + $0x170] sm:$0xf]
        %v434 = vld [vmem:[%s342 + $0x174] sm:$0xff]
        %v435 = vld [vmem:[%s342 + $0x17c] sm:$0xf]
        %v436 = vld [vmem:[%s342 + $0x180] sm:$0xff]
        %v437 = vld [vmem:[%s342 + $0x188] sm:$0xf]
        %v438 = vld [vmem:[%s342 + $0x18c] sm:$0xff]
        %v439 = vld [vmem:[%s342 + $0x194] sm:$0xf]
        %v440 = vld [vmem:[%s342 + $0x198] sm:$0xff]
        %v441 = vld [vmem:[%s342 + $0x1a0] sm:$0xf]
        %v442 = vld [vmem:[%s342 + $0x1a4] sm:$0xff]
        %v443 = vld [vmem:[%s342 + $0x1ac] sm:$0xf]
        %v444 = vld [vmem:[%s342 + $0x1b0] sm:$0xff]
        %v445 = vld [vmem:[%s342 + $0x1b8] sm:$0xf]
        %v446 = vld [vmem:[%s342 + $0x1bc] sm:$0xff]
        %v447 = vld [vmem:[%s342 + $0x1c4] sm:$0xf]
        %v448 = vld [vmem:[%s342 + $0x1c8] sm:$0xff]
        %v449 = vld [vmem:[%s342 + $0x1d0] sm:$0xf]
        %v450 = vld [vmem:[%s342 + $0x1d4] sm:$0xff]
        %v451 = vld [vmem:[%s342 + $0x1dc] sm:$0xf]
        %v452 = vld [vmem:[%s342 + $0x1e0] sm:$0xff]
        %v453 = vld [vmem:[%s342 + $0x1e8] sm:$0xf]
        %v454 = vld [vmem:[%s342 + $0x1ec] sm:$0xff]
        %v455 = vld [vmem:[%s342 + $0x1f4] sm:$0xf]
        %v456 = vld [vmem:[%s342 + $0x1f8] sm:$0xff]
        %v457 = vld [vmem:[%s342 + $0x200] sm:$0xf]
        %v458 = vld [vmem:[%s342 + $0x204] sm:$0xff]
        %v459 = vld [vmem:[%s342 + $0x20c] sm:$0xf]
        %v460 = vld [vmem:[%s342 + $0x210] sm:$0xff]
        %v461 = vld [vmem:[%s342 + $0x218] sm:$0xf]
        %v462 = vld [vmem:[%s342 + $0x21c] sm:$0xff]
        %v463 = vld [vmem:[%s342 + $0x224] sm:$0xf]
        %v464 = vld [vmem:[%s342 + $0x228] sm:$0xff]
        %v465 = vld [vmem:[%s342 + $0x230] sm:$0xf]
        %v466 = vld [vmem:[%s342 + $0x234] sm:$0xff]
        %v467 = vld [vmem:[%s342 + $0x23c] sm:$0xf]
        %v468 = vld [vmem:[%s342 + $0x240] sm:$0xff]
        %v469 = vld [vmem:[%s342 + $0x248] sm:$0xf]
        %v470 = vld [vmem:[%s342 + $0x24c] sm:$0xff]
        %v471 = vld [vmem:[%s342 + $0x254] sm:$0xf]
        %v472 = vld [vmem:[%s342 + $0x258] sm:$0xff]
        %v473 = vld [vmem:[%s342 + $0x260] sm:$0xf]
        %v474 = vld [vmem:[%s342 + $0x264] sm:$0xff]
        %v475 = vld [vmem:[%s342 + $0x26c] sm:$0xf]
        %v476 = vld [vmem:[%s342 + $0x270] sm:$0xff]
        %v477 = vld [vmem:[%s342 + $0x278] sm:$0xf]
        %v478 = vld [vmem:[%s342 + $0x27c] sm:$0xff]
        %v479 = vld [vmem:[%s342 + $0x284] sm:$0xf]
        %v480 = vld [vmem:[%s342 + $0x288] sm:$0xff]
        %v481 = vld [vmem:[%s342 + $0x290] sm:$0xf]
        %v482 = vld [vmem:[%s342 + $0x294] sm:$0xff]
        %v483 = vld [vmem:[%s342 + $0x29c] sm:$0xf]
        %v484 = vld [vmem:[%s342 + $0x2a0] sm:$0xff]
        %v485 = vld [vmem:[%s342 + $0x2a8] sm:$0xf]
        %v486 = vld [vmem:[%s342 + $0x2ac] sm:$0xff]
        %v487 = vld [vmem:[%s342 + $0x2b4] sm:$0xf]
        %v488 = vld [vmem:[%s342 + $0x2b8] sm:$0xff]
        %v489 = vld [vmem:[%s342 + $0x2c0] sm:$0xf]
        %v490 = vld [vmem:[%s342 + $0x2c4] sm:$0xff]
        %v491 = vld [vmem:[%s342 + $0x2cc] sm:$0xf]
        %v492 = vld [vmem:[%s342 + $0x2d0] sm:$0xff]
        %v493 = vld [vmem:[%s342 + $0x2d8] sm:$0xf]
        %v494 = vld [vmem:[%s342 + $0x2dc] sm:$0xff]
        %v495 = vld [vmem:[%s342 + $0x2e4] sm:$0xf]
        %v496 = vld [vmem:[%s342 + $0x2e8] sm:$0xff]
        %v497 = vld [vmem:[%s342 + $0x2f0] sm:$0xf]
        %v498 = vld [vmem:[%s342 + $0x2f4] sm:$0xff]
        %v499 = vld [vmem:[%s342 + $0x2fc] sm:$0xf]
        %v504 = vunpack.c.l.b16 %v368
        %v505 = vunpack.c.h.b16 %v368
        %v506 = vunpack.c.l.b16 %v369
        %v507 = vunpack.c.h.b16 %v369
        %v508 = vunpack.c.l.b16 %v370
        %v509 = vunpack.c.h.b16 %v370
        %v510 = vunpack.c.l.b16 %v371
        %v511 = vunpack.c.h.b16 %v371
        %v512 = vpack.c.b16 %v508, %v504
        %v513 = vpack.c.b16 %v509, %v505
        %v514 = vpack.c.b16 %v510, %v506
        %v515 = vpack.c.b16 %v511, %v507
        %v648 = vunpack.c.l.b16 %v372
        %v649 = vunpack.c.h.b16 %v372
        %v650 = vunpack.c.l.b16 %v373
        %v651 = vunpack.c.l.b16 %v374
        %v652 = vunpack.c.h.b16 %v374
        %v653 = vunpack.c.l.b16 %v375
        %v654 = vunpack.c.l.b16 %v376
        %v655 = vunpack.c.h.b16 %v376
        %v656 = vunpack.c.l.b16 %v377
        %v657 = vunpack.c.l.b16 %v378
        %v658 = vunpack.c.h.b16 %v378
        %v659 = vunpack.c.l.b16 %v379
        %v660 = vunpack.c.l.b16 %v380
        %v661 = vunpack.c.h.b16 %v380
        %v662 = vunpack.c.l.b16 %v381
        %v663 = vunpack.c.l.b16 %v382
        %v664 = vunpack.c.h.b16 %v382
        %v665 = vunpack.c.l.b16 %v383
        %v666 = vunpack.c.l.b16 %v384
        %v667 = vunpack.c.h.b16 %v384
        %v668 = vunpack.c.l.b16 %v385
        %v669 = vunpack.c.l.b16 %v386
        %v670 = vunpack.c.h.b16 %v386
        %v671 = vunpack.c.l.b16 %v387
        %v672 = vunpack.c.l.b16 %v388
        %v673 = vunpack.c.h.b16 %v388
        %v674 = vunpack.c.l.b16 %v389
        %v675 = vunpack.c.l.b16 %v390
        %v676 = vunpack.c.h.b16 %v390
        %v677 = vunpack.c.l.b16 %v391
        %v678 = vunpack.c.l.b16 %v392
        %v679 = vunpack.c.h.b16 %v392
        %v680 = vunpack.c.l.b16 %v393
        %v681 = vunpack.c.l.b16 %v394
        %v682 = vunpack.c.h.b16 %v394
        %v683 = vunpack.c.l.b16 %v395
        %v684 = vunpack.c.l.b16 %v396
        %v685 = vunpack.c.h.b16 %v396
        %v686 = vunpack.c.l.b16 %v397
        %v687 = vunpack.c.l.b16 %v398
        %v688 = vunpack.c.h.b16 %v398
        %v689 = vunpack.c.l.b16 %v399
        %v690 = vunpack.c.l.b16 %v400
        %v691 = vunpack.c.h.b16 %v400
        %v692 = vunpack.c.l.b16 %v401
        %v693 = vunpack.c.l.b16 %v402
        %v694 = vunpack.c.h.b16 %v402
        %v695 = vunpack.c.l.b16 %v403
        %v696 = vunpack.c.l.b16 %v404
        %v697 = vunpack.c.h.b16 %v404
        %v698 = vunpack.c.l.b16 %v405
        %v699 = vunpack.c.l.b16 %v406
        %v700 = vunpack.c.h.b16 %v406
        %v701 = vunpack.c.l.b16 %v407
        %v702 = vunpack.c.l.b16 %v408
        %v703 = vunpack.c.h.b16 %v408
        %v704 = vunpack.c.l.b16 %v409
        %v705 = vunpack.c.l.b16 %v410
        %v706 = vunpack.c.h.b16 %v410
        %v707 = vunpack.c.l.b16 %v411
        %v708 = vunpack.c.l.b16 %v412
        %v709 = vunpack.c.h.b16 %v412
        %v710 = vunpack.c.l.b16 %v413
        %v711 = vunpack.c.l.b16 %v414
        %v712 = vunpack.c.h.b16 %v414
        %v713 = vunpack.c.l.b16 %v415
        %v714 = vunpack.c.l.b16 %v416
        %v715 = vunpack.c.h.b16 %v416
        %v716 = vunpack.c.l.b16 %v417
        %v717 = vunpack.c.l.b16 %v418
        %v718 = vunpack.c.h.b16 %v418
        %v719 = vunpack.c.l.b16 %v419
        %v720 = vunpack.c.l.b16 %v420
        %v721 = vunpack.c.h.b16 %v420
        %v722 = vunpack.c.l.b16 %v421
        %v723 = vunpack.c.l.b16 %v422
        %v724 = vunpack.c.h.b16 %v422
        %v725 = vunpack.c.l.b16 %v423
        %v726 = vunpack.c.l.b16 %v424
        %v727 = vunpack.c.h.b16 %v424
        %v728 = vunpack.c.l.b16 %v425
        %v729 = vunpack.c.l.b16 %v426
        %v730 = vunpack.c.h.b16 %v426
        %v731 = vunpack.c.l.b16 %v427
        %v732 = vunpack.c.l.b16 %v428
        %v733 = vunpack.c.h.b16 %v428
        %v734 = vunpack.c.l.b16 %v429
        %v735 = vunpack.c.l.b16 %v430
        %v736 = vunpack.c.h.b16 %v430
        %v737 = vunpack.c.l.b16 %v431
        %v738 = vunpack.c.l.b16 %v432
        %v739 = vunpack.c.h.b16 %v432
        %v740 = vunpack.c.l.b16 %v433
        %v741 = vunpack.c.l.b16 %v434
        %v742 = vunpack.c.h.b16 %v434
        %v743 = vunpack.c.l.b16 %v435
        %v744 = vunpack.c.l.b16 %v436
        %v745 = vunpack.c.h.b16 %v436
        %v746 = vunpack.c.l.b16 %v437
        %v747 = vunpack.c.l.b16 %v438
        %v748 = vunpack.c.h.b16 %v438
        %v749 = vunpack.c.l.b16 %v439
        %v750 = vunpack.c.l.b16 %v440
        %v751 = vunpack.c.h.b16 %v440
        %v752 = vunpack.c.l.b16 %v441
        %v753 = vunpack.c.l.b16 %v442
        %v754 = vunpack.c.h.b16 %v442
        %v755 = vunpack.c.l.b16 %v443
        %v756 = vunpack.c.l.b16 %v444
        %v757 = vunpack.c.h.b16 %v444
        %v758 = vunpack.c.l.b16 %v445
        %v759 = vunpack.c.l.b16 %v446
        %v760 = vunpack.c.h.b16 %v446
        %v761 = vunpack.c.l.b16 %v447
        %v762 = vunpack.c.l.b16 %v448
        %v763 = vunpack.c.h.b16 %v448
        %v764 = vunpack.c.l.b16 %v449
        %v765 = vunpack.c.l.b16 %v450
        %v766 = vunpack.c.h.b16 %v450
        %v767 = vunpack.c.l.b16 %v451
        %v768 = vunpack.c.l.b16 %v452
        %v769 = vunpack.c.h.b16 %v452
        %v770 = vunpack.c.l.b16 %v453
        %v771 = vunpack.c.l.b16 %v454
        %v772 = vunpack.c.h.b16 %v454
        %v773 = vunpack.c.l.b16 %v455
        %v774 = vunpack.c.l.b16 %v456
        %v775 = vunpack.c.h.b16 %v456
        %v776 = vunpack.c.l.b16 %v457
        %v777 = vunpack.c.l.b16 %v458
        %v778 = vunpack.c.h.b16 %v458
        %v779 = vunpack.c.l.b16 %v459
        %v780 = vunpack.c.l.b16 %v460
        %v781 = vunpack.c.h.b16 %v460
        %v782 = vunpack.c.l.b16 %v461
        %v783 = vunpack.c.l.b16 %v462
        %v784 = vunpack.c.h.b16 %v462
        %v785 = vunpack.c.l.b16 %v463
        %v786 = vunpack.c.l.b16 %v464
        %v787 = vunpack.c.h.b16 %v464
        %v788 = vunpack.c.l.b16 %v465
        %v789 = vunpack.c.l.b16 %v466
        %v790 = vunpack.c.h.b16 %v466
        %v791 = vunpack.c.l.b16 %v467
        %v792 = vunpack.c.l.b16 %v468
        %v793 = vunpack.c.h.b16 %v468
        %v794 = vunpack.c.l.b16 %v469
        %v795 = vunpack.c.l.b16 %v470
        %v796 = vunpack.c.h.b16 %v470
        %v797 = vunpack.c.l.b16 %v471
        %v798 = vunpack.c.l.b16 %v472
        %v799 = vunpack.c.h.b16 %v472
        %v800 = vunpack.c.l.b16 %v473
        %v801 = vunpack.c.l.b16 %v474
        %v802 = vunpack.c.h.b16 %v474
        %v803 = vunpack.c.l.b16 %v475
        %v804 = vunpack.c.l.b16 %v476
        %v805 = vunpack.c.h.b16 %v476
        %v806 = vunpack.c.l.b16 %v477
        %v807 = vunpack.c.l.b16 %v478
        %v808 = vunpack.c.h.b16 %v478
        %v809 = vunpack.c.l.b16 %v479
        %v810 = vunpack.c.l.b16 %v480
        %v811 = vunpack.c.h.b16 %v480
        %v812 = vunpack.c.l.b16 %v481
        %v813 = vunpack.c.l.b16 %v482
        %v814 = vunpack.c.h.b16 %v482
        %v815 = vunpack.c.l.b16 %v483
        %v816 = vunpack.c.l.b16 %v484
        %v817 = vunpack.c.h.b16 %v484
        %v818 = vunpack.c.l.b16 %v485
        %v819 = vunpack.c.l.b16 %v486
        %v820 = vunpack.c.h.b16 %v486
        %v821 = vunpack.c.l.b16 %v487
        %v822 = vunpack.c.l.b16 %v488
        %v823 = vunpack.c.h.b16 %v488
        %v824 = vunpack.c.l.b16 %v489
        %v825 = vunpack.c.l.b16 %v490
        %v826 = vunpack.c.h.b16 %v490
        %v827 = vunpack.c.l.b16 %v491
        %v828 = vunpack.c.l.b16 %v492
        %v829 = vunpack.c.h.b16 %v492
        %v830 = vunpack.c.l.b16 %v493
        %v831 = vunpack.c.l.b16 %v494
        %v832 = vunpack.c.h.b16 %v494
        %v833 = vunpack.c.l.b16 %v495
        %v834 = vunpack.c.l.b16 %v496
        %v835 = vunpack.c.h.b16 %v496
        %v836 = vunpack.c.l.b16 %v497
        %v837 = vunpack.c.l.b16 %v498
        %v838 = vunpack.c.h.b16 %v498
        %v839 = vunpack.c.l.b16 %v499
        %v840 = vpack.c.b16 %v651, %v648
        %v841 = vpack.c.b16 %v652, %v649
        %v842 = vpack.c.b16 %v653, %v650
        %v843 = vpack.c.b16 %v657, %v654
        %v844 = vpack.c.b16 %v658, %v655
        %v845 = vpack.c.b16 %v659, %v656
        %v846 = vpack.c.b16 %v663, %v660
        %v847 = vpack.c.b16 %v664, %v661
        %v848 = vpack.c.b16 %v665, %v662
        %v849 = vpack.c.b16 %v669, %v666
        %v850 = vpack.c.b16 %v670, %v667
        %v851 = vpack.c.b16 %v671, %v668
        %v852 = vpack.c.b16 %v675, %v672
        %v853 = vpack.c.b16 %v676, %v673
        %v854 = vpack.c.b16 %v677, %v674
        %v855 = vpack.c.b16 %v681, %v678
        %v856 = vpack.c.b16 %v682, %v679
        %v857 = vpack.c.b16 %v683, %v680
        %v858 = vpack.c.b16 %v687, %v684
        %v859 = vpack.c.b16 %v688, %v685
        %v860 = vpack.c.b16 %v689, %v686
        %v861 = vpack.c.b16 %v693, %v690
        %v862 = vpack.c.b16 %v694, %v691
        %v863 = vpack.c.b16 %v695, %v692
        %v864 = vpack.c.b16 %v699, %v696
        %v865 = vpack.c.b16 %v700, %v697
        %v866 = vpack.c.b16 %v701, %v698
        %v867 = vpack.c.b16 %v705, %v702
        %v868 = vpack.c.b16 %v706, %v703
        %v869 = vpack.c.b16 %v707, %v704
        %v870 = vpack.c.b16 %v711, %v708
        %v871 = vpack.c.b16 %v712, %v709
        %v872 = vpack.c.b16 %v713, %v710
        %v873 = vpack.c.b16 %v717, %v714
        %v874 = vpack.c.b16 %v718, %v715
        %v875 = vpack.c.b16 %v719, %v716
        %v876 = vpack.c.b16 %v723, %v720
        %v877 = vpack.c.b16 %v724, %v721
        %v878 = vpack.c.b16 %v725, %v722
        %v879 = vpack.c.b16 %v729, %v726
        %v880 = vpack.c.b16 %v730, %v727
        %v881 = vpack.c.b16 %v731, %v728
        %v882 = vpack.c.b16 %v735, %v732
        %v883 = vpack.c.b16 %v736, %v733
        %v884 = vpack.c.b16 %v737, %v734
        %v885 = vpack.c.b16 %v741, %v738
        %v886 = vpack.c.b16 %v742, %v739
        %v887 = vpack.c.b16 %v743, %v740
        %v888 = vpack.c.b16 %v747, %v744
        %v889 = vpack.c.b16 %v748, %v745
        %v890 = vpack.c.b16 %v749, %v746
        %v891 = vpack.c.b16 %v753, %v750
        %v892 = vpack.c.b16 %v754, %v751
        %v893 = vpack.c.b16 %v755, %v752
        %v894 = vpack.c.b16 %v759, %v756
        %v895 = vpack.c.b16 %v760, %v757
        %v896 = vpack.c.b16 %v761, %v758
        %v897 = vpack.c.b16 %v765, %v762
        %v898 = vpack.c.b16 %v766, %v763
        %v899 = vpack.c.b16 %v767, %v764
        %v900 = vpack.c.b16 %v771, %v768
        %v901 = vpack.c.b16 %v772, %v769
        %v902 = vpack.c.b16 %v773, %v770
        %v903 = vpack.c.b16 %v777, %v774
        %v904 = vpack.c.b16 %v778, %v775
        %v905 = vpack.c.b16 %v779, %v776
        %v906 = vpack.c.b16 %v783, %v780
        %v907 = vpack.c.b16 %v784, %v781
        %v908 = vpack.c.b16 %v785, %v782
        %v909 = vpack.c.b16 %v789, %v786
        %v910 = vpack.c.b16 %v790, %v787
        %v911 = vpack.c.b16 %v791, %v788
        %v912 = vpack.c.b16 %v795, %v792
        %v913 = vpack.c.b16 %v796, %v793
        %v914 = vpack.c.b16 %v797, %v794
        %v915 = vpack.c.b16 %v801, %v798
        %v916 = vpack.c.b16 %v802, %v799
        %v917 = vpack.c.b16 %v803, %v800
        %v918 = vpack.c.b16 %v807, %v804
        %v919 = vpack.c.b16 %v808, %v805
        %v920 = vpack.c.b16 %v809, %v806
        %v921 = vpack.c.b16 %v813, %v810
        %v922 = vpack.c.b16 %v814, %v811
        %v923 = vpack.c.b16 %v815, %v812
        %v924 = vpack.c.b16 %v819, %v816
        %v925 = vpack.c.b16 %v820, %v817
        %v926 = vpack.c.b16 %v821, %v818
        %v927 = vpack.c.b16 %v825, %v822
        %v928 = vpack.c.b16 %v826, %v823
        %v929 = vpack.c.b16 %v827, %v824
        %v930 = vpack.c.b16 %v831, %v828
        %v931 = vpack.c.b16 %v832, %v829
        %v932 = vpack.c.b16 %v833, %v830
        %v933 = vpack.c.b16 %v837, %v834
        %v934 = vpack.c.b16 %v838, %v835
        %v935 = vpack.c.b16 %v839, %v836
        %1032 = vmatpush.bf16.msra.mxu0 %v861
        %1033 = vmatpush.bf16.msra.mxu0 %v858
        %1034 = vmatpush.bf16.msra.mxu0 %v855
        %1035 = vmatpush.bf16.msra.mxu0 %v852
        %1036 = vmatpush.bf16.msra.mxu0 %v849
        %1037 = vmatpush.bf16.msra.mxu0 %v846
        %1038 = vmatpush.bf16.msra.mxu0 %v843
        %1039 = vmatpush.bf16.msra.mxu0 %v840
        %1040 = vmatmul.bf16.gmra.mxu0 %v512
        %v1041 = vpop.f32.mrf.mxu0
        %v1042 = vadd.f32 0.0, %v1041
        %v1043 = vpop.f32.mrf.mxu0
        %v1044 = vadd.f32 0.0, %v1043
        %1045 = vdwg.mxu0
        %1046 = vmatpush.bf16.msra.mxu0 %v885
        %1047 = vmatpush.bf16.msra.mxu0 %v882
        %1048 = vmatpush.bf16.msra.mxu0 %v879
        %1049 = vmatpush.bf16.msra.mxu0 %v876
        %1050 = vmatpush.bf16.msra.mxu0 %v873
        %1051 = vmatpush.bf16.msra.mxu0 %v870
        %1052 = vmatpush.bf16.msra.mxu0 %v867
        %1053 = vmatpush.bf16.msra.mxu0 %v864
        %1054 = vmatmul.bf16.gmra.mxu0 %v513
        %v1055 = vpop.f32.mrf.mxu0
        %v1056 = vadd.f32 %v1042, %v1055
        %v1057 = vpop.f32.mrf.mxu0
        %v1058 = vadd.f32 %v1044, %v1057
        %1059 = vdwg.mxu0
        %1060 = vmatpush.bf16.msra.mxu0 %v909
        %1061 = vmatpush.bf16.msra.mxu0 %v906
        %1062 = vmatpush.bf16.msra.mxu0 %v903
        %1063 = vmatpush.bf16.msra.mxu0 %v900
        %1064 = vmatpush.bf16.msra.mxu0 %v897
        %1065 = vmatpush.bf16.msra.mxu0 %v894
        %1066 = vmatpush.bf16.msra.mxu0 %v891
        %1067 = vmatpush.bf16.msra.mxu0 %v888
        %1068 = vmatmul.bf16.gmra.mxu0 %v514
        %v1069 = vpop.f32.mrf.mxu0
        %v1070 = vadd.f32 %v1056, %v1069
        %v1071 = vpop.f32.mrf.mxu0
        %v1072 = vadd.f32 %v1058, %v1071
        %1073 = vdwg.mxu0
        %1074 = vmatpush.bf16.msra.mxu0 %v933
        %1075 = vmatpush.bf16.msra.mxu0 %v930
        %1076 = vmatpush.bf16.msra.mxu0 %v927
        %1077 = vmatpush.bf16.msra.mxu0 %v924
        %1078 = vmatpush.bf16.msra.mxu0 %v921
        %1079 = vmatpush.bf16.msra.mxu0 %v918
        %1080 = vmatpush.bf16.msra.mxu0 %v915
        %1081 = vmatpush.bf16.msra.mxu0 %v912
        %1082 = vmatmul.bf16.gmra.mxu0 %v515
        %v1083 = vpop.f32.mrf.mxu0
        %v1084 = vadd.f32 %v1070, %v1083
        %v1085 = vpop.f32.mrf.mxu0
        %v1086 = vadd.f32 %v1072, %v1085
        %1087 = vdwg.mxu0
        %1088 = vmatpush.bf16.msra.mxu0 %v862
        %1089 = vmatpush.bf16.msra.mxu0 %v859
        %1090 = vmatpush.bf16.msra.mxu0 %v856
        %1091 = vmatpush.bf16.msra.mxu0 %v853
        %1092 = vmatpush.bf16.msra.mxu0 %v850
        %1093 = vmatpush.bf16.msra.mxu0 %v847
        %1094 = vmatpush.bf16.msra.mxu0 %v844
        %1095 = vmatpush.bf16.msra.mxu0 %v841
        %1096 = vmatmul.bf16.gmra.mxu0 %v512
        %v1097 = vpop.f32.mrf.mxu0
        %v1098 = vadd.f32 0.0, %v1097
        %v1099 = vpop.f32.mrf.mxu0
        %v1100 = vadd.f32 0.0, %v1099
        %1101 = vdwg.mxu0
        %1102 = vmatpush.bf16.msra.mxu0 %v886
        %1103 = vmatpush.bf16.msra.mxu0 %v883
        %1104 = vmatpush.bf16.msra.mxu0 %v880
        %1105 = vmatpush.bf16.msra.mxu0 %v877
        %1106 = vmatpush.bf16.msra.mxu0 %v874
        %1107 = vmatpush.bf16.msra.mxu0 %v871
        %1108 = vmatpush.bf16.msra.mxu0 %v868
        %1109 = vmatpush.bf16.msra.mxu0 %v865
        %1110 = vmatmul.bf16.gmra.mxu0 %v513
        %v1111 = vpop.f32.mrf.mxu0
        %v1112 = vadd.f32 %v1098, %v1111
        %v1113 = vpop.f32.mrf.mxu0
        %v1114 = vadd.f32 %v1100, %v1113
        %1115 = vdwg.mxu0
        %1116 = vmatpush.bf16.msra.mxu0 %v910
        %1117 = vmatpush.bf16.msra.mxu0 %v907
        %1118 = vmatpush.bf16.msra.mxu0 %v904
        %1119 = vmatpush.bf16.msra.mxu0 %v901
        %1120 = vmatpush.bf16.msra.mxu0 %v898
        %1121 = vmatpush.bf16.msra.mxu0 %v895
        %1122 = vmatpush.bf16.msra.mxu0 %v892
        %1123 = vmatpush.bf16.msra.mxu0 %v889
        %1124 = vmatmul.bf16.gmra.mxu0 %v514
        %v1125 = vpop.f32.mrf.mxu0
        %v1126 = vadd.f32 %v1112, %v1125
        %v1127 = vpop.f32.mrf.mxu0
        %v1128 = vadd.f32 %v1114, %v1127
        %1129 = vdwg.mxu0
        %1130 = vmatpush.bf16.msra.mxu0 %v934
        %1131 = vmatpush.bf16.msra.mxu0 %v931
        %1132 = vmatpush.bf16.msra.mxu0 %v928
        %1133 = vmatpush.bf16.msra.mxu0 %v925
        %1134 = vmatpush.bf16.msra.mxu0 %v922
        %1135 = vmatpush.bf16.msra.mxu0 %v919
        %1136 = vmatpush.bf16.msra.mxu0 %v916
        %1137 = vmatpush.bf16.msra.mxu0 %v913
        %1138 = vmatmul.bf16.gmra.mxu0 %v515
        %v1139 = vpop.f32.mrf.mxu0
        %v1140 = vadd.f32 %v1126, %v1139
        %v1141 = vpop.f32.mrf.mxu0
        %v1142 = vadd.f32 %v1128, %v1141
        %1143 = vdwg.mxu0
        %1144 = vmatpush.bf16.msra.mxu0 %v863
        %1145 = vmatpush.bf16.msra.mxu0 %v860
        %1146 = vmatpush.bf16.msra.mxu0 %v857
        %1147 = vmatpush.bf16.msra.mxu0 %v854
        %1148 = vmatpush.bf16.msra.mxu0 %v851
        %1149 = vmatpush.bf16.msra.mxu0 %v848
        %1150 = vmatpush.bf16.msra.mxu0 %v845
        %1151 = vmatpush.bf16.msra.mxu0 %v842
        %1152 = vmatmul.bf16.gmra.mxu0 %v512
        %v1153 = vpop.f32.mrf.mxu0
        %v1154 = vadd.f32 0.0, %v1153
        %v1155 = vpop.f32.mrf.mxu0
        %v1156 = vadd.f32 0.0, %v1155
        %1157 = vdwg.mxu0
        %1158 = vmatpush.bf16.msra.mxu0 %v887
        %1159 = vmatpush.bf16.msra.mxu0 %v884
        %1160 = vmatpush.bf16.msra.mxu0 %v881
        %1161 = vmatpush.bf16.msra.mxu0 %v878
        %1162 = vmatpush.bf16.msra.mxu0 %v875
        %1163 = vmatpush.bf16.msra.mxu0 %v872
        %1164 = vmatpush.bf16.msra.mxu0 %v869
        %1165 = vmatpush.bf16.msra.mxu0 %v866
        %1166 = vmatmul.bf16.gmra.mxu0 %v513
        %v1167 = vpop.f32.mrf.mxu0
        %v1168 = vadd.f32 %v1154, %v1167
        %v1169 = vpop.f32.mrf.mxu0
        %v1170 = vadd.f32 %v1156, %v1169
        %1171 = vdwg.mxu0
        %1172 = vmatpush.bf16.msra.mxu0 %v911
        %1173 = vmatpush.bf16.msra.mxu0 %v908
        %1174 = vmatpush.bf16.msra.mxu0 %v905
        %1175 = vmatpush.bf16.msra.mxu0 %v902
        %1176 = vmatpush.bf16.msra.mxu0 %v899
        %1177 = vmatpush.bf16.msra.mxu0 %v896
        %1178 = vmatpush.bf16.msra.mxu0 %v893
        %1179 = vmatpush.bf16.msra.mxu0 %v890
        %1180 = vmatmul.bf16.gmra.mxu0 %v514
        %v1181 = vpop.f32.mrf.mxu0
        %v1182 = vadd.f32 %v1168, %v1181
        %v1183 = vpop.f32.mrf.mxu0
        %v1184 = vadd.f32 %v1170, %v1183
        %1185 = vdwg.mxu0
        %1186 = vmatpush.bf16.msra.mxu0 %v935
        %1187 = vmatpush.bf16.msra.mxu0 %v932
        %1188 = vmatpush.bf16.msra.mxu0 %v929
        %1189 = vmatpush.bf16.msra.mxu0 %v926
        %1190 = vmatpush.bf16.msra.mxu0 %v923
        %1191 = vmatpush.bf16.msra.mxu0 %v920
        %1192 = vmatpush.bf16.msra.mxu0 %v917
        %1193 = vmatpush.bf16.msra.mxu0 %v914
        %1194 = vmatmul.bf16.gmra.mxu0 %v515
        %v1195 = vpop.f32.mrf.mxu0
        %v1196 = vadd.f32 %v1182, %v1195
        %v1197 = vpop.f32.mrf.mxu0
        %v1198 = vadd.f32 %v1184, %v1197
        %1199 = vdwg.mxu0
        %v1200 = vadd.f32 %v362, %v1084
        %v1201 = vadd.f32 %v363, %v1140
        %v1202 = vadd.f32 %v364, %v1196
        %v1203 = vadd.f32 %v365, %v1086
        %v1204 = vadd.f32 %v366, %v1142
        %v1205 = vadd.f32 %v367, %v1198
        %1206 = vst [vmem:[#allocation2] sm:$0xff] %v1200
        %1207 = vst [vmem:[#allocation2 + $0x8] sm:$0xff] %v1201
        %vm1208 = vcmask 359424
        %1209 = vst.msk [vmem:[#allocation2 + $0x10] sm:$0xff] %vm1208, %v1202
        %1210 = vst [vmem:[#allocation2 + $0x18] sm:$0xff] %v1203
        %1211 = vst [vmem:[#allocation2 + $0x20] sm:$0xff] %v1204
        %1212 = vst.msk [vmem:[#allocation2 + $0x28] sm:$0xff] %vm1208, %v1205
        %p1213 = scmp.eq.s32.totalorder %s23, 6
        // Predicated region
        $region76: #{rubber_toy_forward.5} parent=66 // pred_check
          %p1214 = pneg %p1213
        $region77: #{rubber_toy_forward.5} parent=66 // pred_check_branch
          %1216 = sbr.rel (%p1214) target = $region79
        $region78: #{rubber_toy_forward.5} parent=66 // pred_region
          %v1217 = vld [vmem:[#allocation2] sm:$0xff]
          %v1218 = vld [vmem:[#allocation2 + $0x8] sm:$0xff]
          %v1219 = vld [vmem:[#allocation2 + $0x10] sm:$0xff]
          %v1220 = vld [vmem:[#allocation2 + $0x18] sm:$0xff]
          %v1221 = vld [vmem:[#allocation2 + $0x20] sm:$0xff]
          %v1222 = vld [vmem:[#allocation2 + $0x28] sm:$0xff]
          %v1223 = vld [vmem:[%s2] sm:$0x7]
          %v1225 = vperm.slane %v1223, 0
          %v1226 = vperm.slane %v1223, 1
          %v1227 = vperm.slane %v1223, 2
          %v1231 = vadd.f32 %v1217, %v1225
          %v1232 = vadd.f32 %v1218, %v1226
          %v1233 = vadd.f32 %v1219, %v1227
          %v1234 = vadd.f32 %v1220, %v1225
          %v1235 = vadd.f32 %v1221, %v1226
          %v1236 = vadd.f32 %v1222, %v1227
          %v1237 = vmax.f32 %v1231, 0.0
          %v1238 = vmax.f32 %v1232, 0.0
          %v1239 = vmax.f32 %v1233, 0.0
          %v1240 = vmax.f32 %v1234, 0.0
          %v1241 = vmax.f32 %v1235, 0.0
          %v1242 = vmax.f32 %v1236, 0.0
          %v1243 = vpack.c.bf16 %v1240, %v1237
          %v1244 = vpack.c.bf16 %v1241, %v1238
          %v1245 = vpack.c.bf16 %v1242, %v1239
          %v1246 = vld [vmem:[%s3] sm:$0xf]
          %v1247 = vld [vmem:[%s3 + $0x4] sm:$0xf]
          %v1248 = vld [vmem:[%s3 + $0x8] sm:$0xf]
          %v1249 = vld [vmem:[%s3 + $0xc] sm:$0xf]
          %v1250 = vld [vmem:[%s3 + $0x10] sm:$0xf]
          %v1251 = vld [vmem:[%s3 + $0x14] sm:$0xf]
          %v1252 = vld [vmem:[%s3 + $0x18] sm:$0xf]
          %v1253 = vld [vmem:[%s3 + $0x1c] sm:$0xf]
          %v1254 = vld [vmem:[%s3 + $0x20] sm:$0xf]
          %v1255 = vld [vmem:[%s3 + $0x24] sm:$0xf]
          %v1256 = vld [vmem:[%s3 + $0x28] sm:$0xf]
          %v1257 = vld [vmem:[%s3 + $0x2c] sm:$0xf]
          %v1258 = vld [vmem:[%s3 + $0x30] sm:$0xf]
          %v1259 = vld [vmem:[%s3 + $0x34] sm:$0xf]
          %v1260 = vld [vmem:[%s3 + $0x38] sm:$0xf]
          %v1261 = vld [vmem:[%s3 + $0x3c] sm:$0xf]
          %v1262 = vld [vmem:[%s3 + $0x40] sm:$0xf]
          %v1263 = vld [vmem:[%s3 + $0x44] sm:$0xf]
          %v1264 = vld [vmem:[%s3 + $0x48] sm:$0xf]
          %v1265 = vld [vmem:[%s3 + $0x4c] sm:$0xf]
          %v1266 = vld [vmem:[%s3 + $0x50] sm:$0xf]
          %v1267 = vld [vmem:[%s3 + $0x54] sm:$0xf]
          %v1268 = vld [vmem:[%s3 + $0x58] sm:$0xf]
          %v1269 = vld [vmem:[%s3 + $0x5c] sm:$0xf]
          %v1270 = vld [vmem:[%s3 + $0x60] sm:$0xf]
          %v1271 = vld [vmem:[%s3 + $0x64] sm:$0xf]
          %v1272 = vld [vmem:[%s3 + $0x68] sm:$0xf]
          %v1273 = vld [vmem:[%s3 + $0x6c] sm:$0xf]
          %v1274 = vld [vmem:[%s3 + $0x70] sm:$0xf]
          %v1275 = vld [vmem:[%s3 + $0x74] sm:$0xf]
          %v1276 = vld [vmem:[%s3 + $0x78] sm:$0xf]
          %v1277 = vld [vmem:[%s3 + $0x7c] sm:$0xf]
          %v1278 = vld [vmem:[%s3 + $0x80] sm:$0xf]
          %v1279 = vld [vmem:[%s3 + $0x84] sm:$0xf]
          %v1280 = vld [vmem:[%s3 + $0x88] sm:$0xf]
          %v1281 = vld [vmem:[%s3 + $0x8c] sm:$0xf]
          %v1282 = vld [vmem:[%s3 + $0x90] sm:$0xf]
          %v1283 = vld [vmem:[%s3 + $0x94] sm:$0x3]
          %v1284 = vld [vmem:[%s4] sm:$0x1]
          %v1286 = vperm.slane %v1284, 0
          %v1326 = vunpack.c.l.b16 %v1246
          %v1327 = vunpack.c.l.b16 %v1247
          %v1328 = vunpack.c.l.b16 %v1248
          %v1329 = vunpack.c.l.b16 %v1249
          %v1330 = vunpack.c.l.b16 %v1250
          %v1331 = vunpack.c.l.b16 %v1251
          %v1332 = vunpack.c.l.b16 %v1252
          %v1333 = vunpack.c.l.b16 %v1253
          %v1334 = vunpack.c.l.b16 %v1254
          %v1335 = vunpack.c.l.b16 %v1255
          %v1336 = vunpack.c.l.b16 %v1256
          %v1337 = vunpack.c.l.b16 %v1257
          %v1338 = vunpack.c.l.b16 %v1258
          %v1339 = vunpack.c.l.b16 %v1259
          %v1340 = vunpack.c.l.b16 %v1260
          %v1341 = vunpack.c.l.b16 %v1261
          %v1342 = vunpack.c.l.b16 %v1262
          %v1343 = vunpack.c.l.b16 %v1263
          %v1344 = vunpack.c.l.b16 %v1264
          %v1345 = vunpack.c.l.b16 %v1265
          %v1346 = vunpack.c.l.b16 %v1266
          %v1347 = vunpack.c.l.b16 %v1267
          %v1348 = vunpack.c.l.b16 %v1268
          %v1349 = vunpack.c.l.b16 %v1269
          %v1350 = vunpack.c.l.b16 %v1270
          %v1351 = vunpack.c.l.b16 %v1271
          %v1352 = vunpack.c.l.b16 %v1272
          %v1353 = vunpack.c.l.b16 %v1273
          %v1354 = vunpack.c.l.b16 %v1274
          %v1355 = vunpack.c.l.b16 %v1275
          %v1356 = vunpack.c.l.b16 %v1276
          %v1357 = vunpack.c.l.b16 %v1277
          %v1358 = vunpack.c.l.b16 %v1278
          %v1359 = vunpack.c.l.b16 %v1279
          %v1360 = vunpack.c.l.b16 %v1280
          %v1361 = vunpack.c.l.b16 %v1281
          %v1362 = vunpack.c.l.b16 %v1282
          %v1363 = vunpack.c.l.b16 %v1283
          %v1364 = vpack.c.b16 %v1327, %v1326
          %v1365 = vpack.c.b16 %v1329, %v1328
          %v1366 = vpack.c.b16 %v1331, %v1330
          %v1367 = vpack.c.b16 %v1333, %v1332
          %v1368 = vpack.c.b16 %v1335, %v1334
          %v1369 = vpack.c.b16 %v1337, %v1336
          %v1370 = vpack.c.b16 %v1339, %v1338
          %v1371 = vpack.c.b16 %v1341, %v1340
          %v1372 = vpack.c.b16 %v1343, %v1342
          %v1373 = vpack.c.b16 %v1345, %v1344
          %v1374 = vpack.c.b16 %v1347, %v1346
          %v1375 = vpack.c.b16 %v1349, %v1348
          %v1376 = vpack.c.b16 %v1351, %v1350
          %v1377 = vpack.c.b16 %v1353, %v1352
          %v1378 = vpack.c.b16 %v1355, %v1354
          %v1379 = vpack.c.b16 %v1357, %v1356
          %v1380 = vpack.c.b16 %v1359, %v1358
          %v1381 = vpack.c.b16 %v1361, %v1360
          %v1382 = vpack.c.b16 %v1363, %v1362
          %v1402 = vsel %vm1208, %v1245, 0
          %vm1404 = vcmask 1045504
          %v1406 = vsel %vm1404, %v1382, 0
          %1408 = vmatpush.bf16.msra.mxu0 %v1371
          %1409 = vmatpush.bf16.msra.mxu0 %v1370
          %1410 = vmatpush.bf16.msra.mxu0 %v1369
          %1411 = vmatpush.bf16.msra.mxu0 %v1368
          %1412 = vmatpush.bf16.msra.mxu0 %v1367
          %1413 = vmatpush.bf16.msra.mxu0 %v1366
          %1414 = vmatpush.bf16.msra.mxu0 %v1365
          %1415 = vmatpush.bf16.msra.mxu0 %v1364
          %1416 = vmatmul.bf16.gmra.mxu0 %v1243
          %v1417 = vpop.f32.mrf.mxu0
          %v1418 = vadd.f32 %v1286, %v1417
          %v1419 = vpop.f32.mrf.mxu0
          %v1420 = vadd.f32 %v1286, %v1419
          %1421 = vdwg.mxu0
          %1422 = vmatpush.bf16.msra.mxu0 %v1379
          %1423 = vmatpush.bf16.msra.mxu0 %v1378
          %1424 = vmatpush.bf16.msra.mxu0 %v1377
          %1425 = vmatpush.bf16.msra.mxu0 %v1376
          %1426 = vmatpush.bf16.msra.mxu0 %v1375
          %1427 = vmatpush.bf16.msra.mxu0 %v1374
          %1428 = vmatpush.bf16.msra.mxu0 %v1373
          %1429 = vmatpush.bf16.msra.mxu0 %v1372
          %1430 = vmatmul.bf16.gmra.mxu0 %v1244
          %v1431 = vpop.f32.mrf.mxu0
          %v1432 = vadd.f32 %v1418, %v1431
          %v1433 = vpop.f32.mrf.mxu0
          %v1434 = vadd.f32 %v1420, %v1433
          %1435 = vdwg.mxu0
          %1436 = vmatpush.bf16.msra.mxu0 0
          %1437 = vmatpush.bf16.msra.mxu0 0
          %1438 = vmatpush.bf16.msra.mxu0 0
          %1439 = vmatpush.bf16.msra.mxu0 0
          %1440 = vmatpush.bf16.msra.mxu0 0
          %1441 = vmatpush.bf16.msra.mxu0 %v1406
          %1442 = vmatpush.bf16.msra.mxu0 %v1381
          %1443 = vmatpush.bf16.msra.mxu0 %v1380
          %1444 = vmatmul.bf16.gmra.mxu0 %v1402
          %v1445 = vpop.f32.mrf.mxu0
          %v1446 = vadd.f32 %v1432, %v1445
          %v1447 = vpop.f32.mrf.mxu0
          %v1448 = vadd.f32 %v1434, %v1447
          %1449 = vdwg.mxu0
          %v1450 = vmax.f32 %v1446, 0.0
          %v1451 = vmax.f32 %v1448, 0.0
          %v1452 = vpack.c.bf16 %v1451, %v1450
          %v1453 = vld [vmem:[%s5] sm:$0xf]
          %v1454 = vld [vmem:[%s5 + $0x4] sm:$0xf]
          %v1455 = vld [vmem:[%s5 + $0x8] sm:$0xf]
          %v1456 = vld [vmem:[%s5 + $0xc] sm:$0xf]
          %v1457 = vld [vmem:[%s5 + $0x10] sm:$0xf]
          %v1458 = vld [vmem:[%s5 + $0x14] sm:$0xf]
          %v1459 = vld [vmem:[%s5 + $0x18] sm:$0xf]
          %v1460 = vld [vmem:[%s5 + $0x1c] sm:$0xf]
          %v1461 = vld [vmem:[%s5 + $0x20] sm:$0xf]
          %v1462 = vld [vmem:[%s5 + $0x24] sm:$0xf]
          %v1463 = vld [vmem:[%s5 + $0x28] sm:$0xf]
          %v1464 = vld [vmem:[%s5 + $0x2c] sm:$0xf]
          %v1465 = vld [vmem:[%s5 + $0x30] sm:$0x3]
          %v1466 = vld [vmem:[%s6] sm:$0x1]
          %v1468 = vperm.slane %v1466, 0
          %v1483 = vunpack.c.l.b16 %v1453
          %v1484 = vunpack.c.l.b16 %v1454
          %v1485 = vunpack.c.l.b16 %v1455
          %v1486 = vunpack.c.l.b16 %v1456
          %v1487 = vunpack.c.l.b16 %v1457
          %v1488 = vunpack.c.l.b16 %v1458
          %v1489 = vunpack.c.l.b16 %v1459
          %v1490 = vunpack.c.l.b16 %v1460
          %v1491 = vunpack.c.l.b16 %v1461
          %v1492 = vunpack.c.l.b16 %v1462
          %v1493 = vunpack.c.l.b16 %v1463
          %v1494 = vunpack.c.l.b16 %v1464
          %v1495 = vunpack.c.l.b16 %v1465
          %v1496 = vpack.c.b16 %v1484, %v1483
          %v1497 = vpack.c.b16 %v1486, %v1485
          %v1498 = vpack.c.b16 %v1488, %v1487
          %v1499 = vpack.c.b16 %v1490, %v1489
          %v1500 = vpack.c.b16 %v1492, %v1491
          %v1501 = vpack.c.b16 %v1494, %v1493
          %v1502 = vpack.c.b16 %v1495, %v1495
          %vm1509 = vcmask 818176
          %v1511 = vsel %vm1509, %v1452, 0
          %vm1513 = vcmask 1041408
          %v1515 = vsel %vm1513, %v1502, 0
          %1517 = vmatpush.bf16.msra.mxu0 0
          %1518 = vmatpush.bf16.msra.mxu0 %v1515
          %1519 = vmatpush.bf16.msra.mxu0 %v1501
          %1520 = vmatpush.bf16.msra.mxu0 %v1500
          %1521 = vmatpush.bf16.msra.mxu0 %v1499
          %1522 = vmatpush.bf16.msra.mxu0 %v1498
          %1523 = vmatpush.bf16.msra.mxu0 %v1497
          %1524 = vmatpush.bf16.msra.mxu0 %v1496
          %1525 = vmatmul.bf16.gmra.mxu0 %v1511
          %v1526 = vpop.f32.mrf.mxu0
          %v1527 = vadd.f32 %v1468, %v1526
          %v1528 = vpop.f32.mrf.mxu0
          %v1529 = vadd.f32 %v1468, %v1528
          %1530 = vdwg.mxu0
          %vm1531 = vcmask 15360
          %1532 = vst.msk [vmem:[%s348] sm:$0xff] %vm1531, %v1527
          %1533 = vst.msk [vmem:[%s348 + $0x8] sm:$0xff] %vm1531, %v1529
        $region79: #{rubber_toy_forward.5} parent=66 // pred_fallthru
          _
        %s1534 = smul.u32 2, %s22
        %p1535 = scmp.lt.s32.totalorder %s1534, 1
        %s1536 = scalar_select %p1535, %s1534, 1
        %s1537 = smul.addr %s1536, 8
        %s1538 = scalar_lea.vmem %s7, %s1537
        // Predicated region
        $region80: #{rubber_toy_forward.5} parent=66 // pred_check
          %p1539 = pneg %p207
        $region81: #{rubber_toy_forward.5} parent=66 // pred_check_branch
          %1541 = sbr.rel (%p1539) target = $region83
        $region82: #{rubber_toy_forward.5} parent=66 // pred_region
          %s1542 = smul.u32 2, %s22
        $region83: #{rubber_toy_forward.5} parent=66 // pred_fallthru
          _
        // Predicated region
        $region84: #{rubber_toy_forward.5} parent=66 // pred_check
          %p1543 = pneg %p207
        $region85: #{rubber_toy_forward.5} parent=66 // pred_check_branch
          %1545 = sbr.rel (%p1543) target = $region87
        $region86: #{rubber_toy_forward.5} parent=66 // pred_region
          %s1546 = smul.u32 2, %s22
          %p1547 = scmp.lt.s32.totalorder %s1546, 1
          %s1548 = scalar_select %p1547, %s1546, 1
          %s1549 = smul.addr %s1548, 8
          %s1550 = scalar_lea.vmem %s7, %s1549
        $region87: #{rubber_toy_forward.5} parent=66 // pred_fallthru
          _
      $region67: #{rubber_toy_forward.5} parent=5 // pred_fallthru
        _
      %p1551 = scmp.le.s32.totalorder 2, %s13
      // Predicated region
      $region88: #{rubber_toy_forward.5} parent=5 // pred_check
        %p1552 = pneg %p1551
      $region89: #{rubber_toy_forward.5} parent=5 // pred_check_branch
        %1554 = sbr.rel (%p1552) target = $region91
      $region90: #{rubber_toy_forward.5} parent=5 // pred_region
        %s1555 = ssub.s32 %s13, 2
      $region91: #{rubber_toy_forward.5} parent=5 // pred_fallthru
        _
    $region6: #{rubber_toy_forward.5} parent=1 // loop_footer
      %s17 = sadd.s32 1, %s13
    $region7: #{rubber_toy_forward.5} parent=1 // loop_footer_branch
      %12 = sbr.rel target = $region3
    $region8: #{rubber_toy_forward.5} parent=1 // loop_exit
      _

</llo_original>
